<compile_context>
chip_gen: v7x
topology: tpu7x:2x2x1
jax: 0.10.0
libtpu: 0.0.40
codegen_flags: <defaults>
</compile_context>

<pallas_src>
import functools
import math

import jax
import jax.numpy as jnp
from jax.experimental import pallas as pl
from jax.experimental.pallas import tpu as pltpu


# ----------------------------- fused kernel --------------------------------

def _encoder_layer_kernel(mask_ref, in_ref, sig_ref, embw_ref,
                          g_mha_ref, b_mha_ref, wq_ref, wk_ref, wv_ref, wo_ref,
                          g_ffn_ref, b_ffn_ref, c1w_ref, c1b_ref,
                          c2w_ref, c2b_ref, g_fin_ref, b_fin_ref,
                          out_ref, x_ref, *, bb, t, dp, heads, eps):
    l = pl.program_id(1)
    n = bb * t

    def layer_norm(x, g, b):
        # Custom LayerNorm: unbiased variance, eps added to std (matches module).
        mean = jnp.mean(x, axis=-1, keepdims=True)
        d = x - mean
        var = jnp.sum(d * d, axis=-1, keepdims=True) * (1.0 / (dp - 1))
        return g * d / (jnp.sqrt(var) + eps) + b

    def mm(a_bf16, w_bf16):
        # bf16 MXU matmul, f32 accumulation.
        return jnp.dot(a_bf16, w_bf16, preferred_element_type=jnp.float32)

    # ---- first grid step of each batch block: embedding + timing signal ----
    @pl.when(l == 0)
    def _():
        emb = mm(in_ref[...].reshape(n, -1).astype(jnp.bfloat16), embw_ref[...])
        x_ref[...] = (emb.reshape(bb, t, dp) + sig_ref[...]).reshape(n, dp)

    x = x_ref[...]                                       # [Bb*T, Dp] f32

    # ---- pre-LN multi-head self-attention + residual ----
    xn = layer_norm(x, g_mha_ref[l], b_mha_ref[l]).astype(jnp.bfloat16)
    mask_b = jnp.broadcast_to(mask_ref[...], (bb, t, t))  # additive key mask, f32

    attn = jnp.zeros((n, dp), jnp.float32)
    for h in range(heads):                               # static; no lane slicing
        q = mm(xn, wq_ref[h]).reshape(bb, t, -1)         # scale folded into wq
        k = mm(xn, wk_ref[h]).reshape(bb, t, -1)
        v = mm(xn, wv_ref[h]).reshape(bb, t, -1)
        logits = jnp.einsum('bqd,bkd->bqk',
                            q.astype(jnp.bfloat16), k.astype(jnp.bfloat16),
                            preferred_element_type=jnp.float32) + mask_b
        logits = logits - jnp.max(logits, axis=-1, keepdims=True)
        p = jnp.exp(logits)                              # f32 softmax
        w = p * pl.reciprocal(jnp.sum(p, axis=-1, keepdims=True), approx=True)
        ctx = jnp.einsum('bqk,bkd->bqd',
                         w.astype(jnp.bfloat16), v.astype(jnp.bfloat16),
                         preferred_element_type=jnp.float32)
        attn = attn + mm(ctx.reshape(n, -1).astype(jnp.bfloat16), wo_ref[h])
    x = x + attn

    # ---- pre-LN conv-conv FFN (k=3, zero pad 'both', ReLU) + residual ----
    xn = layer_norm(x, g_ffn_ref[l], b_ffn_ref[l])
    tpos = jax.lax.broadcasted_iota(jnp.int32, (n, 1), 0) % t
    not_first = tpos != 0
    not_last = tpos != (t - 1)

    def conv3(a, w_ref, bias):
        # out[t] = x[t-1] @ W0 + x[t] @ W1 + x[t+1] @ W2 + b, zero at edges.
        prev = jnp.where(not_first, pltpu.roll(a, 1, axis=0),
                         0.0).astype(jnp.bfloat16)
        nxt = jnp.where(not_last, pltpu.roll(a, n - 1, axis=0),
                        0.0).astype(jnp.bfloat16)
        y = mm(prev, w_ref[0]) + mm(a.astype(jnp.bfloat16), w_ref[1]) \
            + mm(nxt, w_ref[2])
        return y + bias

    h1 = jnp.maximum(conv3(xn, c1w_ref, c1b_ref[l]), 0.0)
    x = x + conv3(h1, c2w_ref, c2b_ref[l])
    x_ref[...] = x

    # ---- after last layer: final LayerNorm, write output block ----
    @pl.when(l == pl.num_programs(1) - 1)
    def _():
        out_ref[...] = layer_norm(x, g_fin_ref[...],
                                  b_fin_ref[...]).reshape(bb, t, dp)


# ------------------------------ wrappers ------------------------------------

def prepare_fused_params(params, heads):
    """One-time host-side re-layout: per-head splits, taps, bf16 casts."""
    layers = params["layers"]
    kd = layers[0]["wq"].shape[0]
    vd = layers[0]["wv"].shape[0]
    dk, dv = kd // heads, vd // heads
    scale = float(dk) ** -0.5

    def stack(fn, dtype=jnp.float32):
        return jnp.stack([fn(p) for p in layers]).astype(dtype)

    def heads_in(w, dh):        # torch Linear [heads*dh, Dp] -> [heads, Dp, dh]
        return jnp.transpose(w.reshape(heads, dh, -1), (0, 2, 1))

    def conv_taps(w):           # torch Conv1d [Cout, Cin, 3] -> [3, Cin, Cout]
        return jnp.transpose(w, (2, 1, 0))

    return {
        "emb_wt": params["emb_w"].T.astype(jnp.bfloat16),              # [Dw, Dp]
        "sig": params["timing_signal"].astype(jnp.float32),            # [maxT, Dp]
        "g_mha": stack(lambda p: p["ln_mha_g"]),                       # [L, Dp]
        "b_mha": stack(lambda p: p["ln_mha_b"]),
        "wq": stack(lambda p: heads_in(p["wq"], dk) * scale, jnp.bfloat16),
        "wk": stack(lambda p: heads_in(p["wk"], dk), jnp.bfloat16),
        "wv": stack(lambda p: heads_in(p["wv"], dv), jnp.bfloat16),
        "wo": stack(lambda p: p["wo"].T.reshape(heads, dv, -1), jnp.bfloat16),
        "g_ffn": stack(lambda p: p["ln_ffn_g"]),
        "b_ffn": stack(lambda p: p["ln_ffn_b"]),
        "c1_w": stack(lambda p: conv_taps(p["c1_w"]), jnp.bfloat16),   # [L,3,Dp,F]
        "c1_b": stack(lambda p: p["c1_b"]),                            # [L, F]
        "c2_w": stack(lambda p: conv_taps(p["c2_w"]), jnp.bfloat16),   # [L,3,F,Dp]
        "c2_b": stack(lambda p: p["c2_b"]),                            # [L, Dp]
        "g_fin": params["ln_g"][None, :].astype(jnp.float32),          # [1, Dp]
        "b_fin": params["ln_b"][None, :].astype(jnp.float32),
    }


def trans_encoder_forward(params, inputs, mask, heads):
    bsz, t, dw = inputs.shape
    n_layers = len(params["layers"])
    kd = params["layers"][0]["wq"].shape[0]
    vd = params["layers"][0]["wv"].shape[0]
    assert kd % heads == 0 and vd % heads == 0
    assert t <= params["timing_signal"].shape[0]

    fp = prepare_fused_params(params, heads)
    dp = fp["emb_wt"].shape[1]
    fsz = fp["c1_w"].shape[-1]
    L = n_layers
    dk, dv = kd // heads, vd // heads

    # batch block: pack several samples per grid step to amortise step overhead
    bb = 1
    for cand in range(min(bsz, 8), 0, -1):
        if bsz % cand == 0:
            bb = cand
            break
    nb = bsz // bb

    sig = fp["sig"][:t]                                              # [T, Dp]
    # mask: [B, 1, T] bool, True = padding -> additive -1e18 on key logits.
    mask_add = jnp.where(mask, -1e18, 0.0).astype(jnp.float32)

    kernel = functools.partial(_encoder_layer_kernel,
                               bb=bb, t=t, dp=dp, heads=heads, eps=1e-6)

    def _cspec(shape):          # grid-invariant block (full extent)
        nd = len(shape)
        return pl.BlockSpec(tuple(shape), lambda b, l, _nd=nd: (0,) * _nd)

    def _lspec(inner):          # per-layer blocked weight, layer dim squeezed
        nz = len(inner)
        return pl.BlockSpec((None,) + tuple(inner),
                            lambda b, l, _nz=nz: (l,) + (0,) * _nz)

    grid_spec = pltpu.PrefetchScalarGridSpec(
        num_scalar_prefetch=0,
        grid=(nb, L),
        in_specs=[
            pl.BlockSpec((bb, 1, t), lambda b, l: (b, 0, 0)),        # mask_add
            pl.BlockSpec((bb, t, dw), lambda b, l: (b, 0, 0)),       # inputs
            _cspec((t, dp)),                                         # sig
            _cspec((dw, dp)),                                        # emb_wt
            _cspec((L, dp)),                                         # g_mha
            _cspec((L, dp)),                                         # b_mha
            _lspec((heads, dp, dk)),                                 # wq
            _lspec((heads, dp, dk)),                                 # wk
            _lspec((heads, dp, dv)),                                 # wv
            _lspec((heads, dv, dp)),                                 # wo
            _cspec((L, dp)),                                         # g_ffn
            _cspec((L, dp)),                                         # b_ffn
            _lspec((3, dp, fsz)),                                    # c1_w
            _cspec((L, fsz)),                                        # c1_b
            _lspec((3, fsz, dp)),                                    # c2_w
            _cspec((L, dp)),                                         # c2_b
            _cspec((1, dp)),                                         # g_fin
            _cspec((1, dp)),                                         # b_fin
        ],
        out_specs=pl.BlockSpec((bb, t, dp), lambda b, l: (b, 0, 0)),
        scratch_shapes=[pltpu.VMEM((bb * t, dp), jnp.float32)],      # resident x
    )

    return pl.pallas_call(
        kernel,
        grid_spec=grid_spec,
        out_shape=jax.ShapeDtypeStruct((bsz, t, dp), jnp.float32),
        compiler_params=pltpu.CompilerParams(
            dimension_semantics=("parallel", "arbitrary")),
    )(mask_add, inputs, sig, fp["emb_wt"],
      fp["g_mha"], fp["b_mha"], fp["wq"], fp["wk"], fp["wv"], fp["wo"],
      fp["g_ffn"], fp["b_ffn"], fp["c1_w"], fp["c1_b"], fp["c2_w"], fp["c2_b"],
      fp["g_fin"], fp["b_fin"])


# --------------------------- model construction ----------------------------

def get_word_position_embedding(length, channels,
                                min_timescale=1.0, max_timescale=1.0e4):
    position = jnp.arange(length, dtype=jnp.float32)
    num_timescales = channels // 2
    log_inc = math.log(float(max_timescale) / float(min_timescale)) / max(
        float(num_timescales) - 1.0, 1.0)
    inv_timescales = min_timescale * jnp.exp(
        jnp.arange(num_timescales, dtype=jnp.float32) * -log_inc)
    scaled = position[:, None] * inv_timescales[None, :]
    signal = jnp.concatenate([jnp.sin(scaled), jnp.cos(scaled)], axis=1)
    if channels % 2:
        signal = jnp.pad(signal, ((0, 0), (0, 1)))
    return signal  # [length, channels]


def init_params(key, word_dim, poi_dim, key_depth, value_depth, filter_size,
                n_layers, max_pw_length):
    def nrm(k, shape, scale=0.05):
        return scale * jax.random.normal(k, shape, dtype=jnp.float32)

    keys = jax.random.split(key, 2 + n_layers)
    params = {
        "emb_w": nrm(keys[0], (poi_dim, word_dim)),
        "ln_g": jnp.ones((poi_dim,), jnp.float32),
        "ln_b": jnp.zeros((poi_dim,), jnp.float32),
        "timing_signal": get_word_position_embedding(max_pw_length, poi_dim),
        "layers": [],
    }
    for li in range(n_layers):
        lk = jax.random.split(keys[2 + li], 8)
        params["layers"].append({
            "ln_mha_g": jnp.ones((poi_dim,), jnp.float32),
            "ln_mha_b": jnp.zeros((poi_dim,), jnp.float32),
            "wq": nrm(lk[0], (key_depth, poi_dim)),
            "wk": nrm(lk[1], (key_depth, poi_dim)),
            "wv": nrm(lk[2], (value_depth, poi_dim)),
            "wo": nrm(lk[3], (poi_dim, value_depth)),
            "ln_ffn_g": jnp.ones((poi_dim,), jnp.float32),
            "ln_ffn_b": jnp.zeros((poi_dim,), jnp.float32),
            "c1_w": nrm(lk[4], (filter_size, poi_dim, 3)),
            "c1_b": jnp.zeros((filter_size,), jnp.float32),
            "c2_w": nrm(lk[5], (poi_dim, filter_size, 3)),
            "c2_b": jnp.zeros((poi_dim,), jnp.float32),
        })
    return params


# --------------------------------- main -------------------------------------

if __name__ == "__main__":
    word_dim, poi_dim = 16, 32
    heads, n_layers = 4, 2
    max_pw_length = 16
    filter_size = 64
    total_key_depth = 32
    total_value_depth = 32

    B, T = 2, 8

    key = jax.random.PRNGKey(0)
    k_par, k_in = jax.random.split(key)
    params = init_params(k_par, word_dim, poi_dim, total_key_depth,
                         total_value_depth, filter_size, n_layers,
                         max_pw_length)

    inputs = jax.random.normal(k_in, (B, T, word_dim), dtype=jnp.float32)
    mask = jnp.zeros((B, 1, T), dtype=bool).at[1, 0, T - 2:].set(True)

    out = trans_encoder_forward(params, inputs, mask, heads)
    out = jax.block_until_ready(out)
    assert out.shape == (B, T, poi_dim)
    assert bool(jnp.all(jnp.isfinite(out)))
    print("KERNEL_OK")
</pallas_src>

<mosaic_0001>
module attributes {stable_mosaic.version = 11 : i64} {
  func.func @_encoder_layer_kernel(%arg0: i32, %arg1: i32, %arg2: memref<2x1x8xf32, #tpu.memory_space<vmem>>, %arg3: memref<2x8x16xf32, #tpu.memory_space<vmem>>, %arg4: memref<8x32xf32, #tpu.memory_space<vmem>>, %arg5: memref<16x32xbf16, #tpu.memory_space<vmem>>, %arg6: memref<2x32xf32, #tpu.memory_space<vmem>>, %arg7: memref<2x32xf32, #tpu.memory_space<vmem>>, %arg8: memref<1x4x32x8xbf16, #tpu.memory_space<vmem>>, %arg9: memref<1x4x32x8xbf16, #tpu.memory_space<vmem>>, %arg10: memref<1x4x32x8xbf16, #tpu.memory_space<vmem>>, %arg11: memref<1x4x8x32xbf16, #tpu.memory_space<vmem>>, %arg12: memref<2x32xf32, #tpu.memory_space<vmem>>, %arg13: memref<2x32xf32, #tpu.memory_space<vmem>>, %arg14: memref<1x3x32x64xbf16, #tpu.memory_space<vmem>>, %arg15: memref<2x64xf32, #tpu.memory_space<vmem>>, %arg16: memref<1x3x64x32xbf16, #tpu.memory_space<vmem>>, %arg17: memref<2x32xf32, #tpu.memory_space<vmem>>, %arg18: memref<1x32xf32, #tpu.memory_space<vmem>>, %arg19: memref<1x32xf32, #tpu.memory_space<vmem>>, %arg20: memref<2x8x32xf32, #tpu.memory_space<vmem>>, %arg21: memref<16x32xf32, #tpu.memory_space<vmem>>) attributes {dimension_semantics = [#tpu.dimension_semantics<parallel>, #tpu.dimension_semantics<arbitrary>], iteration_bounds = array<i64: 1, 2>, scalar_prefetch = 0 : i64, scratch_operands = 1 : i64, tpu.core_type = #tpu.core_type<tc>, window_params = [{transform_indices = @transform_0, window_bounds = array<i64: 2, 1, 8>}, {transform_indices = @transform_1, window_bounds = array<i64: 2, 8, 16>}, {pipeline_mode = #tpu.pipeline_mode<synchronous>, transform_indices = @transform_2, window_bounds = array<i64: 8, 32>}, {pipeline_mode = #tpu.pipeline_mode<synchronous>, transform_indices = @transform_3, window_bounds = array<i64: 16, 32>}, {pipeline_mode = #tpu.pipeline_mode<synchronous>, transform_indices = @transform_4, window_bounds = array<i64: 2, 32>}, {pipeline_mode = #tpu.pipeline_mode<synchronous>, transform_indices = @transform_5, window_bounds = array<i64: 2, 32>}, {transform_indices = @transform_6, window_bounds = array<i64: 1, 4, 32, 8>}, {transform_indices = @transform_7, window_bounds = array<i64: 1, 4, 32, 8>}, {transform_indices = @transform_8, window_bounds = array<i64: 1, 4, 32, 8>}, {transform_indices = @transform_9, window_bounds = array<i64: 1, 4, 8, 32>}, {pipeline_mode = #tpu.pipeline_mode<synchronous>, transform_indices = @transform_10, window_bounds = array<i64: 2, 32>}, {pipeline_mode = #tpu.pipeline_mode<synchronous>, transform_indices = @transform_11, window_bounds = array<i64: 2, 32>}, {transform_indices = @transform_12, window_bounds = array<i64: 1, 3, 32, 64>}, {pipeline_mode = #tpu.pipeline_mode<synchronous>, transform_indices = @transform_13, window_bounds = array<i64: 2, 64>}, {transform_indices = @transform_14, window_bounds = array<i64: 1, 3, 64, 32>}, {pipeline_mode = #tpu.pipeline_mode<synchronous>, transform_indices = @transform_15, window_bounds = array<i64: 2, 32>}, {pipeline_mode = #tpu.pipeline_mode<synchronous>, transform_indices = @transform_16, window_bounds = array<i64: 1, 32>}, {pipeline_mode = #tpu.pipeline_mode<synchronous>, transform_indices = @transform_17, window_bounds = array<i64: 1, 32>}, {transform_indices = @transform_18, window_bounds = array<i64: 2, 8, 32>}]} {
    %c0_i32 = arith.constant 0 : i32
    %0 = arith.cmpi eq, %arg1, %c0_i32 : i32
    %1 = arith.extui %0 : i1 to i32
    %c0_i32_0 = arith.constant 0 : i32
    %2 = arith.cmpi ne, %1, %c0_i32_0 : i32
    scf.if %2 {
      %c0_161 = arith.constant 0 : index
      %c0_162 = arith.constant 0 : index
      %c0_163 = arith.constant 0 : index
      %294 = vector.load %arg3[%c0_161, %c0_162, %c0_163] : memref<2x8x16xf32, #tpu.memory_space<vmem>>, vector<2x8x16xf32>
      %295 = vector.shape_cast %294 : vector<2x8x16xf32> to vector<16x16xf32>
      %296 = arith.truncf %295 : vector<16x16xf32> to vector<16x16xbf16>
      %c0_164 = arith.constant 0 : index
      %c0_165 = arith.constant 0 : index
      %297 = vector.load %arg5[%c0_164, %c0_165] : memref<16x32xbf16, #tpu.memory_space<vmem>>, vector<16x32xbf16>
      %cst_166 = arith.constant dense<0.000000e+00> : vector<16x32xf32>
      %298 = tpu.matmul %296, %297, %cst_166 {dimension_numbers = #tpu.dot_dimension_numbers<[1], [0], [0], [1], [0, 0, 1, 1], [], []>} : vector<16x16xbf16>, vector<16x32xbf16>, vector<16x32xf32> -> vector<16x32xf32>
      %299 = vector.shape_cast %298 : vector<16x32xf32> to vector<2x8x32xf32>
      %c0_167 = arith.constant 0 : index
      %c0_168 = arith.constant 0 : index
      %300 = vector.load %arg4[%c0_167, %c0_168] : memref<8x32xf32, #tpu.memory_space<vmem>>, vector<8x32xf32>
      %301 = vector.shape_cast %300 : vector<8x32xf32> to vector<1x8x32xf32>
      %302 = vector.broadcast %301 : vector<1x8x32xf32> to vector<2x8x32xf32>
      %303 = arith.addf %299, %302 : vector<2x8x32xf32>
      %304 = vector.shape_cast %303 : vector<2x8x32xf32> to vector<16x32xf32>
      %c0_169 = arith.constant 0 : index
      %c0_170 = arith.constant 0 : index
      %305 = vector.load %arg21[%c0_169, %c0_170] : memref<16x32xf32, #tpu.memory_space<vmem>>, vector<16x32xf32>
      tpu.vector_store %arg21[%c0_169, %c0_170], %304 {strides = array<i32>} : memref<16x32xf32, #tpu.memory_space<vmem>>, vector<16x32xf32>,
    } else {
    }
    %c0 = arith.constant 0 : index
    %c0_1 = arith.constant 0 : index
    %3 = vector.load %arg21[%c0, %c0_1] : memref<16x32xf32, #tpu.memory_space<vmem>>, vector<16x32xf32>
    %4 = arith.index_cast %arg1 : i32 to index
    %c0_2 = arith.constant 0 : index
    %5 = vector.load %arg6[%4, %c0_2] : memref<2x32xf32, #tpu.memory_space<vmem>>, vector<1x32xf32>
    %6 = vector.shape_cast %5 : vector<1x32xf32> to vector<32xf32>
    %7 = arith.index_cast %arg1 : i32 to index
    %c0_3 = arith.constant 0 : index
    %8 = vector.load %arg7[%7, %c0_3] : memref<2x32xf32, #tpu.memory_space<vmem>>, vector<1x32xf32>
    %9 = vector.shape_cast %8 : vector<1x32xf32> to vector<32xf32>
    %cst = arith.constant dense<0.000000e+00> : vector<16xf32>
    %10 = vector.multi_reduction <add>, %3, %cst [1] : vector<16x32xf32> to vector<16xf32>
    %11 = vector.shape_cast %10 : vector<16xf32> to vector<16x1xf32>
    %cst_4 = arith.constant 3.200000e+01 : f32
    %12 = vector.broadcast %cst_4 : f32 to vector<16x1xf32>
    %13 = arith.divf %11, %12 : vector<16x1xf32>
    %14 = vector.broadcast %13 : vector<16x1xf32> to vector<16x32xf32>
    %15 = arith.subf %3, %14 : vector<16x32xf32>
    %16 = arith.mulf %15, %15 : vector<16x32xf32>
    %cst_5 = arith.constant dense<0.000000e+00> : vector<16xf32>
    %17 = vector.multi_reduction <add>, %16, %cst_5 [1] : vector<16x32xf32> to vector<16xf32>
    %18 = vector.shape_cast %17 : vector<16xf32> to vector<16x1xf32>
    %cst_6 = arith.constant 0.0322580636 : f32
    %19 = vector.broadcast %cst_6 : f32 to vector<16x1xf32>
    %20 = arith.mulf %18, %19 : vector<16x1xf32>
    %21 = vector.shape_cast %6 : vector<32xf32> to vector<1x32xf32>
    %22 = vector.broadcast %21 : vector<1x32xf32> to vector<16x32xf32>
    %23 = arith.mulf %22, %15 : vector<16x32xf32>
    %24 = math.sqrt %20 : vector<16x1xf32>
    %cst_7 = arith.constant 9.99999997E-7 : f32
    %25 = vector.broadcast %cst_7 : f32 to vector<16x1xf32>
    %26 = arith.addf %24, %25 : vector<16x1xf32>
    %27 = vector.broadcast %26 : vector<16x1xf32> to vector<16x32xf32>
    %28 = arith.divf %23, %27 : vector<16x32xf32>
    %29 = vector.shape_cast %9 : vector<32xf32> to vector<1x32xf32>
    %30 = vector.broadcast %29 : vector<1x32xf32> to vector<16x32xf32>
    %31 = arith.addf %28, %30 : vector<16x32xf32>
    %32 = arith.truncf %31 : vector<16x32xf32> to vector<16x32xbf16>
    %c0_8 = arith.constant 0 : index
    %c0_9 = arith.constant 0 : index
    %c0_10 = arith.constant 0 : index
    %33 = vector.load %arg2[%c0_8, %c0_9, %c0_10] : memref<2x1x8xf32, #tpu.memory_space<vmem>>, vector<2x1x8xf32>
    %34 = vector.shape_cast %33 : vector<2x1x8xf32> to vector<2x1x8xf32>
    %35 = vector.broadcast %34 : vector<2x1x8xf32> to vector<2x8x8xf32>
    %cst_11 = arith.constant 0.000000e+00 : f32
    %36 = vector.broadcast %cst_11 : f32 to vector<16x32xf32>
    %c0_12 = arith.constant 0 : index
    %c0_13 = arith.constant 0 : index
    %c0_14 = arith.constant 0 : index
    %c0_15 = arith.constant 0 : index
    %37 = vector.load %arg8[%c0_12, %c0_13, %c0_14, %c0_15] : memref<1x4x32x8xbf16, #tpu.memory_space<vmem>>, vector<1x1x32x8xbf16>
    %38 = vector.shape_cast %37 : vector<1x1x32x8xbf16> to vector<32x8xbf16>
    %cst_16 = arith.constant dense<0.000000e+00> : vector<16x8xf32>
    %39 = tpu.matmul %32, %38, %cst_16 {dimension_numbers = #tpu.dot_dimension_numbers<[1], [0], [0], [1], [0, 0, 1, 1], [], []>} : vector<16x32xbf16>, vector<32x8xbf16>, vector<16x8xf32> -> vector<16x8xf32>
    %40 = vector.shape_cast %39 : vector<16x8xf32> to vector<2x8x8xf32>
    %c0_17 = arith.constant 0 : index
    %c0_18 = arith.constant 0 : index
    %c0_19 = arith.constant 0 : index
    %c0_20 = arith.constant 0 : index
    %41 = vector.load %arg9[%c0_17, %c0_18, %c0_19, %c0_20] : memref<1x4x32x8xbf16, #tpu.memory_space<vmem>>, vector<1x1x32x8xbf16>
    %42 = vector.shape_cast %41 : vector<1x1x32x8xbf16> to vector<32x8xbf16>
    %cst_21 = arith.constant dense<0.000000e+00> : vector<16x8xf32>
    %43 = tpu.matmul %32, %42, %cst_21 {dimension_numbers = #tpu.dot_dimension_numbers<[1], [0], [0], [1], [0, 0, 1, 1], [], []>} : vector<16x32xbf16>, vector<32x8xbf16>, vector<16x8xf32> -> vector<16x8xf32>
    %44 = vector.shape_cast %43 : vector<16x8xf32> to vector<2x8x8xf32>
    %c0_22 = arith.constant 0 : index
    %c0_23 = arith.constant 0 : index
    %c0_24 = arith.constant 0 : index
    %c0_25 = arith.constant 0 : index
    %45 = vector.load %arg10[%c0_22, %c0_23, %c0_24, %c0_25] : memref<1x4x32x8xbf16, #tpu.memory_space<vmem>>, vector<1x1x32x8xbf16>
    %46 = vector.shape_cast %45 : vector<1x1x32x8xbf16> to vector<32x8xbf16>
    %cst_26 = arith.constant dense<0.000000e+00> : vector<16x8xf32>
    %47 = tpu.matmul %32, %46, %cst_26 {dimension_numbers = #tpu.dot_dimension_numbers<[1], [0], [0], [1], [0, 0, 1, 1], [], []>} : vector<16x32xbf16>, vector<32x8xbf16>, vector<16x8xf32> -> vector<16x8xf32>
    %48 = vector.shape_cast %47 : vector<16x8xf32> to vector<2x8x8xf32>
    %49 = arith.truncf %40 : vector<2x8x8xf32> to vector<2x8x8xbf16>
    %50 = arith.truncf %44 : vector<2x8x8xf32> to vector<2x8x8xbf16>
    "tpu.trace_start"() <{level = 10 : i32, message = "bqd,bkd->bqk"}> : () -> ()
    %cst_27 = arith.constant dense<0.000000e+00> : vector<2x8x8xf32>
    %51 = tpu.matmul %49, %50, %cst_27 {dimension_numbers = #tpu.dot_dimension_numbers<[2], [2], [1], [1], [0, 0, 0, 1, 1, 1], [0], [0]>} : vector<2x8x8xbf16>, vector<2x8x8xbf16>, vector<2x8x8xf32> -> vector<2x8x8xf32>
    "tpu.trace_stop"() : () -> ()
    %52 = arith.addf %51, %35 : vector<2x8x8xf32>
    %cst_28 = arith.constant dense<0xFF800000> : vector<2x8xf32>
    %53 = vector.multi_reduction <maximumf>, %52, %cst_28 [2] : vector<2x8x8xf32> to vector<2x8xf32>
    %54 = vector.shape_cast %53 : vector<2x8xf32> to vector<2x8x1xf32>
    %55 = vector.broadcast %54 : vector<2x8x1xf32> to vector<2x8x8xf32>
    %56 = arith.subf %52, %55 : vector<2x8x8xf32>
    %57 = math.exp %56 : vector<2x8x8xf32>
    %cst_29 = arith.constant dense<0.000000e+00> : vector<2x8xf32>
    %58 = vector.multi_reduction <add>, %57, %cst_29 [2] : vector<2x8x8xf32> to vector<2x8xf32>
    %59 = vector.shape_cast %58 : vector<2x8xf32> to vector<2x8x1xf32>
    %60 = tpu.reciprocal %59 {approx = true} : vector<2x8x1xf32> -> vector<2x8x1xf32>
    %61 = vector.broadcast %60 : vector<2x8x1xf32> to vector<2x8x8xf32>
    %62 = arith.mulf %57, %61 : vector<2x8x8xf32>
    %63 = arith.truncf %62 : vector<2x8x8xf32> to vector<2x8x8xbf16>
    %64 = arith.truncf %48 : vector<2x8x8xf32> to vector<2x8x8xbf16>
    "tpu.trace_start"() <{level = 10 : i32, message = "bqk,bkd->bqd"}> : () -> ()
    %cst_30 = arith.constant dense<0.000000e+00> : vector<2x8x8xf32>
    %65 = tpu.matmul %63, %64, %cst_30 {dimension_numbers = #tpu.dot_dimension_numbers<[2], [1], [1], [2], [0, 0, 0, 1, 1, 2], [0], [0]>} : vector<2x8x8xbf16>, vector<2x8x8xbf16>, vector<2x8x8xf32> -> vector<2x8x8xf32>
    "tpu.trace_stop"() : () -> ()
    %66 = vector.shape_cast %65 : vector<2x8x8xf32> to vector<16x8xf32>
    %67 = arith.truncf %66 : vector<16x8xf32> to vector<16x8xbf16>
    %c0_31 = arith.constant 0 : index
    %c0_32 = arith.constant 0 : index
    %c0_33 = arith.constant 0 : index
    %c0_34 = arith.constant 0 : index
    %68 = vector.load %arg11[%c0_31, %c0_32, %c0_33, %c0_34] : memref<1x4x8x32xbf16, #tpu.memory_space<vmem>>, vector<1x1x8x32xbf16>
    %69 = vector.shape_cast %68 : vector<1x1x8x32xbf16> to vector<8x32xbf16>
    %cst_35 = arith.constant dense<0.000000e+00> : vector<16x32xf32>
    %70 = tpu.matmul %67, %69, %cst_35 {dimension_numbers = #tpu.dot_dimension_numbers<[1], [0], [0], [1], [0, 0, 1, 1], [], []>} : vector<16x8xbf16>, vector<8x32xbf16>, vector<16x32xf32> -> vector<16x32xf32>
    %71 = arith.addf %36, %70 : vector<16x32xf32>
    %c0_36 = arith.constant 0 : index
    %c1 = arith.constant 1 : index
    %c0_37 = arith.constant 0 : index
    %c0_38 = arith.constant 0 : index
    %72 = vector.load %arg8[%c0_36, %c1, %c0_37, %c0_38] : memref<1x4x32x8xbf16, #tpu.memory_space<vmem>>, vector<1x1x32x8xbf16>
    %73 = vector.shape_cast %72 : vector<1x1x32x8xbf16> to vector<32x8xbf16>
    %cst_39 = arith.constant dense<0.000000e+00> : vector<16x8xf32>
    %74 = tpu.matmul %32, %73, %cst_39 {dimension_numbers = #tpu.dot_dimension_numbers<[1], [0], [0], [1], [0, 0, 1, 1], [], []>} : vector<16x32xbf16>, vector<32x8xbf16>, vector<16x8xf32> -> vector<16x8xf32>
    %75 = vector.shape_cast %74 : vector<16x8xf32> to vector<2x8x8xf32>
    %c0_40 = arith.constant 0 : index
    %c1_41 = arith.constant 1 : index
    %c0_42 = arith.constant 0 : index
    %c0_43 = arith.constant 0 : index
    %76 = vector.load %arg9[%c0_40, %c1_41, %c0_42, %c0_43] : memref<1x4x32x8xbf16, #tpu.memory_space<vmem>>, vector<1x1x32x8xbf16>
    %77 = vector.shape_cast %76 : vector<1x1x32x8xbf16> to vector<32x8xbf16>
    %cst_44 = arith.constant dense<0.000000e+00> : vector<16x8xf32>
    %78 = tpu.matmul %32, %77, %cst_44 {dimension_numbers = #tpu.dot_dimension_numbers<[1], [0], [0], [1], [0, 0, 1, 1], [], []>} : vector<16x32xbf16>, vector<32x8xbf16>, vector<16x8xf32> -> vector<16x8xf32>
    %79 = vector.shape_cast %78 : vector<16x8xf32> to vector<2x8x8xf32>
    %c0_45 = arith.constant 0 : index
    %c1_46 = arith.constant 1 : index
    %c0_47 = arith.constant 0 : index
    %c0_48 = arith.constant 0 : index
    %80 = vector.load %arg10[%c0_45, %c1_46, %c0_47, %c0_48] : memref<1x4x32x8xbf16, #tpu.memory_space<vmem>>, vector<1x1x32x8xbf16>
    %81 = vector.shape_cast %80 : vector<1x1x32x8xbf16> to vector<32x8xbf16>
    %cst_49 = arith.constant dense<0.000000e+00> : vector<16x8xf32>
    %82 = tpu.matmul %32, %81, %cst_49 {dimension_numbers = #tpu.dot_dimension_numbers<[1], [0], [0], [1], [0, 0, 1, 1], [], []>} : vector<16x32xbf16>, vector<32x8xbf16>, vector<16x8xf32> -> vector<16x8xf32>
    %83 = vector.shape_cast %82 : vector<16x8xf32> to vector<2x8x8xf32>
    %84 = arith.truncf %75 : vector<2x8x8xf32> to vector<2x8x8xbf16>
    %85 = arith.truncf %79 : vector<2x8x8xf32> to vector<2x8x8xbf16>
    "tpu.trace_start"() <{level = 10 : i32, message = "bqd,bkd->bqk"}> : () -> ()
    %cst_50 = arith.constant dense<0.000000e+00> : vector<2x8x8xf32>
    %86 = tpu.matmul %84, %85, %cst_50 {dimension_numbers = #tpu.dot_dimension_numbers<[2], [2], [1], [1], [0, 0, 0, 1, 1, 1], [0], [0]>} : vector<2x8x8xbf16>, vector<2x8x8xbf16>, vector<2x8x8xf32> -> vector<2x8x8xf32>
    "tpu.trace_stop"() : () -> ()
    %87 = arith.addf %86, %35 : vector<2x8x8xf32>
    %cst_51 = arith.constant dense<0xFF800000> : vector<2x8xf32>
    %88 = vector.multi_reduction <maximumf>, %87, %cst_51 [2] : vector<2x8x8xf32> to vector<2x8xf32>
    %89 = vector.shape_cast %88 : vector<2x8xf32> to vector<2x8x1xf32>
    %90 = vector.broadcast %89 : vector<2x8x1xf32> to vector<2x8x8xf32>
    %91 = arith.subf %87, %90 : vector<2x8x8xf32>
    %92 = math.exp %91 : vector<2x8x8xf32>
    %cst_52 = arith.constant dense<0.000000e+00> : vector<2x8xf32>
    %93 = vector.multi_reduction <add>, %92, %cst_52 [2] : vector<2x8x8xf32> to vector<2x8xf32>
    %94 = vector.shape_cast %93 : vector<2x8xf32> to vector<2x8x1xf32>
    %95 = tpu.reciprocal %94 {approx = true} : vector<2x8x1xf32> -> vector<2x8x1xf32>
    %96 = vector.broadcast %95 : vector<2x8x1xf32> to vector<2x8x8xf32>
    %97 = arith.mulf %92, %96 : vector<2x8x8xf32>
    %98 = arith.truncf %97 : vector<2x8x8xf32> to vector<2x8x8xbf16>
    %99 = arith.truncf %83 : vector<2x8x8xf32> to vector<2x8x8xbf16>
    "tpu.trace_start"() <{level = 10 : i32, message = "bqk,bkd->bqd"}> : () -> ()
    %cst_53 = arith.constant dense<0.000000e+00> : vector<2x8x8xf32>
    %100 = tpu.matmul %98, %99, %cst_53 {dimension_numbers = #tpu.dot_dimension_numbers<[2], [1], [1], [2], [0, 0, 0, 1, 1, 2], [0], [0]>} : vector<2x8x8xbf16>, vector<2x8x8xbf16>, vector<2x8x8xf32> -> vector<2x8x8xf32>
    "tpu.trace_stop"() : () -> ()
    %101 = vector.shape_cast %100 : vector<2x8x8xf32> to vector<16x8xf32>
    %102 = arith.truncf %101 : vector<16x8xf32> to vector<16x8xbf16>
    %c0_54 = arith.constant 0 : index
    %c1_55 = arith.constant 1 : index
    %c0_56 = arith.constant 0 : index
    %c0_57 = arith.constant 0 : index
    %103 = vector.load %arg11[%c0_54, %c1_55, %c0_56, %c0_57] : memref<1x4x8x32xbf16, #tpu.memory_space<vmem>>, vector<1x1x8x32xbf16>
    %104 = vector.shape_cast %103 : vector<1x1x8x32xbf16> to vector<8x32xbf16>
    %cst_58 = arith.constant dense<0.000000e+00> : vector<16x32xf32>
    %105 = tpu.matmul %102, %104, %cst_58 {dimension_numbers = #tpu.dot_dimension_numbers<[1], [0], [0], [1], [0, 0, 1, 1], [], []>} : vector<16x8xbf16>, vector<8x32xbf16>, vector<16x32xf32> -> vector<16x32xf32>
    %106 = arith.addf %71, %105 : vector<16x32xf32>
    %c0_59 = arith.constant 0 : index
    %c2 = arith.constant 2 : index
    %c0_60 = arith.constant 0 : index
    %c0_61 = arith.constant 0 : index
    %107 = vector.load %arg8[%c0_59, %c2, %c0_60, %c0_61] : memref<1x4x32x8xbf16, #tpu.memory_space<vmem>>, vector<1x1x32x8xbf16>
    %108 = vector.shape_cast %107 : vector<1x1x32x8xbf16> to vector<32x8xbf16>
    %cst_62 = arith.constant dense<0.000000e+00> : vector<16x8xf32>
    %109 = tpu.matmul %32, %108, %cst_62 {dimension_numbers = #tpu.dot_dimension_numbers<[1], [0], [0], [1], [0, 0, 1, 1], [], []>} : vector<16x32xbf16>, vector<32x8xbf16>, vector<16x8xf32> -> vector<16x8xf32>
    %110 = vector.shape_cast %109 : vector<16x8xf32> to vector<2x8x8xf32>
    %c0_63 = arith.constant 0 : index
    %c2_64 = arith.constant 2 : index
    %c0_65 = arith.constant 0 : index
    %c0_66 = arith.constant 0 : index
    %111 = vector.load %arg9[%c0_63, %c2_64, %c0_65, %c0_66] : memref<1x4x32x8xbf16, #tpu.memory_space<vmem>>, vector<1x1x32x8xbf16>
    %112 = vector.shape_cast %111 : vector<1x1x32x8xbf16> to vector<32x8xbf16>
    %cst_67 = arith.constant dense<0.000000e+00> : vector<16x8xf32>
    %113 = tpu.matmul %32, %112, %cst_67 {dimension_numbers = #tpu.dot_dimension_numbers<[1], [0], [0], [1], [0, 0, 1, 1], [], []>} : vector<16x32xbf16>, vector<32x8xbf16>, vector<16x8xf32> -> vector<16x8xf32>
    %114 = vector.shape_cast %113 : vector<16x8xf32> to vector<2x8x8xf32>
    %c0_68 = arith.constant 0 : index
    %c2_69 = arith.constant 2 : index
    %c0_70 = arith.constant 0 : index
    %c0_71 = arith.constant 0 : index
    %115 = vector.load %arg10[%c0_68, %c2_69, %c0_70, %c0_71] : memref<1x4x32x8xbf16, #tpu.memory_space<vmem>>, vector<1x1x32x8xbf16>
    %116 = vector.shape_cast %115 : vector<1x1x32x8xbf16> to vector<32x8xbf16>
    %cst_72 = arith.constant dense<0.000000e+00> : vector<16x8xf32>
    %117 = tpu.matmul %32, %116, %cst_72 {dimension_numbers = #tpu.dot_dimension_numbers<[1], [0], [0], [1], [0, 0, 1, 1], [], []>} : vector<16x32xbf16>, vector<32x8xbf16>, vector<16x8xf32> -> vector<16x8xf32>
    %118 = vector.shape_cast %117 : vector<16x8xf32> to vector<2x8x8xf32>
    %119 = arith.truncf %110 : vector<2x8x8xf32> to vector<2x8x8xbf16>
    %120 = arith.truncf %114 : vector<2x8x8xf32> to vector<2x8x8xbf16>
    "tpu.trace_start"() <{level = 10 : i32, message = "bqd,bkd->bqk"}> : () -> ()
    %cst_73 = arith.constant dense<0.000000e+00> : vector<2x8x8xf32>
    %121 = tpu.matmul %119, %120, %cst_73 {dimension_numbers = #tpu.dot_dimension_numbers<[2], [2], [1], [1], [0, 0, 0, 1, 1, 1], [0], [0]>} : vector<2x8x8xbf16>, vector<2x8x8xbf16>, vector<2x8x8xf32> -> vector<2x8x8xf32>
    "tpu.trace_stop"() : () -> ()
    %122 = arith.addf %121, %35 : vector<2x8x8xf32>
    %cst_74 = arith.constant dense<0xFF800000> : vector<2x8xf32>
    %123 = vector.multi_reduction <maximumf>, %122, %cst_74 [2] : vector<2x8x8xf32> to vector<2x8xf32>
    %124 = vector.shape_cast %123 : vector<2x8xf32> to vector<2x8x1xf32>
    %125 = vector.broadcast %124 : vector<2x8x1xf32> to vector<2x8x8xf32>
    %126 = arith.subf %122, %125 : vector<2x8x8xf32>
    %127 = math.exp %126 : vector<2x8x8xf32>
    %cst_75 = arith.constant dense<0.000000e+00> : vector<2x8xf32>
    %128 = vector.multi_reduction <add>, %127, %cst_75 [2] : vector<2x8x8xf32> to vector<2x8xf32>
    %129 = vector.shape_cast %128 : vector<2x8xf32> to vector<2x8x1xf32>
    %130 = tpu.reciprocal %129 {approx = true} : vector<2x8x1xf32> -> vector<2x8x1xf32>
    %131 = vector.broadcast %130 : vector<2x8x1xf32> to vector<2x8x8xf32>
    %132 = arith.mulf %127, %131 : vector<2x8x8xf32>
    %133 = arith.truncf %132 : vector<2x8x8xf32> to vector<2x8x8xbf16>
    %134 = arith.truncf %118 : vector<2x8x8xf32> to vector<2x8x8xbf16>
    "tpu.trace_start"() <{level = 10 : i32, message = "bqk,bkd->bqd"}> : () -> ()
    %cst_76 = arith.constant dense<0.000000e+00> : vector<2x8x8xf32>
    %135 = tpu.matmul %133, %134, %cst_76 {dimension_numbers = #tpu.dot_dimension_numbers<[2], [1], [1], [2], [0, 0, 0, 1, 1, 2], [0], [0]>} : vector<2x8x8xbf16>, vector<2x8x8xbf16>, vector<2x8x8xf32> -> vector<2x8x8xf32>
    "tpu.trace_stop"() : () -> ()
    %136 = vector.shape_cast %135 : vector<2x8x8xf32> to vector<16x8xf32>
    %137 = arith.truncf %136 : vector<16x8xf32> to vector<16x8xbf16>
    %c0_77 = arith.constant 0 : index
    %c2_78 = arith.constant 2 : index
    %c0_79 = arith.constant 0 : index
    %c0_80 = arith.constant 0 : index
    %138 = vector.load %arg11[%c0_77, %c2_78, %c0_79, %c0_80] : memref<1x4x8x32xbf16, #tpu.memory_space<vmem>>, vector<1x1x8x32xbf16>
    %139 = vector.shape_cast %138 : vector<1x1x8x32xbf16> to vector<8x32xbf16>
    %cst_81 = arith.constant dense<0.000000e+00> : vector<16x32xf32>
    %140 = tpu.matmul %137, %139, %cst_81 {dimension_numbers = #tpu.dot_dimension_numbers<[1], [0], [0], [1], [0, 0, 1, 1], [], []>} : vector<16x8xbf16>, vector<8x32xbf16>, vector<16x32xf32> -> vector<16x32xf32>
    %141 = arith.addf %106, %140 : vector<16x32xf32>
    %c0_82 = arith.constant 0 : index
    %c3 = arith.constant 3 : index
    %c0_83 = arith.constant 0 : index
    %c0_84 = arith.constant 0 : index
    %142 = vector.load %arg8[%c0_82, %c3, %c0_83, %c0_84] : memref<1x4x32x8xbf16, #tpu.memory_space<vmem>>, vector<1x1x32x8xbf16>
    %143 = vector.shape_cast %142 : vector<1x1x32x8xbf16> to vector<32x8xbf16>
    %cst_85 = arith.constant dense<0.000000e+00> : vector<16x8xf32>
    %144 = tpu.matmul %32, %143, %cst_85 {dimension_numbers = #tpu.dot_dimension_numbers<[1], [0], [0], [1], [0, 0, 1, 1], [], []>} : vector<16x32xbf16>, vector<32x8xbf16>, vector<16x8xf32> -> vector<16x8xf32>
    %145 = vector.shape_cast %144 : vector<16x8xf32> to vector<2x8x8xf32>
    %c0_86 = arith.constant 0 : index
    %c3_87 = arith.constant 3 : index
    %c0_88 = arith.constant 0 : index
    %c0_89 = arith.constant 0 : index
    %146 = vector.load %arg9[%c0_86, %c3_87, %c0_88, %c0_89] : memref<1x4x32x8xbf16, #tpu.memory_space<vmem>>, vector<1x1x32x8xbf16>
    %147 = vector.shape_cast %146 : vector<1x1x32x8xbf16> to vector<32x8xbf16>
    %cst_90 = arith.constant dense<0.000000e+00> : vector<16x8xf32>
    %148 = tpu.matmul %32, %147, %cst_90 {dimension_numbers = #tpu.dot_dimension_numbers<[1], [0], [0], [1], [0, 0, 1, 1], [], []>} : vector<16x32xbf16>, vector<32x8xbf16>, vector<16x8xf32> -> vector<16x8xf32>
    %149 = vector.shape_cast %148 : vector<16x8xf32> to vector<2x8x8xf32>
    %c0_91 = arith.constant 0 : index
    %c3_92 = arith.constant 3 : index
    %c0_93 = arith.constant 0 : index
    %c0_94 = arith.constant 0 : index
    %150 = vector.load %arg10[%c0_91, %c3_92, %c0_93, %c0_94] : memref<1x4x32x8xbf16, #tpu.memory_space<vmem>>, vector<1x1x32x8xbf16>
    %151 = vector.shape_cast %150 : vector<1x1x32x8xbf16> to vector<32x8xbf16>
    %cst_95 = arith.constant dense<0.000000e+00> : vector<16x8xf32>
    %152 = tpu.matmul %32, %151, %cst_95 {dimension_numbers = #tpu.dot_dimension_numbers<[1], [0], [0], [1], [0, 0, 1, 1], [], []>} : vector<16x32xbf16>, vector<32x8xbf16>, vector<16x8xf32> -> vector<16x8xf32>
    %153 = vector.shape_cast %152 : vector<16x8xf32> to vector<2x8x8xf32>
    %154 = arith.truncf %145 : vector<2x8x8xf32> to vector<2x8x8xbf16>
    %155 = arith.truncf %149 : vector<2x8x8xf32> to vector<2x8x8xbf16>
    "tpu.trace_start"() <{level = 10 : i32, message = "bqd,bkd->bqk"}> : () -> ()
    %cst_96 = arith.constant dense<0.000000e+00> : vector<2x8x8xf32>
    %156 = tpu.matmul %154, %155, %cst_96 {dimension_numbers = #tpu.dot_dimension_numbers<[2], [2], [1], [1], [0, 0, 0, 1, 1, 1], [0], [0]>} : vector<2x8x8xbf16>, vector<2x8x8xbf16>, vector<2x8x8xf32> -> vector<2x8x8xf32>
    "tpu.trace_stop"() : () -> ()
    %157 = arith.addf %156, %35 : vector<2x8x8xf32>
    %cst_97 = arith.constant dense<0xFF800000> : vector<2x8xf32>
    %158 = vector.multi_reduction <maximumf>, %157, %cst_97 [2] : vector<2x8x8xf32> to vector<2x8xf32>
    %159 = vector.shape_cast %158 : vector<2x8xf32> to vector<2x8x1xf32>
    %160 = vector.broadcast %159 : vector<2x8x1xf32> to vector<2x8x8xf32>
    %161 = arith.subf %157, %160 : vector<2x8x8xf32>
    %162 = math.exp %161 : vector<2x8x8xf32>
    %cst_98 = arith.constant dense<0.000000e+00> : vector<2x8xf32>
    %163 = vector.multi_reduction <add>, %162, %cst_98 [2] : vector<2x8x8xf32> to vector<2x8xf32>
    %164 = vector.shape_cast %163 : vector<2x8xf32> to vector<2x8x1xf32>
    %165 = tpu.reciprocal %164 {approx = true} : vector<2x8x1xf32> -> vector<2x8x1xf32>
    %166 = vector.broadcast %165 : vector<2x8x1xf32> to vector<2x8x8xf32>
    %167 = arith.mulf %162, %166 : vector<2x8x8xf32>
    %168 = arith.truncf %167 : vector<2x8x8xf32> to vector<2x8x8xbf16>
    %169 = arith.truncf %153 : vector<2x8x8xf32> to vector<2x8x8xbf16>
    "tpu.trace_start"() <{level = 10 : i32, message = "bqk,bkd->bqd"}> : () -> ()
    %cst_99 = arith.constant dense<0.000000e+00> : vector<2x8x8xf32>
    %170 = tpu.matmul %168, %169, %cst_99 {dimension_numbers = #tpu.dot_dimension_numbers<[2], [1], [1], [2], [0, 0, 0, 1, 1, 2], [0], [0]>} : vector<2x8x8xbf16>, vector<2x8x8xbf16>, vector<2x8x8xf32> -> vector<2x8x8xf32>
    "tpu.trace_stop"() : () -> ()
    %171 = vector.shape_cast %170 : vector<2x8x8xf32> to vector<16x8xf32>
    %172 = arith.truncf %171 : vector<16x8xf32> to vector<16x8xbf16>
    %c0_100 = arith.constant 0 : index
    %c3_101 = arith.constant 3 : index
    %c0_102 = arith.constant 0 : index
    %c0_103 = arith.constant 0 : index
    %173 = vector.load %arg11[%c0_100, %c3_101, %c0_102, %c0_103] : memref<1x4x8x32xbf16, #tpu.memory_space<vmem>>, vector<1x1x8x32xbf16>
    %174 = vector.shape_cast %173 : vector<1x1x8x32xbf16> to vector<8x32xbf16>
    %cst_104 = arith.constant dense<0.000000e+00> : vector<16x32xf32>
    %175 = tpu.matmul %172, %174, %cst_104 {dimension_numbers = #tpu.dot_dimension_numbers<[1], [0], [0], [1], [0, 0, 1, 1], [], []>} : vector<16x8xbf16>, vector<8x32xbf16>, vector<16x32xf32> -> vector<16x32xf32>
    %176 = arith.addf %141, %175 : vector<16x32xf32>
    %177 = arith.addf %3, %176 : vector<16x32xf32>
    %178 = arith.index_cast %arg1 : i32 to index
    %c0_105 = arith.constant 0 : index
    %179 = vector.load %arg12[%178, %c0_105] : memref<2x32xf32, #tpu.memory_space<vmem>>, vector<1x32xf32>
    %180 = vector.shape_cast %179 : vector<1x32xf32> to vector<32xf32>
    %181 = arith.index_cast %arg1 : i32 to index
    %c0_106 = arith.constant 0 : index
    %182 = vector.load %arg13[%181, %c0_106] : memref<2x32xf32, #tpu.memory_space<vmem>>, vector<1x32xf32>
    %183 = vector.shape_cast %182 : vector<1x32xf32> to vector<32xf32>
    %cst_107 = arith.constant dense<0.000000e+00> : vector<16xf32>
    %184 = vector.multi_reduction <add>, %177, %cst_107 [1] : vector<16x32xf32> to vector<16xf32>
    %185 = vector.shape_cast %184 : vector<16xf32> to vector<16x1xf32>
    %cst_108 = arith.constant 3.200000e+01 : f32
    %186 = vector.broadcast %cst_108 : f32 to vector<16x1xf32>
    %187 = arith.divf %185, %186 : vector<16x1xf32>
    %188 = vector.broadcast %187 : vector<16x1xf32> to vector<16x32xf32>
    %189 = arith.subf %177, %188 : vector<16x32xf32>
    %190 = arith.mulf %189, %189 : vector<16x32xf32>
    %cst_109 = arith.constant dense<0.000000e+00> : vector<16xf32>
    %191 = vector.multi_reduction <add>, %190, %cst_109 [1] : vector<16x32xf32> to vector<16xf32>
    %192 = vector.shape_cast %191 : vector<16xf32> to vector<16x1xf32>
    %cst_110 = arith.constant 0.0322580636 : f32
    %193 = vector.broadcast %cst_110 : f32 to vector<16x1xf32>
    %194 = arith.mulf %192, %193 : vector<16x1xf32>
    %195 = vector.shape_cast %180 : vector<32xf32> to vector<1x32xf32>
    %196 = vector.broadcast %195 : vector<1x32xf32> to vector<16x32xf32>
    %197 = arith.mulf %196, %189 : vector<16x32xf32>
    %198 = math.sqrt %194 : vector<16x1xf32>
    %cst_111 = arith.constant 9.99999997E-7 : f32
    %199 = vector.broadcast %cst_111 : f32 to vector<16x1xf32>
    %200 = arith.addf %198, %199 : vector<16x1xf32>
    %201 = vector.broadcast %200 : vector<16x1xf32> to vector<16x32xf32>
    %202 = arith.divf %197, %201 : vector<16x32xf32>
    %203 = vector.shape_cast %183 : vector<32xf32> to vector<1x32xf32>
    %204 = vector.broadcast %203 : vector<1x32xf32> to vector<16x32xf32>
    %205 = arith.addf %202, %204 : vector<16x32xf32>
    %206 = tpu.iota {dimensions = array<i32: 0>} : vector<16x1xi32>
    %c8_i32 = arith.constant 8 : i32
    %c0_i32_112 = arith.constant 0 : i32
    %207 = arith.cmpi eq, %c8_i32, %c0_i32_112 : i32
    %c1_i32 = arith.constant 1 : i32
    %208 = arith.select %207, %c1_i32, %c8_i32 : i32
    %209 = vector.broadcast %208 : i32 to vector<16x1xi32>
    %210 = arith.remsi %206, %209 : vector<16x1xi32>
    %c0_i32_113 = arith.constant 0 : i32
    %211 = vector.broadcast %c0_i32_113 : i32 to vector<16x1xi32>
    %212 = arith.cmpi ne, %210, %211 : vector<16x1xi32>
    %c0_i32_114 = arith.constant 0 : i32
    %213 = vector.broadcast %c0_i32_114 : i32 to vector<16x1xi32>
    %214 = arith.cmpi slt, %210, %213 : vector<16x1xi32>
    %c0_i32_115 = arith.constant 0 : i32
    %215 = arith.cmpi slt, %208, %c0_i32_115 : i32
    %216 = vector.broadcast %215 : i1 to vector<16x1xi1>
    %217 = vector.broadcast %216 : vector<16x1xi1> to vector<16x1xi1>
    %218 = arith.xori %214, %217 : vector<16x1xi1>
    %219 = arith.andi %218, %212 : vector<16x1xi1>
    %220 = vector.broadcast %208 : i32 to vector<16x1xi32>
    %221 = arith.addi %210, %220 : vector<16x1xi32>
    %222 = arith.select %219, %221, %210 : vector<16x1xi1>, vector<16x1xi32>
    %c0_i32_116 = arith.constant 0 : i32
    %223 = vector.broadcast %c0_i32_116 : i32 to vector<16x1xi32>
    %224 = arith.cmpi ne, %222, %223 : vector<16x1xi32>
    %c7_i32 = arith.constant 7 : i32
    %225 = vector.broadcast %c7_i32 : i32 to vector<16x1xi32>
    %226 = arith.cmpi ne, %222, %225 : vector<16x1xi32>
    %227 = arith.index_cast %arg1 : i32 to index
    %c0_117 = arith.constant 0 : index
    %228 = vector.load %arg15[%227, %c0_117] : memref<2x64xf32, #tpu.memory_space<vmem>>, vector<1x64xf32>
    %229 = vector.shape_cast %228 : vector<1x64xf32> to vector<64xf32>
    %c1_i32_118 = arith.constant 1 : i32
    %230 = tpu.dynamic_rotate %205 by %c1_i32_118 dim 0 : vector<16x32xf32>, i32 -> vector<16x32xf32>
    %cst_119 = arith.constant 0.000000e+00 : f32
    %231 = vector.shape_cast %224 : vector<16x1xi1> to vector<16x1xi1>
    %232 = vector.broadcast %231 : vector<16x1xi1> to vector<16x32xi1>
    %233 = vector.broadcast %cst_119 : f32 to vector<16x32xf32>
    %234 = arith.select %232, %230, %233 : vector<16x32xi1>, vector<16x32xf32>
    %235 = arith.truncf %234 : vector<16x32xf32> to vector<16x32xbf16>
    %c15_i32 = arith.constant 15 : i32
    %236 = tpu.dynamic_rotate %205 by %c15_i32 dim 0 : vector<16x32xf32>, i32 -> vector<16x32xf32>
    %cst_120 = arith.constant 0.000000e+00 : f32
    %237 = vector.shape_cast %226 : vector<16x1xi1> to vector<16x1xi1>
    %238 = vector.broadcast %237 : vector<16x1xi1> to vector<16x32xi1>
    %239 = vector.broadcast %cst_120 : f32 to vector<16x32xf32>
    %240 = arith.select %238, %236, %239 : vector<16x32xi1>, vector<16x32xf32>
    %241 = arith.truncf %240 : vector<16x32xf32> to vector<16x32xbf16>
    %c0_121 = arith.constant 0 : index
    %c0_122 = arith.constant 0 : index
    %c0_123 = arith.constant 0 : index
    %c0_124 = arith.constant 0 : index
    %242 = vector.load %arg14[%c0_121, %c0_122, %c0_123, %c0_124] : memref<1x3x32x64xbf16, #tpu.memory_space<vmem>>, vector<1x1x32x64xbf16>
    %243 = vector.shape_cast %242 : vector<1x1x32x64xbf16> to vector<32x64xbf16>
    %cst_125 = arith.constant dense<0.000000e+00> : vector<16x64xf32>
    %244 = tpu.matmul %235, %243, %cst_125 {dimension_numbers = #tpu.dot_dimension_numbers<[1], [0], [0], [1], [0, 0, 1, 1], [], []>} : vector<16x32xbf16>, vector<32x64xbf16>, vector<16x64xf32> -> vector<16x64xf32>
    %245 = arith.truncf %205 : vector<16x32xf32> to vector<16x32xbf16>
    %c0_126 = arith.constant 0 : index
    %c1_127 = arith.constant 1 : index
    %c0_128 = arith.constant 0 : index
    %c0_129 = arith.constant 0 : index
    %246 = vector.load %arg14[%c0_126, %c1_127, %c0_128, %c0_129] : memref<1x3x32x64xbf16, #tpu.memory_space<vmem>>, vector<1x1x32x64xbf16>
    %247 = vector.shape_cast %246 : vector<1x1x32x64xbf16> to vector<32x64xbf16>
    %cst_130 = arith.constant dense<0.000000e+00> : vector<16x64xf32>
    %248 = tpu.matmul %245, %247, %cst_130 {dimension_numbers = #tpu.dot_dimension_numbers<[1], [0], [0], [1], [0, 0, 1, 1], [], []>} : vector<16x32xbf16>, vector<32x64xbf16>, vector<16x64xf32> -> vector<16x64xf32>
    %249 = arith.addf %244, %248 : vector<16x64xf32>
    %c0_131 = arith.constant 0 : index
    %c2_132 = arith.constant 2 : index
    %c0_133 = arith.constant 0 : index
    %c0_134 = arith.constant 0 : index
    %250 = vector.load %arg14[%c0_131, %c2_132, %c0_133, %c0_134] : memref<1x3x32x64xbf16, #tpu.memory_space<vmem>>, vector<1x1x32x64xbf16>
    %251 = vector.shape_cast %250 : vector<1x1x32x64xbf16> to vector<32x64xbf16>
    %cst_135 = arith.constant dense<0.000000e+00> : vector<16x64xf32>
    %252 = tpu.matmul %241, %251, %cst_135 {dimension_numbers = #tpu.dot_dimension_numbers<[1], [0], [0], [1], [0, 0, 1, 1], [], []>} : vector<16x32xbf16>, vector<32x64xbf16>, vector<16x64xf32> -> vector<16x64xf32>
    %253 = arith.addf %249, %252 : vector<16x64xf32>
    %254 = vector.shape_cast %229 : vector<64xf32> to vector<1x64xf32>
    %255 = vector.broadcast %254 : vector<1x64xf32> to vector<16x64xf32>
    %256 = arith.addf %253, %255 : vector<16x64xf32>
    %cst_136 = arith.constant 0.000000e+00 : f32
    %257 = vector.broadcast %cst_136 : f32 to vector<16x64xf32>
    %258 = arith.maximumf %256, %257 : vector<16x64xf32>
    %259 = arith.index_cast %arg1 : i32 to index
    %c0_137 = arith.constant 0 : index
    %260 = vector.load %arg17[%259, %c0_137] : memref<2x32xf32, #tpu.memory_space<vmem>>, vector<1x32xf32>
    %261 = vector.shape_cast %260 : vector<1x32xf32> to vector<32xf32>
    %c1_i32_138 = arith.constant 1 : i32
    %262 = tpu.dynamic_rotate %258 by %c1_i32_138 dim 0 : vector<16x64xf32>, i32 -> vector<16x64xf32>
    %cst_139 = arith.constant 0.000000e+00 : f32
    %263 = vector.shape_cast %224 : vector<16x1xi1> to vector<16x1xi1>
    %264 = vector.broadcast %263 : vector<16x1xi1> to vector<16x64xi1>
    %265 = vector.broadcast %cst_139 : f32 to vector<16x64xf32>
    %266 = arith.select %264, %262, %265 : vector<16x64xi1>, vector<16x64xf32>
    %267 = arith.truncf %266 : vector<16x64xf32> to vector<16x64xbf16>
    %c15_i32_140 = arith.constant 15 : i32
    %268 = tpu.dynamic_rotate %258 by %c15_i32_140 dim 0 : vector<16x64xf32>, i32 -> vector<16x64xf32>
    %cst_141 = arith.constant 0.000000e+00 : f32
    %269 = vector.shape_cast %226 : vector<16x1xi1> to vector<16x1xi1>
    %270 = vector.broadcast %269 : vector<16x1xi1> to vector<16x64xi1>
    %271 = vector.broadcast %cst_141 : f32 to vector<16x64xf32>
    %272 = arith.select %270, %268, %271 : vector<16x64xi1>, vector<16x64xf32>
    %273 = arith.truncf %272 : vector<16x64xf32> to vector<16x64xbf16>
    %c0_142 = arith.constant 0 : index
    %c0_143 = arith.constant 0 : index
    %c0_144 = arith.constant 0 : index
    %c0_145 = arith.constant 0 : index
    %274 = vector.load %arg16[%c0_142, %c0_143, %c0_144, %c0_145] : memref<1x3x64x32xbf16, #tpu.memory_space<vmem>>, vector<1x1x64x32xbf16>
    %275 = vector.shape_cast %274 : vector<1x1x64x32xbf16> to vector<64x32xbf16>
    %cst_146 = arith.constant dense<0.000000e+00> : vector<16x32xf32>
    %276 = tpu.matmul %267, %275, %cst_146 {dimension_numbers = #tpu.dot_dimension_numbers<[1], [0], [0], [1], [0, 0, 1, 1], [], []>} : vector<16x64xbf16>, vector<64x32xbf16>, vector<16x32xf32> -> vector<16x32xf32>
    %277 = arith.truncf %258 : vector<16x64xf32> to vector<16x64xbf16>
    %c0_147 = arith.constant 0 : index
    %c1_148 = arith.constant 1 : index
    %c0_149 = arith.constant 0 : index
    %c0_150 = arith.constant 0 : index
    %278 = vector.load %arg16[%c0_147, %c1_148, %c0_149, %c0_150] : memref<1x3x64x32xbf16, #tpu.memory_space<vmem>>, vector<1x1x64x32xbf16>
    %279 = vector.shape_cast %278 : vector<1x1x64x32xbf16> to vector<64x32xbf16>
    %cst_151 = arith.constant dense<0.000000e+00> : vector<16x32xf32>
    %280 = tpu.matmul %277, %279, %cst_151 {dimension_numbers = #tpu.dot_dimension_numbers<[1], [0], [0], [1], [0, 0, 1, 1], [], []>} : vector<16x64xbf16>, vector<64x32xbf16>, vector<16x32xf32> -> vector<16x32xf32>
    %281 = arith.addf %276, %280 : vector<16x32xf32>
    %c0_152 = arith.constant 0 : index
    %c2_153 = arith.constant 2 : index
    %c0_154 = arith.constant 0 : index
    %c0_155 = arith.constant 0 : index
    %282 = vector.load %arg16[%c0_152, %c2_153, %c0_154, %c0_155] : memref<1x3x64x32xbf16, #tpu.memory_space<vmem>>, vector<1x1x64x32xbf16>
    %283 = vector.shape_cast %282 : vector<1x1x64x32xbf16> to vector<64x32xbf16>
    %cst_156 = arith.constant dense<0.000000e+00> : vector<16x32xf32>
    %284 = tpu.matmul %273, %283, %cst_156 {dimension_numbers = #tpu.dot_dimension_numbers<[1], [0], [0], [1], [0, 0, 1, 1], [], []>} : vector<16x64xbf16>, vector<64x32xbf16>, vector<16x32xf32> -> vector<16x32xf32>
    %285 = arith.addf %281, %284 : vector<16x32xf32>
    %286 = vector.shape_cast %261 : vector<32xf32> to vector<1x32xf32>
    %287 = vector.broadcast %286 : vector<1x32xf32> to vector<16x32xf32>
    %288 = arith.addf %285, %287 : vector<16x32xf32>
    %289 = arith.addf %177, %288 : vector<16x32xf32>
    %c0_157 = arith.constant 0 : index
    %c0_158 = arith.constant 0 : index
    %290 = vector.load %arg21[%c0_157, %c0_158] : memref<16x32xf32, #tpu.memory_space<vmem>>, vector<16x32xf32>
    tpu.vector_store %arg21[%c0_157, %c0_158], %289 {strides = array<i32>} : memref<16x32xf32, #tpu.memory_space<vmem>>, vector<16x32xf32>,
    %c1_i32_159 = arith.constant 1 : i32
    %291 = arith.cmpi eq, %arg1, %c1_i32_159 : i32
    %292 = arith.extui %291 : i1 to i32
    %c0_i32_160 = arith.constant 0 : i32
    %293 = arith.cmpi ne, %292, %c0_i32_160 : i32
    scf.if %293 {
      %c0_161 = arith.constant 0 : index
      %c0_162 = arith.constant 0 : index
      %294 = vector.load %arg18[%c0_161, %c0_162] : memref<1x32xf32, #tpu.memory_space<vmem>>, vector<1x32xf32>
      %c0_163 = arith.constant 0 : index
      %c0_164 = arith.constant 0 : index
      %295 = vector.load %arg19[%c0_163, %c0_164] : memref<1x32xf32, #tpu.memory_space<vmem>>, vector<1x32xf32>
      %cst_165 = arith.constant dense<0.000000e+00> : vector<16xf32>
      %296 = vector.multi_reduction <add>, %289, %cst_165 [1] : vector<16x32xf32> to vector<16xf32>
      %297 = vector.shape_cast %296 : vector<16xf32> to vector<16x1xf32>
      %cst_166 = arith.constant 3.200000e+01 : f32
      %298 = vector.broadcast %cst_166 : f32 to vector<16x1xf32>
      %299 = arith.divf %297, %298 : vector<16x1xf32>
      %300 = vector.broadcast %299 : vector<16x1xf32> to vector<16x32xf32>
      %301 = arith.subf %289, %300 : vector<16x32xf32>
      %302 = arith.mulf %301, %301 : vector<16x32xf32>
      %cst_167 = arith.constant dense<0.000000e+00> : vector<16xf32>
      %303 = vector.multi_reduction <add>, %302, %cst_167 [1] : vector<16x32xf32> to vector<16xf32>
      %304 = vector.shape_cast %303 : vector<16xf32> to vector<16x1xf32>
      %cst_168 = arith.constant 0.0322580636 : f32
      %305 = vector.broadcast %cst_168 : f32 to vector<16x1xf32>
      %306 = arith.mulf %304, %305 : vector<16x1xf32>
      %307 = vector.broadcast %294 : vector<1x32xf32> to vector<16x32xf32>
      %308 = arith.mulf %307, %301 : vector<16x32xf32>
      %309 = math.sqrt %306 : vector<16x1xf32>
      %cst_169 = arith.constant 9.99999997E-7 : f32
      %310 = vector.broadcast %cst_169 : f32 to vector<16x1xf32>
      %311 = arith.addf %309, %310 : vector<16x1xf32>
      %312 = vector.broadcast %311 : vector<16x1xf32> to vector<16x32xf32>
      %313 = arith.divf %308, %312 : vector<16x32xf32>
      %314 = vector.broadcast %295 : vector<1x32xf32> to vector<16x32xf32>
      %315 = arith.addf %313, %314 : vector<16x32xf32>
      %316 = vector.shape_cast %315 : vector<16x32xf32> to vector<2x8x32xf32>
      %c0_170 = arith.constant 0 : index
      %c0_171 = arith.constant 0 : index
      %c0_172 = arith.constant 0 : index
      %317 = vector.load %arg20[%c0_170, %c0_171, %c0_172] : memref<2x8x32xf32, #tpu.memory_space<vmem>>, vector<2x8x32xf32>
      tpu.vector_store %arg20[%c0_170, %c0_171, %c0_172], %316 {strides = array<i32>} : memref<2x8x32xf32, #tpu.memory_space<vmem>>, vector<2x8x32xf32>,
    } else {
    }
    return
  }
  func.func @transform_0(%arg0: i32, %arg1: i32) -> (i32, i32, i32) {
    %c0_i32 = arith.constant 0 : i32
    %c0_i32_0 = arith.constant 0 : i32
    %c0_i32_1 = arith.constant 0 : i32
    return %arg0, %c0_i32, %c0_i32_0 : i32, i32, i32
  }
  func.func @transform_1(%arg0: i32, %arg1: i32) -> (i32, i32, i32) {
    %c0_i32 = arith.constant 0 : i32
    %c0_i32_0 = arith.constant 0 : i32
    %c0_i32_1 = arith.constant 0 : i32
    return %arg0, %c0_i32, %c0_i32_0 : i32, i32, i32
  }
  func.func @transform_2(%arg0: i32, %arg1: i32) -> (i32, i32) {
    %c0_i32 = arith.constant 0 : i32
    %c0_i32_0 = arith.constant 0 : i32
    %c0_i32_1 = arith.constant 0 : i32
    return %c0_i32, %c0_i32_0 : i32, i32
  }
  func.func @transform_3(%arg0: i32, %arg1: i32) -> (i32, i32) {
    %c0_i32 = arith.constant 0 : i32
    %c0_i32_0 = arith.constant 0 : i32
    %c0_i32_1 = arith.constant 0 : i32
    return %c0_i32, %c0_i32_0 : i32, i32
  }
  func.func @transform_4(%arg0: i32, %arg1: i32) -> (i32, i32) {
    %c0_i32 = arith.constant 0 : i32
    %c0_i32_0 = arith.constant 0 : i32
    %c0_i32_1 = arith.constant 0 : i32
    return %c0_i32, %c0_i32_0 : i32, i32
  }
  func.func @transform_5(%arg0: i32, %arg1: i32) -> (i32, i32) {
    %c0_i32 = arith.constant 0 : i32
    %c0_i32_0 = arith.constant 0 : i32
    %c0_i32_1 = arith.constant 0 : i32
    return %c0_i32, %c0_i32_0 : i32, i32
  }
  func.func @transform_6(%arg0: i32, %arg1: i32) -> (i32, i32, i32, i32) {
    %c0_i32 = arith.constant 0 : i32
    %c0_i32_0 = arith.constant 0 : i32
    %c0_i32_1 = arith.constant 0 : i32
    %c0_i32_2 = arith.constant 0 : i32
    return %arg1, %c0_i32, %c0_i32_0, %c0_i32_1 : i32, i32, i32, i32
  }
  func.func @transform_7(%arg0: i32, %arg1: i32) -> (i32, i32, i32, i32) {
    %c0_i32 = arith.constant 0 : i32
    %c0_i32_0 = arith.constant 0 : i32
    %c0_i32_1 = arith.constant 0 : i32
    %c0_i32_2 = arith.constant 0 : i32
    return %arg1, %c0_i32, %c0_i32_0, %c0_i32_1 : i32, i32, i32, i32
  }
  func.func @transform_8(%arg0: i32, %arg1: i32) -> (i32, i32, i32, i32) {
    %c0_i32 = arith.constant 0 : i32
    %c0_i32_0 = arith.constant 0 : i32
    %c0_i32_1 = arith.constant 0 : i32
    %c0_i32_2 = arith.constant 0 : i32
    return %arg1, %c0_i32, %c0_i32_0, %c0_i32_1 : i32, i32, i32, i32
  }
  func.func @transform_9(%arg0: i32, %arg1: i32) -> (i32, i32, i32, i32) {
    %c0_i32 = arith.constant 0 : i32
    %c0_i32_0 = arith.constant 0 : i32
    %c0_i32_1 = arith.constant 0 : i32
    %c0_i32_2 = arith.constant 0 : i32
    return %arg1, %c0_i32, %c0_i32_0, %c0_i32_1 : i32, i32, i32, i32
  }
  func.func @transform_10(%arg0: i32, %arg1: i32) -> (i32, i32) {
    %c0_i32 = arith.constant 0 : i32
    %c0_i32_0 = arith.constant 0 : i32
    %c0_i32_1 = arith.constant 0 : i32
    return %c0_i32, %c0_i32_0 : i32, i32
  }
  func.func @transform_11(%arg0: i32, %arg1: i32) -> (i32, i32) {
    %c0_i32 = arith.constant 0 : i32
    %c0_i32_0 = arith.constant 0 : i32
    %c0_i32_1 = arith.constant 0 : i32
    return %c0_i32, %c0_i32_0 : i32, i32
  }
  func.func @transform_12(%arg0: i32, %arg1: i32) -> (i32, i32, i32, i32) {
    %c0_i32 = arith.constant 0 : i32
    %c0_i32_0 = arith.constant 0 : i32
    %c0_i32_1 = arith.constant 0 : i32
    %c0_i32_2 = arith.constant 0 : i32
    return %arg1, %c0_i32, %c0_i32_0, %c0_i32_1 : i32, i32, i32, i32
  }
  func.func @transform_13(%arg0: i32, %arg1: i32) -> (i32, i32) {
    %c0_i32 = arith.constant 0 : i32
    %c0_i32_0 = arith.constant 0 : i32
    %c0_i32_1 = arith.constant 0 : i32
    return %c0_i32, %c0_i32_0 : i32, i32
  }
  func.func @transform_14(%arg0: i32, %arg1: i32) -> (i32, i32, i32, i32) {
    %c0_i32 = arith.constant 0 : i32
    %c0_i32_0 = arith.constant 0 : i32
    %c0_i32_1 = arith.constant 0 : i32
    %c0_i32_2 = arith.constant 0 : i32
    return %arg1, %c0_i32, %c0_i32_0, %c0_i32_1 : i32, i32, i32, i32
  }
  func.func @transform_15(%arg0: i32, %arg1: i32) -> (i32, i32) {
    %c0_i32 = arith.constant 0 : i32
    %c0_i32_0 = arith.constant 0 : i32
    %c0_i32_1 = arith.constant 0 : i32
    return %c0_i32, %c0_i32_0 : i32, i32
  }
  func.func @transform_16(%arg0: i32, %arg1: i32) -> (i32, i32) {
    %c0_i32 = arith.constant 0 : i32
    %c0_i32_0 = arith.constant 0 : i32
    %c0_i32_1 = arith.constant 0 : i32
    return %c0_i32, %c0_i32_0 : i32, i32
  }
  func.func @transform_17(%arg0: i32, %arg1: i32) -> (i32, i32) {
    %c0_i32 = arith.constant 0 : i32
    %c0_i32_0 = arith.constant 0 : i32
    %c0_i32_1 = arith.constant 0 : i32
    return %c0_i32, %c0_i32_0 : i32, i32
  }
  func.func @transform_18(%arg0: i32, %arg1: i32) -> (i32, i32, i32) {
    %c0_i32 = arith.constant 0 : i32
    %c0_i32_0 = arith.constant 0 : i32
    %c0_i32_1 = arith.constant 0 : i32
    return %arg0, %c0_i32, %c0_i32_0 : i32, i32, i32
  }
}

</mosaic_0001>

<llo_original>
// kernel: tpu_custom_call.1
$region0: #{tpu_custom_call.1}
  #allocation0 [shape = 'u32[]', space=smem, size = 0x4, offset = 0x4, fixed_abs, tag = 'smem constant byte address 0x4 - core index']
  #allocation1 [shape = 'u32[144,128]{1,0:T(1,128)}', space=vmem, size = 0x12000, scoped, tag = 'internal scratch']
  #allocation2 [shape = 'f32[16,32]{1,0:T(8,128)}', space=vmem, size = 0x2000, scoped, tag = 'scratch operand']
  %s0 = inlined_call_operand.vmem [shape: f32[2,1,8], index: 0, kind: input, shape index: {}]
  %s1 = inlined_call_operand.vmem [shape: f32[2,8,16], index: 1, kind: input, shape index: {}]
  %s2 = inlined_call_operand.vmem [shape: f32[8,32], index: 2, kind: input, shape index: {}]
  %s3 = inlined_call_operand.vmem [shape: bf16[16,32], index: 3, kind: input, shape index: {}]
  %s4 = inlined_call_operand.vmem [shape: f32[2,32], index: 4, kind: input, shape index: {}]
  %s5 = inlined_call_operand.vmem [shape: f32[2,32], index: 5, kind: input, shape index: {}]
  %s6 = inlined_call_operand.vmem [shape: bf16[2,4,32,8], index: 6, kind: input, shape index: {}]
  %s7 = inlined_call_operand.vmem [shape: bf16[2,4,32,8], index: 7, kind: input, shape index: {}]
  %s8 = inlined_call_operand.vmem [shape: bf16[2,4,32,8], index: 8, kind: input, shape index: {}]
  %s9 = inlined_call_operand.vmem [shape: bf16[2,4,8,32], index: 9, kind: input, shape index: {}]
  %s10 = inlined_call_operand.vmem [shape: f32[2,32], index: 10, kind: input, shape index: {}]
  %s11 = inlined_call_operand.vmem [shape: f32[2,32], index: 11, kind: input, shape index: {}]
  %s12 = inlined_call_operand.vmem [shape: bf16[2,3,32,64], index: 12, kind: input, shape index: {}]
  %s13 = inlined_call_operand.vmem [shape: f32[2,64], index: 13, kind: input, shape index: {}]
  %s14 = inlined_call_operand.vmem [shape: bf16[2,3,64,32], index: 14, kind: input, shape index: {}]
  %s15 = inlined_call_operand.vmem [shape: f32[2,32], index: 15, kind: input, shape index: {}]
  %s16 = inlined_call_operand.vmem [shape: f32[1,32], index: 16, kind: input, shape index: {}]
  %s17 = inlined_call_operand.vmem [shape: f32[1,32], index: 17, kind: input, shape index: {}]
  %s18 = inlined_call_operand.hbm [shape: f32[2,8,32], index: 18, kind: output, shape index: {}]
  %s19 = sld [smem:[#allocation0]]
  $region113: #{tpu_custom_call.1} parent=0
    _
  %s21 = ssub.s32 1, %s19
  %s22 = scalar_select 0, %s21, %s19
  $region1: #{tpu_custom_call.1} parent=0
    #allocation3 [shape = 'u8[8192]{0}', space=vmem, size = 0x2000, scoped, tag = 'output window, operand 0, single buffered']
    #allocation4 [shape = 's32[2]{0}', space=sflag, size = 0x8, scoped, tag = 'scoped memory for tpu_custom_call.1']
    %23 = vsyncpa [#allocation4], 0
    loop: start=0, step=1, limit=4
    $region2: #{tpu_custom_call.1} parent=1 // loop_pre_header
      _
    $region3: #{tpu_custom_call.1} parent=1 // loop_header
      %s25 = sphi 0, %s29
      %p26 = scmp.ge.s32.totalorder %s25, 4
      %s32 = sphi 0, %s44
      %s33 = sphi 0, %s40
      %s34 = sphi 0, %s32
      %s35 = sphi 0, %s33
      %s36 = sphi 0, %s34
      %s37 = sphi 0, %s35
      %s47 = sphi 0, %s49
      %s50 = sphi 0, %s47
      %s51 = sphi 0, %s50
      %s67 = sphi 0, %s51
      %s73 = sphi 0, %s75
      %s76 = sphi 0, %s73
      %s77 = sphi 0, %s76
      %s93 = sphi 0, %s77
      %s97 = sphi 0, %s97
      %s99 = sphi 0, %s97
      %s100 = sphi 0, %s99
      %s114 = sphi 0, %s100
      %s118 = sphi 0, %s118
      %s120 = sphi 0, %s118
      %s121 = sphi 0, %s120
      %s135 = sphi 0, %s121
      %s139 = sphi 0, %s139
      %s141 = sphi 0, %s139
      %s142 = sphi 0, %s141
      %s156 = sphi 0, %s142
      %s160 = sphi 0, %s160
      %s162 = sphi 0, %s160
      %s163 = sphi 0, %s162
      %s177 = sphi 0, %s163
      %s183 = sphi 0, %s185
      %s186 = sphi 0, %s183
      %s187 = sphi 0, %s186
      %s203 = sphi 0, %s187
      %s209 = sphi 0, %s211
      %s212 = sphi 0, %s209
      %s213 = sphi 0, %s212
      %s229 = sphi 0, %s213
      %s235 = sphi 0, %s237
      %s238 = sphi 0, %s235
      %s239 = sphi 0, %s238
      %s255 = sphi 0, %s239
      %s261 = sphi 0, %s263
      %s264 = sphi 0, %s261
      %s265 = sphi 0, %s264
      %s281 = sphi 0, %s265
      %s285 = sphi 0, %s285
      %s287 = sphi 0, %s285
      %s288 = sphi 0, %s287
      %s302 = sphi 0, %s288
      %s306 = sphi 0, %s306
      %s308 = sphi 0, %s306
      %s309 = sphi 0, %s308
      %s323 = sphi 0, %s309
      %s329 = sphi 0, %s331
      %s332 = sphi 0, %s329
      %s333 = sphi 0, %s332
      %s349 = sphi 0, %s333
      %s353 = sphi 0, %s353
      %s355 = sphi 0, %s353
      %s356 = sphi 0, %s355
      %s370 = sphi 0, %s356
      %s376 = sphi 0, %s378
      %s379 = sphi 0, %s376
      %s380 = sphi 0, %s379
      %s396 = sphi 0, %s380
      %s400 = sphi 0, %s400
      %s402 = sphi 0, %s400
      %s403 = sphi 0, %s402
      %s417 = sphi 0, %s403
      %s421 = sphi 0, %s421
      %s423 = sphi 0, %s421
      %s424 = sphi 0, %s423
      %s438 = sphi 0, %s424
      %s442 = sphi 0, %s442
      %s444 = sphi 0, %s442
      %s445 = sphi 0, %s444
      %s459 = sphi 0, %s445
      %s465 = sphi 0, %s467
      %s468 = sphi 0, %s465
      %s469 = sphi 0, %s468
      %s485 = sphi 0, %s469
    $region4: #{tpu_custom_call.1} parent=1 // loop_header_branch
      %28 = sbr.rel (%p26) target = $region8
    $region5: #{tpu_custom_call.1} parent=1 // loop_body
      %s30 = ssub.s32 %s25, 1
      %s31 = ssub.s32 %s25, 2
      %s38 = sadd.s32 1, %s33
      %p39 = scmp.ge.s32.totalorder %s38, 2
      %s40 = scalar_select %p39, 0, %s38
      %s41 = sadd.s32 1, %s32
      %s42 = scalar_select %p39, %s41, %s32
      %p43 = scmp.ge.s32.totalorder %s42, 1
      %s44 = scalar_select %p43, 0, %s42
      %s45 = ssub.s32 %s32, %s44
      %p46 = scmp.eq.s32.totalorder %s45, 0
      %s48 = sadd.s32 %s47, 1
      %s49 = scalar_select %p46, %s47, %s48
      %p52 = pneg %p46
      %p53 = scmp.eq.s32.totalorder %s25, 1
      %p54 = por %p52, %p53
      %p55 = scmp.ne.s32.totalorder %s47, %s50
      %p56 = scmp.eq.s32.totalorder %s25, 0
      %p57 = por %p55, %p56
      %p58 = scmp.ne.s32.totalorder %s47, %s50
      %p59 = scmp.eq.s32.totalorder %s30, 1
      %p60 = por %p58, %p59
      %p61 = scmp.ne.s32.totalorder %s50, %s51
      %p62 = scmp.eq.s32.totalorder %s30, 0
      %p63 = por %p61, %p62
      %p64 = scmp.ne.s32.totalorder %s50, %s51
      %p65 = scmp.eq.s32.totalorder %s31, 1
      %p66 = por %p64, %p65
      %p68 = scmp.ne.s32.totalorder %s51, %s67
      %p69 = scmp.eq.s32.totalorder %s31, 0
      %p70 = por %p68, %p69
      %s71 = ssub.s32 %s32, %s44
      %p72 = scmp.eq.s32.totalorder %s71, 0
      %s74 = sadd.s32 %s73, 1
      %s75 = scalar_select %p72, %s73, %s74
      %p78 = pneg %p72
      %p79 = scmp.eq.s32.totalorder %s25, 1
      %p80 = por %p78, %p79
      %p81 = scmp.ne.s32.totalorder %s73, %s76
      %p82 = scmp.eq.s32.totalorder %s25, 0
      %p83 = por %p81, %p82
      %p84 = scmp.ne.s32.totalorder %s73, %s76
      %p85 = scmp.eq.s32.totalorder %s30, 1
      %p86 = por %p84, %p85
      %p87 = scmp.ne.s32.totalorder %s76, %s77
      %p88 = scmp.eq.s32.totalorder %s30, 0
      %p89 = por %p87, %p88
      %p90 = scmp.ne.s32.totalorder %s76, %s77
      %p91 = scmp.eq.s32.totalorder %s31, 1
      %p92 = por %p90, %p91
      %p94 = scmp.ne.s32.totalorder %s77, %s93
      %p95 = scmp.eq.s32.totalorder %s31, 0
      %p96 = por %p94, %p95
      %s98 = sadd.s32 %s97, 1
      %p101 = scmp.eq.s32.totalorder %s25, 1
      %p102 = scmp.ne.s32.totalorder %s97, %s99
      %p103 = scmp.eq.s32.totalorder %s25, 0
      %p104 = por %p102, %p103
      %p105 = scmp.ne.s32.totalorder %s97, %s99
      %p106 = scmp.eq.s32.totalorder %s30, 1
      %p107 = por %p105, %p106
      %p108 = scmp.ne.s32.totalorder %s99, %s100
      %p109 = scmp.eq.s32.totalorder %s30, 0
      %p110 = por %p108, %p109
      %p111 = scmp.ne.s32.totalorder %s99, %s100
      %p112 = scmp.eq.s32.totalorder %s31, 1
      %p113 = por %p111, %p112
      %p115 = scmp.ne.s32.totalorder %s100, %s114
      %p116 = scmp.eq.s32.totalorder %s31, 0
      %p117 = por %p115, %p116
      %s119 = sadd.s32 %s118, 1
      %p122 = scmp.eq.s32.totalorder %s25, 1
      %p123 = scmp.ne.s32.totalorder %s118, %s120
      %p124 = scmp.eq.s32.totalorder %s25, 0
      %p125 = por %p123, %p124
      %p126 = scmp.ne.s32.totalorder %s118, %s120
      %p127 = scmp.eq.s32.totalorder %s30, 1
      %p128 = por %p126, %p127
      %p129 = scmp.ne.s32.totalorder %s120, %s121
      %p130 = scmp.eq.s32.totalorder %s30, 0
      %p131 = por %p129, %p130
      %p132 = scmp.ne.s32.totalorder %s120, %s121
      %p133 = scmp.eq.s32.totalorder %s31, 1
      %p134 = por %p132, %p133
      %p136 = scmp.ne.s32.totalorder %s121, %s135
      %p137 = scmp.eq.s32.totalorder %s31, 0
      %p138 = por %p136, %p137
      %s140 = sadd.s32 %s139, 1
      %p143 = scmp.eq.s32.totalorder %s25, 1
      %p144 = scmp.ne.s32.totalorder %s139, %s141
      %p145 = scmp.eq.s32.totalorder %s25, 0
      %p146 = por %p144, %p145
      %p147 = scmp.ne.s32.totalorder %s139, %s141
      %p148 = scmp.eq.s32.totalorder %s30, 1
      %p149 = por %p147, %p148
      %p150 = scmp.ne.s32.totalorder %s141, %s142
      %p151 = scmp.eq.s32.totalorder %s30, 0
      %p152 = por %p150, %p151
      %p153 = scmp.ne.s32.totalorder %s141, %s142
      %p154 = scmp.eq.s32.totalorder %s31, 1
      %p155 = por %p153, %p154
      %p157 = scmp.ne.s32.totalorder %s142, %s156
      %p158 = scmp.eq.s32.totalorder %s31, 0
      %p159 = por %p157, %p158
      %s161 = sadd.s32 %s160, 1
      %p164 = scmp.eq.s32.totalorder %s25, 1
      %p165 = scmp.ne.s32.totalorder %s160, %s162
      %p166 = scmp.eq.s32.totalorder %s25, 0
      %p167 = por %p165, %p166
      %p168 = scmp.ne.s32.totalorder %s160, %s162
      %p169 = scmp.eq.s32.totalorder %s30, 1
      %p170 = por %p168, %p169
      %p171 = scmp.ne.s32.totalorder %s162, %s163
      %p172 = scmp.eq.s32.totalorder %s30, 0
      %p173 = por %p171, %p172
      %p174 = scmp.ne.s32.totalorder %s162, %s163
      %p175 = scmp.eq.s32.totalorder %s31, 1
      %p176 = por %p174, %p175
      %p178 = scmp.ne.s32.totalorder %s163, %s177
      %p179 = scmp.eq.s32.totalorder %s31, 0
      %p180 = por %p178, %p179
      %s181 = ssub.s32 %s33, %s40
      %p182 = scmp.eq.s32.totalorder %s181, 0
      %s184 = sadd.s32 %s183, 1
      %s185 = scalar_select %p182, %s183, %s184
      %p188 = pneg %p182
      %p189 = scmp.eq.s32.totalorder %s25, 1
      %p190 = por %p188, %p189
      %p191 = scmp.ne.s32.totalorder %s183, %s186
      %p192 = scmp.eq.s32.totalorder %s25, 0
      %p193 = por %p191, %p192
      %p194 = scmp.ne.s32.totalorder %s183, %s186
      %p195 = scmp.eq.s32.totalorder %s30, 1
      %p196 = por %p194, %p195
      %p197 = scmp.ne.s32.totalorder %s186, %s187
      %p198 = scmp.eq.s32.totalorder %s30, 0
      %p199 = por %p197, %p198
      %p200 = scmp.ne.s32.totalorder %s186, %s187
      %p201 = scmp.eq.s32.totalorder %s31, 1
      %p202 = por %p200, %p201
      %p204 = scmp.ne.s32.totalorder %s187, %s203
      %p205 = scmp.eq.s32.totalorder %s31, 0
      %p206 = por %p204, %p205
      %s207 = ssub.s32 %s33, %s40
      %p208 = scmp.eq.s32.totalorder %s207, 0
      %s210 = sadd.s32 %s209, 1
      %s211 = scalar_select %p208, %s209, %s210
      %p214 = pneg %p208
      %p215 = scmp.eq.s32.totalorder %s25, 1
      %p216 = por %p214, %p215
      %p217 = scmp.ne.s32.totalorder %s209, %s212
      %p218 = scmp.eq.s32.totalorder %s25, 0
      %p219 = por %p217, %p218
      %p220 = scmp.ne.s32.totalorder %s209, %s212
      %p221 = scmp.eq.s32.totalorder %s30, 1
      %p222 = por %p220, %p221
      %p223 = scmp.ne.s32.totalorder %s212, %s213
      %p224 = scmp.eq.s32.totalorder %s30, 0
      %p225 = por %p223, %p224
      %p226 = scmp.ne.s32.totalorder %s212, %s213
      %p227 = scmp.eq.s32.totalorder %s31, 1
      %p228 = por %p226, %p227
      %p230 = scmp.ne.s32.totalorder %s213, %s229
      %p231 = scmp.eq.s32.totalorder %s31, 0
      %p232 = por %p230, %p231
      %s233 = ssub.s32 %s33, %s40
      %p234 = scmp.eq.s32.totalorder %s233, 0
      %s236 = sadd.s32 %s235, 1
      %s237 = scalar_select %p234, %s235, %s236
      %p240 = pneg %p234
      %p241 = scmp.eq.s32.totalorder %s25, 1
      %p242 = por %p240, %p241
      %p243 = scmp.ne.s32.totalorder %s235, %s238
      %p244 = scmp.eq.s32.totalorder %s25, 0
      %p245 = por %p243, %p244
      %p246 = scmp.ne.s32.totalorder %s235, %s238
      %p247 = scmp.eq.s32.totalorder %s30, 1
      %p248 = por %p246, %p247
      %p249 = scmp.ne.s32.totalorder %s238, %s239
      %p250 = scmp.eq.s32.totalorder %s30, 0
      %p251 = por %p249, %p250
      %p252 = scmp.ne.s32.totalorder %s238, %s239
      %p253 = scmp.eq.s32.totalorder %s31, 1
      %p254 = por %p252, %p253
      %p256 = scmp.ne.s32.totalorder %s239, %s255
      %p257 = scmp.eq.s32.totalorder %s31, 0
      %p258 = por %p256, %p257
      %s259 = ssub.s32 %s33, %s40
      %p260 = scmp.eq.s32.totalorder %s259, 0
      %s262 = sadd.s32 %s261, 1
      %s263 = scalar_select %p260, %s261, %s262
      %p266 = pneg %p260
      %p267 = scmp.eq.s32.totalorder %s25, 1
      %p268 = por %p266, %p267
      %p269 = scmp.ne.s32.totalorder %s261, %s264
      %p270 = scmp.eq.s32.totalorder %s25, 0
      %p271 = por %p269, %p270
      %p272 = scmp.ne.s32.totalorder %s261, %s264
      %p273 = scmp.eq.s32.totalorder %s30, 1
      %p274 = por %p272, %p273
      %p275 = scmp.ne.s32.totalorder %s264, %s265
      %p276 = scmp.eq.s32.totalorder %s30, 0
      %p277 = por %p275, %p276
      %p278 = scmp.ne.s32.totalorder %s264, %s265
      %p279 = scmp.eq.s32.totalorder %s31, 1
      %p280 = por %p278, %p279
      %p282 = scmp.ne.s32.totalorder %s265, %s281
      %p283 = scmp.eq.s32.totalorder %s31, 0
      %p284 = por %p282, %p283
      %s286 = sadd.s32 %s285, 1
      %p289 = scmp.eq.s32.totalorder %s25, 1
      %p290 = scmp.ne.s32.totalorder %s285, %s287
      %p291 = scmp.eq.s32.totalorder %s25, 0
      %p292 = por %p290, %p291
      %p293 = scmp.ne.s32.totalorder %s285, %s287
      %p294 = scmp.eq.s32.totalorder %s30, 1
      %p295 = por %p293, %p294
      %p296 = scmp.ne.s32.totalorder %s287, %s288
      %p297 = scmp.eq.s32.totalorder %s30, 0
      %p298 = por %p296, %p297
      %p299 = scmp.ne.s32.totalorder %s287, %s288
      %p300 = scmp.eq.s32.totalorder %s31, 1
      %p301 = por %p299, %p300
      %p303 = scmp.ne.s32.totalorder %s288, %s302
      %p304 = scmp.eq.s32.totalorder %s31, 0
      %p305 = por %p303, %p304
      %s307 = sadd.s32 %s306, 1
      %p310 = scmp.eq.s32.totalorder %s25, 1
      %p311 = scmp.ne.s32.totalorder %s306, %s308
      %p312 = scmp.eq.s32.totalorder %s25, 0
      %p313 = por %p311, %p312
      %p314 = scmp.ne.s32.totalorder %s306, %s308
      %p315 = scmp.eq.s32.totalorder %s30, 1
      %p316 = por %p314, %p315
      %p317 = scmp.ne.s32.totalorder %s308, %s309
      %p318 = scmp.eq.s32.totalorder %s30, 0
      %p319 = por %p317, %p318
      %p320 = scmp.ne.s32.totalorder %s308, %s309
      %p321 = scmp.eq.s32.totalorder %s31, 1
      %p322 = por %p320, %p321
      %p324 = scmp.ne.s32.totalorder %s309, %s323
      %p325 = scmp.eq.s32.totalorder %s31, 0
      %p326 = por %p324, %p325
      %s327 = ssub.s32 %s33, %s40
      %p328 = scmp.eq.s32.totalorder %s327, 0
      %s330 = sadd.s32 %s329, 1
      %s331 = scalar_select %p328, %s329, %s330
      %p334 = pneg %p328
      %p335 = scmp.eq.s32.totalorder %s25, 1
      %p336 = por %p334, %p335
      %p337 = scmp.ne.s32.totalorder %s329, %s332
      %p338 = scmp.eq.s32.totalorder %s25, 0
      %p339 = por %p337, %p338
      %p340 = scmp.ne.s32.totalorder %s329, %s332
      %p341 = scmp.eq.s32.totalorder %s30, 1
      %p342 = por %p340, %p341
      %p343 = scmp.ne.s32.totalorder %s332, %s333
      %p344 = scmp.eq.s32.totalorder %s30, 0
      %p345 = por %p343, %p344
      %p346 = scmp.ne.s32.totalorder %s332, %s333
      %p347 = scmp.eq.s32.totalorder %s31, 1
      %p348 = por %p346, %p347
      %p350 = scmp.ne.s32.totalorder %s333, %s349
      %p351 = scmp.eq.s32.totalorder %s31, 0
      %p352 = por %p350, %p351
      %s354 = sadd.s32 %s353, 1
      %p357 = scmp.eq.s32.totalorder %s25, 1
      %p358 = scmp.ne.s32.totalorder %s353, %s355
      %p359 = scmp.eq.s32.totalorder %s25, 0
      %p360 = por %p358, %p359
      %p361 = scmp.ne.s32.totalorder %s353, %s355
      %p362 = scmp.eq.s32.totalorder %s30, 1
      %p363 = por %p361, %p362
      %p364 = scmp.ne.s32.totalorder %s355, %s356
      %p365 = scmp.eq.s32.totalorder %s30, 0
      %p366 = por %p364, %p365
      %p367 = scmp.ne.s32.totalorder %s355, %s356
      %p368 = scmp.eq.s32.totalorder %s31, 1
      %p369 = por %p367, %p368
      %p371 = scmp.ne.s32.totalorder %s356, %s370
      %p372 = scmp.eq.s32.totalorder %s31, 0
      %p373 = por %p371, %p372
      %s374 = ssub.s32 %s33, %s40
      %p375 = scmp.eq.s32.totalorder %s374, 0
      %s377 = sadd.s32 %s376, 1
      %s378 = scalar_select %p375, %s376, %s377
      %p381 = pneg %p375
      %p382 = scmp.eq.s32.totalorder %s25, 1
      %p383 = por %p381, %p382
      %p384 = scmp.ne.s32.totalorder %s376, %s379
      %p385 = scmp.eq.s32.totalorder %s25, 0
      %p386 = por %p384, %p385
      %p387 = scmp.ne.s32.totalorder %s376, %s379
      %p388 = scmp.eq.s32.totalorder %s30, 1
      %p389 = por %p387, %p388
      %p390 = scmp.ne.s32.totalorder %s379, %s380
      %p391 = scmp.eq.s32.totalorder %s30, 0
      %p392 = por %p390, %p391
      %p393 = scmp.ne.s32.totalorder %s379, %s380
      %p394 = scmp.eq.s32.totalorder %s31, 1
      %p395 = por %p393, %p394
      %p397 = scmp.ne.s32.totalorder %s380, %s396
      %p398 = scmp.eq.s32.totalorder %s31, 0
      %p399 = por %p397, %p398
      %s401 = sadd.s32 %s400, 1
      %p404 = scmp.eq.s32.totalorder %s25, 1
      %p405 = scmp.ne.s32.totalorder %s400, %s402
      %p406 = scmp.eq.s32.totalorder %s25, 0
      %p407 = por %p405, %p406
      %p408 = scmp.ne.s32.totalorder %s400, %s402
      %p409 = scmp.eq.s32.totalorder %s30, 1
      %p410 = por %p408, %p409
      %p411 = scmp.ne.s32.totalorder %s402, %s403
      %p412 = scmp.eq.s32.totalorder %s30, 0
      %p413 = por %p411, %p412
      %p414 = scmp.ne.s32.totalorder %s402, %s403
      %p415 = scmp.eq.s32.totalorder %s31, 1
      %p416 = por %p414, %p415
      %p418 = scmp.ne.s32.totalorder %s403, %s417
      %p419 = scmp.eq.s32.totalorder %s31, 0
      %p420 = por %p418, %p419
      %s422 = sadd.s32 %s421, 1
      %p425 = scmp.eq.s32.totalorder %s25, 1
      %p426 = scmp.ne.s32.totalorder %s421, %s423
      %p427 = scmp.eq.s32.totalorder %s25, 0
      %p428 = por %p426, %p427
      %p429 = scmp.ne.s32.totalorder %s421, %s423
      %p430 = scmp.eq.s32.totalorder %s30, 1
      %p431 = por %p429, %p430
      %p432 = scmp.ne.s32.totalorder %s423, %s424
      %p433 = scmp.eq.s32.totalorder %s30, 0
      %p434 = por %p432, %p433
      %p435 = scmp.ne.s32.totalorder %s423, %s424
      %p436 = scmp.eq.s32.totalorder %s31, 1
      %p437 = por %p435, %p436
      %p439 = scmp.ne.s32.totalorder %s424, %s438
      %p440 = scmp.eq.s32.totalorder %s31, 0
      %p441 = por %p439, %p440
      %s443 = sadd.s32 %s442, 1
      %p446 = scmp.eq.s32.totalorder %s25, 1
      %p447 = scmp.ne.s32.totalorder %s442, %s444
      %p448 = scmp.eq.s32.totalorder %s25, 0
      %p449 = por %p447, %p448
      %p450 = scmp.ne.s32.totalorder %s442, %s444
      %p451 = scmp.eq.s32.totalorder %s30, 1
      %p452 = por %p450, %p451
      %p453 = scmp.ne.s32.totalorder %s444, %s445
      %p454 = scmp.eq.s32.totalorder %s30, 0
      %p455 = por %p453, %p454
      %p456 = scmp.ne.s32.totalorder %s444, %s445
      %p457 = scmp.eq.s32.totalorder %s31, 1
      %p458 = por %p456, %p457
      %p460 = scmp.ne.s32.totalorder %s445, %s459
      %p461 = scmp.eq.s32.totalorder %s31, 0
      %p462 = por %p460, %p461
      %s463 = ssub.s32 %s32, %s44
      %p464 = scmp.eq.s32.totalorder %s463, 0
      %s466 = sadd.s32 %s465, 1
      %s467 = scalar_select %p464, %s465, %s466
      %p470 = pneg %p464
      %p471 = scmp.eq.s32.totalorder %s25, 1
      %p472 = por %p470, %p471
      %p473 = scmp.ne.s32.totalorder %s465, %s468
      %p474 = scmp.eq.s32.totalorder %s25, 0
      %p475 = por %p473, %p474
      %p476 = scmp.ne.s32.totalorder %s465, %s468
      %p477 = scmp.eq.s32.totalorder %s30, 1
      %p478 = por %p476, %p477
      %p479 = scmp.ne.s32.totalorder %s468, %s469
      %p480 = scmp.eq.s32.totalorder %s30, 0
      %p481 = por %p479, %p480
      %p482 = scmp.ne.s32.totalorder %s468, %s469
      %p483 = scmp.eq.s32.totalorder %s31, 1
      %p484 = por %p482, %p483
      %p486 = scmp.ne.s32.totalorder %s469, %s485
      %p487 = scmp.eq.s32.totalorder %s31, 0
      %p488 = por %p486, %p487
      %p489 = scmp.le.s32.totalorder 1, %s25
      %p490 = scmp.lt.s32.totalorder %s25, 3
      %p491 = pnand %p489, %p490
      %p492 = pneg %p491
      // Predicated region
      $region9: #{tpu_custom_call.1} parent=5 // pred_check
        _
      $region10: #{tpu_custom_call.1} parent=5 // pred_check_branch
        %494 = sbr.rel (%p491) target = $region12
      $region11: #{tpu_custom_call.1} parent=5 // pred_region
        %s495 = ssub.s32 %s25, 1
        // Predicated region
        $region13: #{tpu_custom_call.1} parent=11 // pred_check
          %p496 = pneg %p63
        $region14: #{tpu_custom_call.1} parent=11 // pred_check_branch
          %498 = sbr.rel (%p496) target = $region16
        $region15: #{tpu_custom_call.1} parent=11 // pred_region
          %s499 = smul.u32 2, %s34
          %p500 = scmp.lt.s32.totalorder %s499, 1
          %s501 = scalar_select %p500, %s499, 1
          %s502 = scalar_lea.vmem %s0, %s501
          %s503 = smul.u32 2, %s34
        $region16: #{tpu_custom_call.1} parent=11 // pred_fallthru
          _
        // Predicated region
        $region17: #{tpu_custom_call.1} parent=11 // pred_check
          %p504 = pneg %p89
        $region18: #{tpu_custom_call.1} parent=11 // pred_check_branch
          %506 = sbr.rel (%p504) target = $region20
        $region19: #{tpu_custom_call.1} parent=11 // pred_region
          %s507 = smul.u32 2, %s34
          %p508 = scmp.lt.s32.totalorder %s507, 1
          %s509 = scalar_select %p508, %s507, 1
          %s510 = smul.addr %s509, 8
          %s511 = scalar_lea.vmem %s1, %s510
          %s512 = smul.u32 2, %s34
        $region20: #{tpu_custom_call.1} parent=11 // pred_fallthru
          _
        // Predicated region
        $region21: #{tpu_custom_call.1} parent=11 // pred_check
          %p513 = pneg %p110
        $region22: #{tpu_custom_call.1} parent=11 // pred_check_branch
          %515 = sbr.rel (%p513) target = $region24
        $region23: #{tpu_custom_call.1} parent=11 // pred_region
          _
        $region24: #{tpu_custom_call.1} parent=11 // pred_fallthru
          _
        // Predicated region
        $region25: #{tpu_custom_call.1} parent=11 // pred_check
          %p516 = pneg %p131
        $region26: #{tpu_custom_call.1} parent=11 // pred_check_branch
          %518 = sbr.rel (%p516) target = $region28
        $region27: #{tpu_custom_call.1} parent=11 // pred_region
          _
        $region28: #{tpu_custom_call.1} parent=11 // pred_fallthru
          _
        // Predicated region
        $region29: #{tpu_custom_call.1} parent=11 // pred_check
          %p519 = pneg %p152
        $region30: #{tpu_custom_call.1} parent=11 // pred_check_branch
          %521 = sbr.rel (%p519) target = $region32
        $region31: #{tpu_custom_call.1} parent=11 // pred_region
          _
        $region32: #{tpu_custom_call.1} parent=11 // pred_fallthru
          _
        // Predicated region
        $region33: #{tpu_custom_call.1} parent=11 // pred_check
          %p522 = pneg %p173
        $region34: #{tpu_custom_call.1} parent=11 // pred_check_branch
          %524 = sbr.rel (%p522) target = $region36
        $region35: #{tpu_custom_call.1} parent=11 // pred_region
          _
        $region36: #{tpu_custom_call.1} parent=11 // pred_fallthru
          _
        // Predicated region
        $region37: #{tpu_custom_call.1} parent=11 // pred_check
          %p525 = pneg %p298
        $region38: #{tpu_custom_call.1} parent=11 // pred_check_branch
          %527 = sbr.rel (%p525) target = $region40
        $region39: #{tpu_custom_call.1} parent=11 // pred_region
          _
        $region40: #{tpu_custom_call.1} parent=11 // pred_fallthru
          _
        // Predicated region
        $region41: #{tpu_custom_call.1} parent=11 // pred_check
          %p528 = pneg %p319
        $region42: #{tpu_custom_call.1} parent=11 // pred_check_branch
          %530 = sbr.rel (%p528) target = $region44
        $region43: #{tpu_custom_call.1} parent=11 // pred_region
          _
        $region44: #{tpu_custom_call.1} parent=11 // pred_fallthru
          _
        // Predicated region
        $region45: #{tpu_custom_call.1} parent=11 // pred_check
          %p531 = pneg %p366
        $region46: #{tpu_custom_call.1} parent=11 // pred_check_branch
          %533 = sbr.rel (%p531) target = $region48
        $region47: #{tpu_custom_call.1} parent=11 // pred_region
          _
        $region48: #{tpu_custom_call.1} parent=11 // pred_fallthru
          _
        // Predicated region
        $region49: #{tpu_custom_call.1} parent=11 // pred_check
          %p534 = pneg %p413
        $region50: #{tpu_custom_call.1} parent=11 // pred_check_branch
          %536 = sbr.rel (%p534) target = $region52
        $region51: #{tpu_custom_call.1} parent=11 // pred_region
          _
        $region52: #{tpu_custom_call.1} parent=11 // pred_fallthru
          _
        // Predicated region
        $region53: #{tpu_custom_call.1} parent=11 // pred_check
          %p537 = pneg %p434
        $region54: #{tpu_custom_call.1} parent=11 // pred_check_branch
          %539 = sbr.rel (%p537) target = $region56
        $region55: #{tpu_custom_call.1} parent=11 // pred_region
          _
        $region56: #{tpu_custom_call.1} parent=11 // pred_fallthru
          _
        // Predicated region
        $region57: #{tpu_custom_call.1} parent=11 // pred_check
          %p540 = pneg %p455
        $region58: #{tpu_custom_call.1} parent=11 // pred_check_branch
          %542 = sbr.rel (%p540) target = $region60
        $region59: #{tpu_custom_call.1} parent=11 // pred_region
          _
        $region60: #{tpu_custom_call.1} parent=11 // pred_fallthru
          _
      $region12: #{tpu_custom_call.1} parent=5 // pred_fallthru
        _
      %p543 = scmp.lt.s32.totalorder %s25, 2
      // Predicated region
      $region61: #{tpu_custom_call.1} parent=5 // pred_check
        %p544 = pneg %p543
      $region62: #{tpu_custom_call.1} parent=5 // pred_check_branch
        %546 = sbr.rel (%p544) target = $region64
      $region63: #{tpu_custom_call.1} parent=5 // pred_region
        // Predicated region
        $region65: #{tpu_custom_call.1} parent=63 // pred_check
          %p547 = pneg %p193
        $region66: #{tpu_custom_call.1} parent=63 // pred_check_branch
          %549 = sbr.rel (%p547) target = $region68
        $region67: #{tpu_custom_call.1} parent=63 // pred_region
          %p550 = scmp.lt.s32.totalorder %s33, 1
          %s551 = scalar_select %p550, %s33, 1
          %s552 = smul.addr %s551, 16
          %s553 = smul.addr %s552, 4
          %s554 = scalar_lea.vmem %s6, %s553
        $region68: #{tpu_custom_call.1} parent=63 // pred_fallthru
          _
        // Predicated region
        $region69: #{tpu_custom_call.1} parent=63 // pred_check
          %p555 = pneg %p219
        $region70: #{tpu_custom_call.1} parent=63 // pred_check_branch
          %557 = sbr.rel (%p555) target = $region72
        $region71: #{tpu_custom_call.1} parent=63 // pred_region
          %p558 = scmp.lt.s32.totalorder %s33, 1
          %s559 = scalar_select %p558, %s33, 1
          %s560 = smul.addr %s559, 16
          %s561 = smul.addr %s560, 4
          %s562 = scalar_lea.vmem %s7, %s561
        $region72: #{tpu_custom_call.1} parent=63 // pred_fallthru
          _
        // Predicated region
        $region73: #{tpu_custom_call.1} parent=63 // pred_check
          %p563 = pneg %p245
        $region74: #{tpu_custom_call.1} parent=63 // pred_check_branch
          %565 = sbr.rel (%p563) target = $region76
        $region75: #{tpu_custom_call.1} parent=63 // pred_region
          %p566 = scmp.lt.s32.totalorder %s33, 1
          %s567 = scalar_select %p566, %s33, 1
          %s568 = smul.addr %s567, 16
          %s569 = smul.addr %s568, 4
          %s570 = scalar_lea.vmem %s8, %s569
        $region76: #{tpu_custom_call.1} parent=63 // pred_fallthru
          _
        // Predicated region
        $region77: #{tpu_custom_call.1} parent=63 // pred_check
          %p571 = pneg %p271
        $region78: #{tpu_custom_call.1} parent=63 // pred_check_branch
          %573 = sbr.rel (%p571) target = $region80
        $region79: #{tpu_custom_call.1} parent=63 // pred_region
          %p574 = scmp.lt.s32.totalorder %s33, 1
          %s575 = scalar_select %p574, %s33, 1
          %s576 = smul.addr %s575, 4
          %s577 = smul.addr %s576, 4
          %s578 = scalar_lea.vmem %s9, %s577
        $region80: #{tpu_custom_call.1} parent=63 // pred_fallthru
          _
        // Predicated region
        $region81: #{tpu_custom_call.1} parent=63 // pred_check
          %p579 = pneg %p339
        $region82: #{tpu_custom_call.1} parent=63 // pred_check_branch
          %581 = sbr.rel (%p579) target = $region84
        $region83: #{tpu_custom_call.1} parent=63 // pred_region
          %p582 = scmp.lt.s32.totalorder %s33, 1
          %s583 = scalar_select %p582, %s33, 1
          %s584 = smul.addr %s583, 12
          %s585 = smul.addr %s584, 4
          %s586 = scalar_lea.vmem %s12, %s585
        $region84: #{tpu_custom_call.1} parent=63 // pred_fallthru
          _
        // Predicated region
        $region85: #{tpu_custom_call.1} parent=63 // pred_check
          %p587 = pneg %p386
        $region86: #{tpu_custom_call.1} parent=63 // pred_check_branch
          %589 = sbr.rel (%p587) target = $region88
        $region87: #{tpu_custom_call.1} parent=63 // pred_region
          %p590 = scmp.lt.s32.totalorder %s33, 1
          %s591 = scalar_select %p590, %s33, 1
          %s592 = smul.addr %s591, 24
          %s593 = smul.addr %s592, 4
          %s594 = scalar_lea.vmem %s14, %s593
        $region88: #{tpu_custom_call.1} parent=63 // pred_fallthru
          _
      $region64: #{tpu_custom_call.1} parent=5 // pred_fallthru
        _
      %p595 = scmp.le.s32.totalorder 1, %s25
      %p596 = scmp.lt.s32.totalorder %s25, 3
      %p597 = pnand %p595, %p596
      %p598 = pneg %p597
      // Predicated region
      $region89: #{tpu_custom_call.1} parent=5 // pred_check
        _
      $region90: #{tpu_custom_call.1} parent=5 // pred_check_branch
        %600 = sbr.rel (%p597) target = $region92
      $region91: #{tpu_custom_call.1} parent=5 // pred_region
        %s601 = ssub.s32 %s25, 1
        %s602 = smul.u32 2, %s34
        %p603 = scmp.lt.s32.totalorder %s602, 1
        %s604 = scalar_select %p603, %s602, 1
        %s605 = scalar_lea.vmem %s0, %s604
        %p606 = pneg %p63
        %p607 = pneg %p60
        %s608 = smul.u32 2, %s34
        %p609 = scmp.lt.s32.totalorder %s608, 1
        %s610 = scalar_select %p609, %s608, 1
        %s611 = smul.addr %s610, 8
        %s612 = scalar_lea.vmem %s1, %s611
        %p613 = pneg %p89
        %p614 = pneg %p86
        %p615 = pneg %p110
        %p616 = pneg %p107
        %p617 = pneg %p131
        %p618 = pneg %p128
        %p619 = pneg %p152
        %p620 = pneg %p149
        %p621 = pneg %p173
        %p622 = pneg %p170
        %p623 = scmp.lt.s32.totalorder %s35, 1
        %s624 = scalar_select %p623, %s35, 1
        %s625 = smul.addr %s624, 16
        %s626 = smul.addr %s625, 4
        %s627 = scalar_lea.vmem %s6, %s626
        %p628 = pneg %p199
        %p629 = pneg %p196
        %p630 = scmp.lt.s32.totalorder %s35, 1
        %s631 = scalar_select %p630, %s35, 1
        %s632 = smul.addr %s631, 16
        %s633 = smul.addr %s632, 4
        %s634 = scalar_lea.vmem %s7, %s633
        %p635 = pneg %p225
        %p636 = pneg %p222
        %p637 = scmp.lt.s32.totalorder %s35, 1
        %s638 = scalar_select %p637, %s35, 1
        %s639 = smul.addr %s638, 16
        %s640 = smul.addr %s639, 4
        %s641 = scalar_lea.vmem %s8, %s640
        %p642 = pneg %p251
        %p643 = pneg %p248
        %p644 = scmp.lt.s32.totalorder %s35, 1
        %s645 = scalar_select %p644, %s35, 1
        %s646 = smul.addr %s645, 4
        %s647 = smul.addr %s646, 4
        %s648 = scalar_lea.vmem %s9, %s647
        %p649 = pneg %p277
        %p650 = pneg %p274
        %p651 = pneg %p298
        %p652 = pneg %p295
        %p653 = pneg %p319
        %p654 = pneg %p316
        %p655 = scmp.lt.s32.totalorder %s35, 1
        %s656 = scalar_select %p655, %s35, 1
        %s657 = smul.addr %s656, 12
        %s658 = smul.addr %s657, 4
        %s659 = scalar_lea.vmem %s12, %s658
        %p660 = pneg %p345
        %p661 = pneg %p342
        %p662 = pneg %p366
        %p663 = pneg %p363
        %p664 = scmp.lt.s32.totalorder %s35, 1
        %s665 = scalar_select %p664, %s35, 1
        %s666 = smul.addr %s665, 24
        %s667 = smul.addr %s666, 4
        %s668 = scalar_lea.vmem %s14, %s667
        %p669 = pneg %p392
        %p670 = pneg %p389
        %p671 = pneg %p413
        %p672 = pneg %p410
        %p673 = pneg %p434
        %p674 = pneg %p431
        %p675 = pneg %p455
        %p676 = pneg %p452
        %p677 = pneg %p481
        %p678 = pneg %p478
        %s679 = smul.u32 2, %s34
        %p680 = scmp.lt.s32.totalorder %s679, 1
        %s681 = scalar_select %p680, %s679, 1
        %s682 = scalar_lea.vmem %s0, %s681
        %s683 = smul.u32 2, %s34
        %s684 = smul.u32 2, %s34
        %p685 = scmp.lt.s32.totalorder %s684, 1
        %s686 = scalar_select %p685, %s684, 1
        %s687 = smul.addr %s686, 8
        %s688 = scalar_lea.vmem %s1, %s687
        %s689 = smul.u32 2, %s34
        %p690 = scmp.lt.s32.totalorder %s35, 1
        %s691 = scalar_select %p690, %s35, 1
        %s692 = smul.addr %s691, 16
        %s693 = smul.addr %s692, 4
        %s694 = scalar_lea.vmem %s6, %s693
        %p695 = scmp.lt.s32.totalorder %s35, 1
        %s696 = scalar_select %p695, %s35, 1
        %s697 = smul.addr %s696, 16
        %s698 = smul.addr %s697, 4
        %s699 = scalar_lea.vmem %s7, %s698
        %p700 = scmp.lt.s32.totalorder %s35, 1
        %s701 = scalar_select %p700, %s35, 1
        %s702 = smul.addr %s701, 16
        %s703 = smul.addr %s702, 4
        %s704 = scalar_lea.vmem %s8, %s703
        %p705 = scmp.lt.s32.totalorder %s35, 1
        %s706 = scalar_select %p705, %s35, 1
        %s707 = smul.addr %s706, 4
        %s708 = smul.addr %s707, 4
        %s709 = scalar_lea.vmem %s9, %s708
        %p710 = scmp.lt.s32.totalorder %s35, 1
        %s711 = scalar_select %p710, %s35, 1
        %s712 = smul.addr %s711, 12
        %s713 = smul.addr %s712, 4
        %s714 = scalar_lea.vmem %s12, %s713
        %p715 = scmp.lt.s32.totalorder %s35, 1
        %s716 = scalar_select %p715, %s35, 1
        %s717 = smul.addr %s716, 24
        %s718 = smul.addr %s717, 4
        %s719 = scalar_lea.vmem %s14, %s718
        %s720 = smul.u32 2, %s34
        %p722 = scmp.eq.s32.totalorder %s35, 0
        // Predicated region
        $region93: #{tpu_custom_call.1} parent=91 // pred_check
          %p723 = pneg %p722
        $region94: #{tpu_custom_call.1} parent=91 // pred_check_branch
          %725 = sbr.rel (%p723) target = $region96
        $region95: #{tpu_custom_call.1} parent=91 // pred_region
          %v726 = vld [vmem:[%s688] sm:$0xff]
          %v727 = vld [vmem:[%s688 + $0x8] sm:$0xff]
          %v728 = vpack.c.bf16 %v727, %v726
          %v729 = vld [vmem:[%s3] sm:$0xf]
          %v730 = vld [vmem:[%s3 + $0x4] sm:$0xf]
          %v733 = vunpack.c.l.b16 %v729
          %v734 = vunpack.c.l.b16 %v730
          %v735 = vpack.c.b16 %v734, %v733
          %vm737 = vcmask 130048
          %v739 = vsel %vm737, %v728, 0
          %741 = vmatprep.subr.bf16.mxu0 0
          %742 = vmatpush1.bf16.msra.mxu0 %v735
          %743 = vmatprep.subr.bf16.mxu0 0
          %744 = vmatpush1.bf16.msra.mxu0 0
          %745 = vmatprep.subr.bf16.mxu0 0
          %746 = vmatpush1.bf16.msra.mxu0 0
          %747 = vmatprep.subr.bf16.mxu0 0
          %748 = vmatpush1.bf16.msra.mxu0 0
          %749 = vmatprep.subr.bf16.mxu0 0
          %750 = vmatpush1.bf16.msra.mxu0 0
          %751 = vmatprep.subr.bf16.mxu0 0
          %752 = vmatpush1.bf16.msra.mxu0 0
          %753 = vmatprep.subr.bf16.mxu0 0
          %754 = vmatpush1.bf16.msra.mxu0 0
          %755 = vmatprep.subr.bf16.mxu0 0
          %756 = vmatpush1.bf16.msra.mxu0 0
          %757 = vmatprep.subr.bf16.mxu0 0
          %758 = vmatpush1.bf16.msra.mxu0 0
          %759 = vmatprep.subr.bf16.mxu0 0
          %760 = vmatpush1.bf16.msra.mxu0 0
          %761 = vmatprep.subr.bf16.mxu0 0
          %762 = vmatpush1.bf16.msra.mxu0 0
          %763 = vmatprep.subr.bf16.mxu0 0
          %764 = vmatpush1.bf16.msra.mxu0 0
          %765 = vmatprep.subr.bf16.mxu0 0
          %766 = vmatpush1.bf16.msra.mxu0 0
          %767 = vmatprep.subr.bf16.mxu0 0
          %768 = vmatpush1.bf16.msra.mxu0 0
          %769 = vmatprep.subr.bf16.mxu0 0
          %770 = vmatpush1.bf16.msra.mxu0 0
          %771 = vmatprep.subr.bf16.mxu0 0
          %772 = vmatpush1.bf16.msra.mxu0 0
          %773 = vmatprep.mubr.bf16.mxu0 0
          %774 = vmatmul.mubr.bf16.gmra.mrb[0].mxu0 %v739
          %v775 = vpop.f32.mrb[0].mxu0
          %v776 = vadd.f32 0.0, %v775
          %v777 = vpop.f32.mrb[0].mxu0
          %v778 = vpop.f32.mrb[0].mxu0
          %v779 = vadd.f32 0.0, %v778
          %v780 = vpop.f32.mrb[0].mxu0
          %781 = vdwg.mxu0
          %v782 = vld [vmem:[%s2] sm:$0xff]
          %v783 = vadd.f32 %v776, %v782
          %v784 = vadd.f32 %v779, %v782
          %vm785 = vcmask 261120
          %786 = vst.msk [vmem:[#allocation2] sm:$0xff] %vm785, %v783
          %787 = vst.msk [vmem:[#allocation2 + $0x8] sm:$0xff] %vm785, %v784
        $region96: #{tpu_custom_call.1} parent=91 // pred_fallthru
          _
        %v788 = vld [vmem:[#allocation2] sm:$0xff]
        %v789 = vld [vmem:[#allocation2 + $0x8] sm:$0xff]
        %s790 = scalar_lea.vmem %s4, %s35
        %v791 = vld [vmem:[%s790] sm:$0x1]
        %s792 = scalar_lea.vmem %s5, %s35
        %v793 = vld [vmem:[%s792] sm:$0x1]
        %vm794 = vcmask 261120
        %v795 = vsel %vm794, %v788, 0.0
        %796 = vadd.xlane.f32.xlu0 %v795
        %v797 = vpop.xlane.xlu0 %796
        %v798 = vsel %vm794, %v789, 0.0
        %799 = vadd.xlane.f32.xlu0 %v798
        %v800 = vpop.xlane.xlu0 %799
        %v801 = vrcp.pop 32.0
        %v802 = vmul.f32 %v797, %v801
        %v803 = vmul.f32 %v800, %v801
        %v804 = vsub.f32 %v788, %v802
        %v805 = vsub.f32 %v789, %v803
        %v806 = vmul.f32 %v804, %v804
        %v807 = vmul.f32 %v805, %v805
        %v808 = vsel %vm794, %v806, 0.0
        %809 = vadd.xlane.f32.xlu0 %v808
        %v810 = vpop.xlane.xlu0 %809
        %v811 = vsel %vm794, %v807, 0.0
        %812 = vadd.xlane.f32.xlu0 %v811
        %v813 = vpop.xlane.xlu0 %812
        %v814 = vmul.f32 %v810, 0.032258064
        %v815 = vmul.f32 %v813, 0.032258064
        %v816 = vlaneseq
        %v817 = vshrl.u32 %v816, 7
        %v818 = vsub.s32 0, %v817
        %v819 = vrot.slane %v791, %v818
        %v820 = vmul.f32 %v819, %v804
        %v821 = vmul.f32 %v819, %v805
        %v822 = vrsqrt.pop %v814
        %v823 = vmul.f32 %v814, %v822
        %vm824 = vcmp.eq.f32.partialorder %v814, inf
        %v825 = vsel %vm824, %v814, %v823
        %vm826 = vcmp.eq.f32.partialorder %v814, 0.0
        %v827 = vand.u32 %v814, 2147483648
        %v828 = vsel %vm826, %v827, %v825
        %v829 = vrsqrt.pop %v815
        %v830 = vmul.f32 %v815, %v829
        %vm831 = vcmp.eq.f32.partialorder %v815, inf
        %v832 = vsel %vm831, %v815, %v830
        %vm833 = vcmp.eq.f32.partialorder %v815, 0.0
        %v834 = vand.u32 %v815, 2147483648
        %v835 = vsel %vm833, %v834, %v832
        %v836 = vadd.f32 %v828, 1e-06
        %v837 = vadd.f32 %v835, 1e-06
        %v838 = vrcp.pop %v836
        %v839 = vmul.f32 %v820, %v838
        %v840 = vrcp.pop %v837
        %v841 = vmul.f32 %v821, %v840
        %v842 = vlaneseq
        %v843 = vshrl.u32 %v842, 7
        %v844 = vsub.s32 0, %v843
        %v845 = vrot.slane %v793, %v844
        %v846 = vadd.f32 %v839, %v845
        %v847 = vadd.f32 %v841, %v845
        %v848 = vpack.c.bf16 %v847, %v846
        %v849 = vld [vmem:[%s682] sm:$0x1]
        %v850 = vld [vmem:[%s682 + $0x1] sm:$0x1]
        %v853 = vlaneseq
        %v854 = vshrl.u32 %v853, 7
        %v855 = vsub.s32 0, %v854
        %v856 = vrot.slane %v849, %v855
        %v857 = vlaneseq
        %v858 = vshrl.u32 %v857, 7
        %v859 = vsub.s32 0, %v858
        %v860 = vrot.slane %v850, %v859
        %v863 = vld [vmem:[%s694] sm:$0xf]
        %v864 = vld [vmem:[%s694 + $0x4] sm:$0xf]
        %v865 = vld [vmem:[%s694 + $0x8] sm:$0xf]
        %v866 = vld [vmem:[%s694 + $0xc] sm:$0xf]
        %v871 = vunpack.c.l.b16 %v863
        %v872 = vunpack.c.l.b16 %v864
        %v873 = vunpack.c.l.b16 %v865
        %v874 = vunpack.c.l.b16 %v866
        %v875 = vpack.c.b16 %v872, %v871
        %v876 = vpack.c.b16 %v874, %v873
        %v880 = vsel %vm794, %v848, 0
        %882 = vmatprep.subr.bf16.mxu0 0
        %883 = vmatpush1.bf16.msra.mxu0 %v875
        %884 = vmatprep.subr.bf16.mxu0 0
        %885 = vmatpush1.bf16.msra.mxu0 %v876
        %886 = vmatprep.subr.bf16.mxu0 0
        %887 = vmatpush1.bf16.msra.mxu0 0
        %888 = vmatprep.subr.bf16.mxu0 0
        %889 = vmatpush1.bf16.msra.mxu0 0
        %890 = vmatprep.subr.bf16.mxu0 0
        %891 = vmatpush1.bf16.msra.mxu0 0
        %892 = vmatprep.subr.bf16.mxu0 0
        %893 = vmatpush1.bf16.msra.mxu0 0
        %894 = vmatprep.subr.bf16.mxu0 0
        %895 = vmatpush1.bf16.msra.mxu0 0
        %896 = vmatprep.subr.bf16.mxu0 0
        %897 = vmatpush1.bf16.msra.mxu0 0
        %898 = vmatprep.subr.bf16.mxu0 0
        %899 = vmatpush1.bf16.msra.mxu0 0
        %900 = vmatprep.subr.bf16.mxu0 0
        %901 = vmatpush1.bf16.msra.mxu0 0
        %902 = vmatprep.subr.bf16.mxu0 0
        %903 = vmatpush1.bf16.msra.mxu0 0
        %904 = vmatprep.subr.bf16.mxu0 0
        %905 = vmatpush1.bf16.msra.mxu0 0
        %906 = vmatprep.subr.bf16.mxu0 0
        %907 = vmatpush1.bf16.msra.mxu0 0
        %908 = vmatprep.subr.bf16.mxu0 0
        %909 = vmatpush1.bf16.msra.mxu0 0
        %910 = vmatprep.subr.bf16.mxu0 0
        %911 = vmatpush1.bf16.msra.mxu0 0
        %912 = vmatprep.subr.bf16.mxu0 0
        %913 = vmatpush1.bf16.msra.mxu0 0
        %914 = vmatprep.mubr.bf16.mxu0 0
        %915 = vmatmul.mubr.bf16.gmra.mrb[0].mxu0 %v880
        %v916 = vpop.f32.mrb[0].mxu0
        %v917 = vadd.f32 0.0, %v916
        %v918 = vpop.f32.mrb[0].mxu0
        %v919 = vpop.f32.mrb[0].mxu0
        %v920 = vadd.f32 0.0, %v919
        %v921 = vpop.f32.mrb[0].mxu0
        %922 = vdwg.mxu0
        %v923 = vld [vmem:[%s699] sm:$0xf]
        %v924 = vld [vmem:[%s699 + $0x4] sm:$0xf]
        %v925 = vld [vmem:[%s699 + $0x8] sm:$0xf]
        %v926 = vld [vmem:[%s699 + $0xc] sm:$0xf]
        %v931 = vunpack.c.l.b16 %v923
        %v932 = vunpack.c.l.b16 %v924
        %v933 = vunpack.c.l.b16 %v925
        %v934 = vunpack.c.l.b16 %v926
        %v935 = vpack.c.b16 %v932, %v931
        %v936 = vpack.c.b16 %v934, %v933
        %939 = vmatprep.subr.bf16.mxu0 0
        %940 = vmatpush1.bf16.msra.mxu0 %v935
        %941 = vmatprep.subr.bf16.mxu0 0
        %942 = vmatpush1.bf16.msra.mxu0 %v936
        %943 = vmatprep.subr.bf16.mxu0 0
        %944 = vmatpush1.bf16.msra.mxu0 0
        %945 = vmatprep.subr.bf16.mxu0 0
        %946 = vmatpush1.bf16.msra.mxu0 0
        %947 = vmatprep.subr.bf16.mxu0 0
        %948 = vmatpush1.bf16.msra.mxu0 0
        %949 = vmatprep.subr.bf16.mxu0 0
        %950 = vmatpush1.bf16.msra.mxu0 0
        %951 = vmatprep.subr.bf16.mxu0 0
        %952 = vmatpush1.bf16.msra.mxu0 0
        %953 = vmatprep.subr.bf16.mxu0 0
        %954 = vmatpush1.bf16.msra.mxu0 0
        %955 = vmatprep.subr.bf16.mxu0 0
        %956 = vmatpush1.bf16.msra.mxu0 0
        %957 = vmatprep.subr.bf16.mxu0 0
        %958 = vmatpush1.bf16.msra.mxu0 0
        %959 = vmatprep.subr.bf16.mxu0 0
        %960 = vmatpush1.bf16.msra.mxu0 0
        %961 = vmatprep.subr.bf16.mxu0 0
        %962 = vmatpush1.bf16.msra.mxu0 0
        %963 = vmatprep.subr.bf16.mxu0 0
        %964 = vmatpush1.bf16.msra.mxu0 0
        %965 = vmatprep.subr.bf16.mxu0 0
        %966 = vmatpush1.bf16.msra.mxu0 0
        %967 = vmatprep.subr.bf16.mxu0 0
        %968 = vmatpush1.bf16.msra.mxu0 0
        %969 = vmatprep.subr.bf16.mxu0 0
        %970 = vmatpush1.bf16.msra.mxu0 0
        %971 = vmatprep.mubr.bf16.mxu0 0
        %972 = vmatmul.mubr.bf16.gmra.mrb[0].mxu0 %v880
        %v973 = vpop.f32.mrb[0].mxu0
        %v974 = vadd.f32 0.0, %v973
        %v975 = vpop.f32.mrb[0].mxu0
        %v976 = vpop.f32.mrb[0].mxu0
        %v977 = vadd.f32 0.0, %v976
        %v978 = vpop.f32.mrb[0].mxu0
        %979 = vdwg.mxu0
        %v980 = vld [vmem:[%s704] sm:$0xf]
        %v981 = vld [vmem:[%s704 + $0x4] sm:$0xf]
        %v982 = vld [vmem:[%s704 + $0x8] sm:$0xf]
        %v983 = vld [vmem:[%s704 + $0xc] sm:$0xf]
        %v988 = vunpack.c.l.b16 %v980
        %v989 = vunpack.c.l.b16 %v981
        %v990 = vunpack.c.l.b16 %v982
        %v991 = vunpack.c.l.b16 %v983
        %v992 = vpack.c.b16 %v989, %v988
        %v993 = vpack.c.b16 %v991, %v990
        %996 = vmatprep.subr.bf16.mxu0 0
        %997 = vmatpush1.bf16.msra.mxu0 %v992
        %998 = vmatprep.subr.bf16.mxu0 0
        %999 = vmatpush1.bf16.msra.mxu0 %v993
        %1000 = vmatprep.subr.bf16.mxu0 0
        %1001 = vmatpush1.bf16.msra.mxu0 0
        %1002 = vmatprep.subr.bf16.mxu0 0
        %1003 = vmatpush1.bf16.msra.mxu0 0
        %1004 = vmatprep.subr.bf16.mxu0 0
        %1005 = vmatpush1.bf16.msra.mxu0 0
        %1006 = vmatprep.subr.bf16.mxu0 0
        %1007 = vmatpush1.bf16.msra.mxu0 0
        %1008 = vmatprep.subr.bf16.mxu0 0
        %1009 = vmatpush1.bf16.msra.mxu0 0
        %1010 = vmatprep.subr.bf16.mxu0 0
        %1011 = vmatpush1.bf16.msra.mxu0 0
        %1012 = vmatprep.subr.bf16.mxu0 0
        %1013 = vmatpush1.bf16.msra.mxu0 0
        %1014 = vmatprep.subr.bf16.mxu0 0
        %1015 = vmatpush1.bf16.msra.mxu0 0
        %1016 = vmatprep.subr.bf16.mxu0 0
        %1017 = vmatpush1.bf16.msra.mxu0 0
        %1018 = vmatprep.subr.bf16.mxu0 0
        %1019 = vmatpush1.bf16.msra.mxu0 0
        %1020 = vmatprep.subr.bf16.mxu0 0
        %1021 = vmatpush1.bf16.msra.mxu0 0
        %1022 = vmatprep.subr.bf16.mxu0 0
        %1023 = vmatpush1.bf16.msra.mxu0 0
        %1024 = vmatprep.subr.bf16.mxu0 0
        %1025 = vmatpush1.bf16.msra.mxu0 0
        %1026 = vmatprep.subr.bf16.mxu0 0
        %1027 = vmatpush1.bf16.msra.mxu0 0
        %1028 = vmatprep.mubr.bf16.mxu0 0
        %1029 = vmatmul.mubr.bf16.gmra.mrb[0].mxu0 %v880
        %v1030 = vpop.f32.mrb[0].mxu0
        %v1031 = vadd.f32 0.0, %v1030
        %v1032 = vpop.f32.mrb[0].mxu0
        %v1033 = vpop.f32.mrb[0].mxu0
        %v1034 = vadd.f32 0.0, %v1033
        %v1035 = vpop.f32.mrb[0].mxu0
        %1036 = vdwg.mxu0
        %v1037 = vpack.c.bf16 %v917, %v917
        %v1038 = vpack.c.bf16 %v920, %v920
        %v1039 = vpack.c.bf16 %v974, %v974
        %v1040 = vpack.c.bf16 %v977, %v977
        %vm1041 = vcmask 64512
        %v1043 = vsel %vm1041, %v1037, 0
        %v1046 = vsel %vm1041, %v1039, 0
        %1048 = vmatprep.subr.bf16.mxu0 0
        %1049 = vmatpush1.bf16.xpose.msra.mxu0 %v1046
        %1050 = vmatprep.subr.bf16.mxu0 0
        %1051 = vmatpush1.bf16.xpose.msra.mxu0 0
        %1052 = vmatprep.subr.bf16.mxu0 0
        %1053 = vmatpush1.bf16.xpose.msra.mxu0 0
        %1054 = vmatprep.subr.bf16.mxu0 0
        %1055 = vmatpush1.bf16.xpose.msra.mxu0 0
        %1056 = vmatprep.subr.bf16.mxu0 0
        %1057 = vmatpush1.bf16.xpose.msra.mxu0 0
        %1058 = vmatprep.subr.bf16.mxu0 0
        %1059 = vmatpush1.bf16.xpose.msra.mxu0 0
        %1060 = vmatprep.subr.bf16.mxu0 0
        %1061 = vmatpush1.bf16.xpose.msra.mxu0 0
        %1062 = vmatprep.subr.bf16.mxu0 0
        %1063 = vmatpush1.bf16.xpose.msra.mxu0 0
        %1064 = vmatprep.subr.bf16.mxu0 0
        %1065 = vmatpush1.bf16.xpose.msra.mxu0 0
        %1066 = vmatprep.subr.bf16.mxu0 0
        %1067 = vmatpush1.bf16.xpose.msra.mxu0 0
        %1068 = vmatprep.subr.bf16.mxu0 0
        %1069 = vmatpush1.bf16.xpose.msra.mxu0 0
        %1070 = vmatprep.subr.bf16.mxu0 0
        %1071 = vmatpush1.bf16.xpose.msra.mxu0 0
        %1072 = vmatprep.subr.bf16.mxu0 0
        %1073 = vmatpush1.bf16.xpose.msra.mxu0 0
        %1074 = vmatprep.subr.bf16.mxu0 0
        %1075 = vmatpush1.bf16.xpose.msra.mxu0 0
        %1076 = vmatprep.subr.bf16.mxu0 0
        %1077 = vmatpush1.bf16.xpose.msra.mxu0 0
        %1078 = vmatprep.subr.bf16.mxu0 0
        %1079 = vmatpush1.bf16.xpose.msra.mxu0 0
        %1080 = vmatprep.mubr.bf16.mxu0 0
        %1081 = vmatmul.mubr.bf16.gmra.mrb[0].mxu0 %v1043
        %v1082 = vpop.f32.mrb[0].mxu0
        %v1083 = vadd.f32 %v856, %v1082
        %v1084 = vpop.f32.mrb[0].mxu0
        %v1085 = vpop.f32.mrb[0].mxu0
        %v1086 = vpop.f32.mrb[0].mxu0
        %1087 = vdwg.mxu0
        %v1089 = vsel %vm1041, %v1038, 0
        %v1092 = vsel %vm1041, %v1040, 0
        %1094 = vmatprep.subr.bf16.mxu0 0
        %1095 = vmatpush1.bf16.xpose.msra.mxu0 %v1092
        %1096 = vmatprep.subr.bf16.mxu0 0
        %1097 = vmatpush1.bf16.xpose.msra.mxu0 0
        %1098 = vmatprep.subr.bf16.mxu0 0
        %1099 = vmatpush1.bf16.xpose.msra.mxu0 0
        %1100 = vmatprep.subr.bf16.mxu0 0
        %1101 = vmatpush1.bf16.xpose.msra.mxu0 0
        %1102 = vmatprep.subr.bf16.mxu0 0
        %1103 = vmatpush1.bf16.xpose.msra.mxu0 0
        %1104 = vmatprep.subr.bf16.mxu0 0
        %1105 = vmatpush1.bf16.xpose.msra.mxu0 0
        %1106 = vmatprep.subr.bf16.mxu0 0
        %1107 = vmatpush1.bf16.xpose.msra.mxu0 0
        %1108 = vmatprep.subr.bf16.mxu0 0
        %1109 = vmatpush1.bf16.xpose.msra.mxu0 0
        %1110 = vmatprep.subr.bf16.mxu0 0
        %1111 = vmatpush1.bf16.xpose.msra.mxu0 0
        %1112 = vmatprep.subr.bf16.mxu0 0
        %1113 = vmatpush1.bf16.xpose.msra.mxu0 0
        %1114 = vmatprep.subr.bf16.mxu0 0
        %1115 = vmatpush1.bf16.xpose.msra.mxu0 0
        %1116 = vmatprep.subr.bf16.mxu0 0
        %1117 = vmatpush1.bf16.xpose.msra.mxu0 0
        %1118 = vmatprep.subr.bf16.mxu0 0
        %1119 = vmatpush1.bf16.xpose.msra.mxu0 0
        %1120 = vmatprep.subr.bf16.mxu0 0
        %1121 = vmatpush1.bf16.xpose.msra.mxu0 0
        %1122 = vmatprep.subr.bf16.mxu0 0
        %1123 = vmatpush1.bf16.xpose.msra.mxu0 0
        %1124 = vmatprep.subr.bf16.mxu0 0
        %1125 = vmatpush1.bf16.xpose.msra.mxu0 0
        %1126 = vmatprep.mubr.bf16.mxu0 0
        %1127 = vmatmul.mubr.bf16.gmra.mrb[0].mxu0 %v1089
        %v1128 = vpop.f32.mrb[0].mxu0
        %v1129 = vadd.f32 %v860, %v1128
        %v1130 = vpop.f32.mrb[0].mxu0
        %v1131 = vpop.f32.mrb[0].mxu0
        %v1132 = vpop.f32.mrb[0].mxu0
        %1133 = vdwg.mxu0
        %v1134 = vsel %vm1041, %v1083, -inf
        %1135 = vmax.xlane.f32.xlu0 %v1134
        %v1136 = vpop.xlane.xlu0 %1135
        %v1137 = vsel %vm1041, %v1129, -inf
        %1138 = vmax.xlane.f32.xlu0 %v1137
        %v1139 = vpop.xlane.xlu0 %1138
        %v1140 = vsub.f32 %v1083, %v1136
        %v1141 = vsub.f32 %v1129, %v1139
        %v1142 = vmul.f32 %v1140, 1.442695
        %v1143 = vpow.pop %v1142
        %v1144 = vmul.f32 %v1141, 1.442695
        %v1145 = vpow.pop %v1144
        %v1146 = vsel %vm1041, %v1143, 0.0
        %1147 = vadd.xlane.f32.xlu0 %v1146
        %v1148 = vpop.xlane.xlu0 %1147
        %v1149 = vsel %vm1041, %v1145, 0.0
        %1150 = vadd.xlane.f32.xlu0 %v1149
        %v1151 = vpop.xlane.xlu0 %1150
        %v1152 = vrcp.pop %v1148
        %v1153 = vrcp.pop %v1151
        %v1154 = vmul.f32 %v1143, %v1152
        %v1155 = vmul.f32 %v1145, %v1153
        %v1156 = vpack.c.bf16 %v1154, %v1154
        %v1157 = vpack.c.bf16 %v1155, %v1155
        %v1158 = vpack.c.bf16 %v1031, %v1031
        %v1159 = vpack.c.bf16 %v1034, %v1034
        %v1161 = vsel %vm1041, %v1156, 0
        %vm1163 = vcmask 1043456
        %v1165 = vsel %vm1163, %v1158, 0
        %1167 = vmatprep.subr.bf16.mxu0 0
        %1168 = vmatpush1.bf16.msra.mxu0 %v1165
        %1169 = vmatprep.subr.bf16.mxu0 0
        %1170 = vmatpush1.bf16.msra.mxu0 0
        %1171 = vmatprep.subr.bf16.mxu0 0
        %1172 = vmatpush1.bf16.msra.mxu0 0
        %1173 = vmatprep.subr.bf16.mxu0 0
        %1174 = vmatpush1.bf16.msra.mxu0 0
        %1175 = vmatprep.subr.bf16.mxu0 0
        %1176 = vmatpush1.bf16.msra.mxu0 0
        %1177 = vmatprep.subr.bf16.mxu0 0
        %1178 = vmatpush1.bf16.msra.mxu0 0
        %1179 = vmatprep.subr.bf16.mxu0 0
        %1180 = vmatpush1.bf16.msra.mxu0 0
        %1181 = vmatprep.subr.bf16.mxu0 0
        %1182 = vmatpush1.bf16.msra.mxu0 0
        %1183 = vmatprep.subr.bf16.mxu0 0
        %1184 = vmatpush1.bf16.msra.mxu0 0
        %1185 = vmatprep.subr.bf16.mxu0 0
        %1186 = vmatpush1.bf16.msra.mxu0 0
        %1187 = vmatprep.subr.bf16.mxu0 0
        %1188 = vmatpush1.bf16.msra.mxu0 0
        %1189 = vmatprep.subr.bf16.mxu0 0
        %1190 = vmatpush1.bf16.msra.mxu0 0
        %1191 = vmatprep.subr.bf16.mxu0 0
        %1192 = vmatpush1.bf16.msra.mxu0 0
        %1193 = vmatprep.subr.bf16.mxu0 0
        %1194 = vmatpush1.bf16.msra.mxu0 0
        %1195 = vmatprep.subr.bf16.mxu0 0
        %1196 = vmatpush1.bf16.msra.mxu0 0
        %1197 = vmatprep.subr.bf16.mxu0 0
        %1198 = vmatpush1.bf16.msra.mxu0 0
        %1199 = vmatprep.mubr.bf16.mxu0 0
        %1200 = vmatmul.mubr.bf16.gmra.mrb[0].mxu0 %v1161
        %v1201 = vpop.f32.mrb[0].mxu0
        %v1202 = vadd.f32 0.0, %v1201
        %v1203 = vpop.f32.mrb[0].mxu0
        %v1204 = vpop.f32.mrb[0].mxu0
        %v1205 = vpop.f32.mrb[0].mxu0
        %1206 = vdwg.mxu0
        %v1208 = vsel %vm1041, %v1157, 0
        %v1211 = vsel %vm1163, %v1159, 0
        %1213 = vmatprep.subr.bf16.mxu0 0
        %1214 = vmatpush1.bf16.msra.mxu0 %v1211
        %1215 = vmatprep.subr.bf16.mxu0 0
        %1216 = vmatpush1.bf16.msra.mxu0 0
        %1217 = vmatprep.subr.bf16.mxu0 0
        %1218 = vmatpush1.bf16.msra.mxu0 0
        %1219 = vmatprep.subr.bf16.mxu0 0
        %1220 = vmatpush1.bf16.msra.mxu0 0
        %1221 = vmatprep.subr.bf16.mxu0 0
        %1222 = vmatpush1.bf16.msra.mxu0 0
        %1223 = vmatprep.subr.bf16.mxu0 0
        %1224 = vmatpush1.bf16.msra.mxu0 0
        %1225 = vmatprep.subr.bf16.mxu0 0
        %1226 = vmatpush1.bf16.msra.mxu0 0
        %1227 = vmatprep.subr.bf16.mxu0 0
        %1228 = vmatpush1.bf16.msra.mxu0 0
        %1229 = vmatprep.subr.bf16.mxu0 0
        %1230 = vmatpush1.bf16.msra.mxu0 0
        %1231 = vmatprep.subr.bf16.mxu0 0
        %1232 = vmatpush1.bf16.msra.mxu0 0
        %1233 = vmatprep.subr.bf16.mxu0 0
        %1234 = vmatpush1.bf16.msra.mxu0 0
        %1235 = vmatprep.subr.bf16.mxu0 0
        %1236 = vmatpush1.bf16.msra.mxu0 0
        %1237 = vmatprep.subr.bf16.mxu0 0
        %1238 = vmatpush1.bf16.msra.mxu0 0
        %1239 = vmatprep.subr.bf16.mxu0 0
        %1240 = vmatpush1.bf16.msra.mxu0 0
        %1241 = vmatprep.subr.bf16.mxu0 0
        %1242 = vmatpush1.bf16.msra.mxu0 0
        %1243 = vmatprep.subr.bf16.mxu0 0
        %1244 = vmatpush1.bf16.msra.mxu0 0
        %1245 = vmatprep.mubr.bf16.mxu0 0
        %1246 = vmatmul.mubr.bf16.gmra.mrb[0].mxu0 %v1208
        %v1247 = vpop.f32.mrb[0].mxu0
        %v1248 = vadd.f32 0.0, %v1247
        %v1249 = vpop.f32.mrb[0].mxu0
        %v1250 = vpop.f32.mrb[0].mxu0
        %v1251 = vpop.f32.mrb[0].mxu0
        %1252 = vdwg.mxu0
        %v1253 = vpack.c.bf16 %v1248, %v1202
        %v1254 = vld [vmem:[%s709] sm:$0xf]
        %s1255 = scalar_lea.vmem %s694, 16
        %v1256 = vld [vmem:[%s1255] sm:$0xf]
        %v1257 = vld [vmem:[%s1255 + $0x4] sm:$0xf]
        %v1258 = vld [vmem:[%s1255 + $0x8] sm:$0xf]
        %v1259 = vld [vmem:[%s1255 + $0xc] sm:$0xf]
        %v1264 = vunpack.c.l.b16 %v1256
        %v1265 = vunpack.c.l.b16 %v1257
        %v1266 = vunpack.c.l.b16 %v1258
        %v1267 = vunpack.c.l.b16 %v1259
        %v1268 = vpack.c.b16 %v1265, %v1264
        %v1269 = vpack.c.b16 %v1267, %v1266
        %1272 = vmatprep.subr.bf16.mxu0 0
        %1273 = vmatpush1.bf16.msra.mxu0 %v1268
        %1274 = vmatprep.subr.bf16.mxu0 0
        %1275 = vmatpush1.bf16.msra.mxu0 %v1269
        %1276 = vmatprep.subr.bf16.mxu0 0
        %1277 = vmatpush1.bf16.msra.mxu0 0
        %1278 = vmatprep.subr.bf16.mxu0 0
        %1279 = vmatpush1.bf16.msra.mxu0 0
        %1280 = vmatprep.subr.bf16.mxu0 0
        %1281 = vmatpush1.bf16.msra.mxu0 0
        %1282 = vmatprep.subr.bf16.mxu0 0
        %1283 = vmatpush1.bf16.msra.mxu0 0
        %1284 = vmatprep.subr.bf16.mxu0 0
        %1285 = vmatpush1.bf16.msra.mxu0 0
        %1286 = vmatprep.subr.bf16.mxu0 0
        %1287 = vmatpush1.bf16.msra.mxu0 0
        %1288 = vmatprep.subr.bf16.mxu0 0
        %1289 = vmatpush1.bf16.msra.mxu0 0
        %1290 = vmatprep.subr.bf16.mxu0 0
        %1291 = vmatpush1.bf16.msra.mxu0 0
        %1292 = vmatprep.subr.bf16.mxu0 0
        %1293 = vmatpush1.bf16.msra.mxu0 0
        %1294 = vmatprep.subr.bf16.mxu0 0
        %1295 = vmatpush1.bf16.msra.mxu0 0
        %1296 = vmatprep.subr.bf16.mxu0 0
        %1297 = vmatpush1.bf16.msra.mxu0 0
        %1298 = vmatprep.subr.bf16.mxu0 0
        %1299 = vmatpush1.bf16.msra.mxu0 0
        %1300 = vmatprep.subr.bf16.mxu0 0
        %1301 = vmatpush1.bf16.msra.mxu0 0
        %1302 = vmatprep.subr.bf16.mxu0 0
        %1303 = vmatpush1.bf16.msra.mxu0 0
        %1304 = vmatprep.mubr.bf16.mxu0 0
        %1305 = vmatmul.mubr.bf16.gmra.mrb[0].mxu0 %v880
        %v1306 = vpop.f32.mrb[0].mxu0
        %v1307 = vadd.f32 0.0, %v1306
        %v1308 = vpop.f32.mrb[0].mxu0
        %v1309 = vpop.f32.mrb[0].mxu0
        %v1310 = vadd.f32 0.0, %v1309
        %v1311 = vpop.f32.mrb[0].mxu0
        %1312 = vdwg.mxu0
        %s1313 = scalar_lea.vmem %s699, 16
        %v1314 = vld [vmem:[%s1313] sm:$0xf]
        %v1315 = vld [vmem:[%s1313 + $0x4] sm:$0xf]
        %v1316 = vld [vmem:[%s1313 + $0x8] sm:$0xf]
        %v1317 = vld [vmem:[%s1313 + $0xc] sm:$0xf]
        %v1322 = vunpack.c.l.b16 %v1314
        %v1323 = vunpack.c.l.b16 %v1315
        %v1324 = vunpack.c.l.b16 %v1316
        %v1325 = vunpack.c.l.b16 %v1317
        %v1326 = vpack.c.b16 %v1323, %v1322
        %v1327 = vpack.c.b16 %v1325, %v1324
        %1330 = vmatprep.subr.bf16.mxu0 0
        %1331 = vmatpush1.bf16.msra.mxu0 %v1326
        %1332 = vmatprep.subr.bf16.mxu0 0
        %1333 = vmatpush1.bf16.msra.mxu0 %v1327
        %1334 = vmatprep.subr.bf16.mxu0 0
        %1335 = vmatpush1.bf16.msra.mxu0 0
        %1336 = vmatprep.subr.bf16.mxu0 0
        %1337 = vmatpush1.bf16.msra.mxu0 0
        %1338 = vmatprep.subr.bf16.mxu0 0
        %1339 = vmatpush1.bf16.msra.mxu0 0
        %1340 = vmatprep.subr.bf16.mxu0 0
        %1341 = vmatpush1.bf16.msra.mxu0 0
        %1342 = vmatprep.subr.bf16.mxu0 0
        %1343 = vmatpush1.bf16.msra.mxu0 0
        %1344 = vmatprep.subr.bf16.mxu0 0
        %1345 = vmatpush1.bf16.msra.mxu0 0
        %1346 = vmatprep.subr.bf16.mxu0 0
        %1347 = vmatpush1.bf16.msra.mxu0 0
        %1348 = vmatprep.subr.bf16.mxu0 0
        %1349 = vmatpush1.bf16.msra.mxu0 0
        %1350 = vmatprep.subr.bf16.mxu0 0
        %1351 = vmatpush1.bf16.msra.mxu0 0
        %1352 = vmatprep.subr.bf16.mxu0 0
        %1353 = vmatpush1.bf16.msra.mxu0 0
        %1354 = vmatprep.subr.bf16.mxu0 0
        %1355 = vmatpush1.bf16.msra.mxu0 0
        %1356 = vmatprep.subr.bf16.mxu0 0
        %1357 = vmatpush1.bf16.msra.mxu0 0
        %1358 = vmatprep.subr.bf16.mxu0 0
        %1359 = vmatpush1.bf16.msra.mxu0 0
        %1360 = vmatprep.subr.bf16.mxu0 0
        %1361 = vmatpush1.bf16.msra.mxu0 0
        %1362 = vmatprep.mubr.bf16.mxu0 0
        %1363 = vmatmul.mubr.bf16.gmra.mrb[0].mxu0 %v880
        %v1364 = vpop.f32.mrb[0].mxu0
        %v1365 = vadd.f32 0.0, %v1364
        %v1366 = vpop.f32.mrb[0].mxu0
        %v1367 = vpop.f32.mrb[0].mxu0
        %v1368 = vadd.f32 0.0, %v1367
        %v1369 = vpop.f32.mrb[0].mxu0
        %1370 = vdwg.mxu0
        %s1371 = scalar_lea.vmem %s704, 16
        %v1372 = vld [vmem:[%s1371] sm:$0xf]
        %v1373 = vld [vmem:[%s1371 + $0x4] sm:$0xf]
        %v1374 = vld [vmem:[%s1371 + $0x8] sm:$0xf]
        %v1375 = vld [vmem:[%s1371 + $0xc] sm:$0xf]
        %v1380 = vunpack.c.l.b16 %v1372
        %v1381 = vunpack.c.l.b16 %v1373
        %v1382 = vunpack.c.l.b16 %v1374
        %v1383 = vunpack.c.l.b16 %v1375
        %v1384 = vpack.c.b16 %v1381, %v1380
        %v1385 = vpack.c.b16 %v1383, %v1382
        %1388 = vmatprep.subr.bf16.mxu0 0
        %1389 = vmatpush1.bf16.msra.mxu0 %v1384
        %1390 = vmatprep.subr.bf16.mxu0 0
        %1391 = vmatpush1.bf16.msra.mxu0 %v1385
        %1392 = vmatprep.subr.bf16.mxu0 0
        %1393 = vmatpush1.bf16.msra.mxu0 0
        %1394 = vmatprep.subr.bf16.mxu0 0
        %1395 = vmatpush1.bf16.msra.mxu0 0
        %1396 = vmatprep.subr.bf16.mxu0 0
        %1397 = vmatpush1.bf16.msra.mxu0 0
        %1398 = vmatprep.subr.bf16.mxu0 0
        %1399 = vmatpush1.bf16.msra.mxu0 0
        %1400 = vmatprep.subr.bf16.mxu0 0
        %1401 = vmatpush1.bf16.msra.mxu0 0
        %1402 = vmatprep.subr.bf16.mxu0 0
        %1403 = vmatpush1.bf16.msra.mxu0 0
        %1404 = vmatprep.subr.bf16.mxu0 0
        %1405 = vmatpush1.bf16.msra.mxu0 0
        %1406 = vmatprep.subr.bf16.mxu0 0
        %1407 = vmatpush1.bf16.msra.mxu0 0
        %1408 = vmatprep.subr.bf16.mxu0 0
        %1409 = vmatpush1.bf16.msra.mxu0 0
        %1410 = vmatprep.subr.bf16.mxu0 0
        %1411 = vmatpush1.bf16.msra.mxu0 0
        %1412 = vmatprep.subr.bf16.mxu0 0
        %1413 = vmatpush1.bf16.msra.mxu0 0
        %1414 = vmatprep.subr.bf16.mxu0 0
        %1415 = vmatpush1.bf16.msra.mxu0 0
        %1416 = vmatprep.subr.bf16.mxu0 0
        %1417 = vmatpush1.bf16.msra.mxu0 0
        %1418 = vmatprep.subr.bf16.mxu0 0
        %1419 = vmatpush1.bf16.msra.mxu0 0
        %1420 = vmatprep.mubr.bf16.mxu0 0
        %1421 = vmatmul.mubr.bf16.gmra.mrb[0].mxu0 %v880
        %v1422 = vpop.f32.mrb[0].mxu0
        %v1423 = vadd.f32 0.0, %v1422
        %v1424 = vpop.f32.mrb[0].mxu0
        %v1425 = vpop.f32.mrb[0].mxu0
        %v1426 = vadd.f32 0.0, %v1425
        %v1427 = vpop.f32.mrb[0].mxu0
        %1428 = vdwg.mxu0
        %v1429 = vpack.c.bf16 %v1307, %v1307
        %v1430 = vpack.c.bf16 %v1310, %v1310
        %v1431 = vpack.c.bf16 %v1365, %v1365
        %v1432 = vpack.c.bf16 %v1368, %v1368
        %v1434 = vsel %vm1041, %v1429, 0
        %v1437 = vsel %vm1041, %v1431, 0
        %1439 = vmatprep.subr.bf16.mxu0 0
        %1440 = vmatpush1.bf16.xpose.msra.mxu0 %v1437
        %1441 = vmatprep.subr.bf16.mxu0 0
        %1442 = vmatpush1.bf16.xpose.msra.mxu0 0
        %1443 = vmatprep.subr.bf16.mxu0 0
        %1444 = vmatpush1.bf16.xpose.msra.mxu0 0
        %1445 = vmatprep.subr.bf16.mxu0 0
        %1446 = vmatpush1.bf16.xpose.msra.mxu0 0
        %1447 = vmatprep.subr.bf16.mxu0 0
        %1448 = vmatpush1.bf16.xpose.msra.mxu0 0
        %1449 = vmatprep.subr.bf16.mxu0 0
        %1450 = vmatpush1.bf16.xpose.msra.mxu0 0
        %1451 = vmatprep.subr.bf16.mxu0 0
        %1452 = vmatpush1.bf16.xpose.msra.mxu0 0
        %1453 = vmatprep.subr.bf16.mxu0 0
        %1454 = vmatpush1.bf16.xpose.msra.mxu0 0
        %1455 = vmatprep.subr.bf16.mxu0 0
        %1456 = vmatpush1.bf16.xpose.msra.mxu0 0
        %1457 = vmatprep.subr.bf16.mxu0 0
        %1458 = vmatpush1.bf16.xpose.msra.mxu0 0
        %1459 = vmatprep.subr.bf16.mxu0 0
        %1460 = vmatpush1.bf16.xpose.msra.mxu0 0
        %1461 = vmatprep.subr.bf16.mxu0 0
        %1462 = vmatpush1.bf16.xpose.msra.mxu0 0
        %1463 = vmatprep.subr.bf16.mxu0 0
        %1464 = vmatpush1.bf16.xpose.msra.mxu0 0
        %1465 = vmatprep.subr.bf16.mxu0 0
        %1466 = vmatpush1.bf16.xpose.msra.mxu0 0
        %1467 = vmatprep.subr.bf16.mxu0 0
        %1468 = vmatpush1.bf16.xpose.msra.mxu0 0
        %1469 = vmatprep.subr.bf16.mxu0 0
        %1470 = vmatpush1.bf16.xpose.msra.mxu0 0
        %1471 = vmatprep.mubr.bf16.mxu0 0
        %1472 = vmatmul.mubr.bf16.gmra.mrb[0].mxu0 %v1434
        %v1473 = vpop.f32.mrb[0].mxu0
        %v1474 = vadd.f32 %v856, %v1473
        %v1475 = vpop.f32.mrb[0].mxu0
        %v1476 = vpop.f32.mrb[0].mxu0
        %v1477 = vpop.f32.mrb[0].mxu0
        %1478 = vdwg.mxu0
        %v1480 = vsel %vm1041, %v1430, 0
        %v1483 = vsel %vm1041, %v1432, 0
        %1485 = vmatprep.subr.bf16.mxu0 0
        %1486 = vmatpush1.bf16.xpose.msra.mxu0 %v1483
        %1487 = vmatprep.subr.bf16.mxu0 0
        %1488 = vmatpush1.bf16.xpose.msra.mxu0 0
        %1489 = vmatprep.subr.bf16.mxu0 0
        %1490 = vmatpush1.bf16.xpose.msra.mxu0 0
        %1491 = vmatprep.subr.bf16.mxu0 0
        %1492 = vmatpush1.bf16.xpose.msra.mxu0 0
        %1493 = vmatprep.subr.bf16.mxu0 0
        %1494 = vmatpush1.bf16.xpose.msra.mxu0 0
        %1495 = vmatprep.subr.bf16.mxu0 0
        %1496 = vmatpush1.bf16.xpose.msra.mxu0 0
        %1497 = vmatprep.subr.bf16.mxu0 0
        %1498 = vmatpush1.bf16.xpose.msra.mxu0 0
        %1499 = vmatprep.subr.bf16.mxu0 0
        %1500 = vmatpush1.bf16.xpose.msra.mxu0 0
        %1501 = vmatprep.subr.bf16.mxu0 0
        %1502 = vmatpush1.bf16.xpose.msra.mxu0 0
        %1503 = vmatprep.subr.bf16.mxu0 0
        %1504 = vmatpush1.bf16.xpose.msra.mxu0 0
        %1505 = vmatprep.subr.bf16.mxu0 0
        %1506 = vmatpush1.bf16.xpose.msra.mxu0 0
        %1507 = vmatprep.subr.bf16.mxu0 0
        %1508 = vmatpush1.bf16.xpose.msra.mxu0 0
        %1509 = vmatprep.subr.bf16.mxu0 0
        %1510 = vmatpush1.bf16.xpose.msra.mxu0 0
        %1511 = vmatprep.subr.bf16.mxu0 0
        %1512 = vmatpush1.bf16.xpose.msra.mxu0 0
        %1513 = vmatprep.subr.bf16.mxu0 0
        %1514 = vmatpush1.bf16.xpose.msra.mxu0 0
        %1515 = vmatprep.subr.bf16.mxu0 0
        %1516 = vmatpush1.bf16.xpose.msra.mxu0 0
        %1517 = vmatprep.mubr.bf16.mxu0 0
        %1518 = vmatmul.mubr.bf16.gmra.mrb[0].mxu0 %v1480
        %v1519 = vpop.f32.mrb[0].mxu0
        %v1520 = vadd.f32 %v860, %v1519
        %v1521 = vpop.f32.mrb[0].mxu0
        %v1522 = vpop.f32.mrb[0].mxu0
        %v1523 = vpop.f32.mrb[0].mxu0
        %1524 = vdwg.mxu0
        %v1525 = vsel %vm1041, %v1474, -inf
        %1526 = vmax.xlane.f32.xlu0 %v1525
        %v1527 = vpop.xlane.xlu0 %1526
        %v1528 = vsel %vm1041, %v1520, -inf
        %1529 = vmax.xlane.f32.xlu0 %v1528
        %v1530 = vpop.xlane.xlu0 %1529
        %v1531 = vsub.f32 %v1474, %v1527
        %v1532 = vsub.f32 %v1520, %v1530
        %v1533 = vmul.f32 %v1531, 1.442695
        %v1534 = vpow.pop %v1533
        %v1535 = vmul.f32 %v1532, 1.442695
        %v1536 = vpow.pop %v1535
        %v1537 = vsel %vm1041, %v1534, 0.0
        %1538 = vadd.xlane.f32.xlu0 %v1537
        %v1539 = vpop.xlane.xlu0 %1538
        %v1540 = vsel %vm1041, %v1536, 0.0
        %1541 = vadd.xlane.f32.xlu0 %v1540
        %v1542 = vpop.xlane.xlu0 %1541
        %v1543 = vrcp.pop %v1539
        %v1544 = vrcp.pop %v1542
        %v1545 = vmul.f32 %v1534, %v1543
        %v1546 = vmul.f32 %v1536, %v1544
        %v1547 = vpack.c.bf16 %v1545, %v1545
        %v1548 = vpack.c.bf16 %v1546, %v1546
        %v1549 = vpack.c.bf16 %v1423, %v1423
        %v1550 = vpack.c.bf16 %v1426, %v1426
        %v1552 = vsel %vm1041, %v1547, 0
        %v1555 = vsel %vm1163, %v1549, 0
        %1557 = vmatprep.subr.bf16.mxu0 0
        %1558 = vmatpush1.bf16.msra.mxu0 %v1555
        %1559 = vmatprep.subr.bf16.mxu0 0
        %1560 = vmatpush1.bf16.msra.mxu0 0
        %1561 = vmatprep.subr.bf16.mxu0 0
        %1562 = vmatpush1.bf16.msra.mxu0 0
        %1563 = vmatprep.subr.bf16.mxu0 0
        %1564 = vmatpush1.bf16.msra.mxu0 0
        %1565 = vmatprep.subr.bf16.mxu0 0
        %1566 = vmatpush1.bf16.msra.mxu0 0
        %1567 = vmatprep.subr.bf16.mxu0 0
        %1568 = vmatpush1.bf16.msra.mxu0 0
        %1569 = vmatprep.subr.bf16.mxu0 0
        %1570 = vmatpush1.bf16.msra.mxu0 0
        %1571 = vmatprep.subr.bf16.mxu0 0
        %1572 = vmatpush1.bf16.msra.mxu0 0
        %1573 = vmatprep.subr.bf16.mxu0 0
        %1574 = vmatpush1.bf16.msra.mxu0 0
        %1575 = vmatprep.subr.bf16.mxu0 0
        %1576 = vmatpush1.bf16.msra.mxu0 0
        %1577 = vmatprep.subr.bf16.mxu0 0
        %1578 = vmatpush1.bf16.msra.mxu0 0
        %1579 = vmatprep.subr.bf16.mxu0 0
        %1580 = vmatpush1.bf16.msra.mxu0 0
        %1581 = vmatprep.subr.bf16.mxu0 0
        %1582 = vmatpush1.bf16.msra.mxu0 0
        %1583 = vmatprep.subr.bf16.mxu0 0
        %1584 = vmatpush1.bf16.msra.mxu0 0
        %1585 = vmatprep.subr.bf16.mxu0 0
        %1586 = vmatpush1.bf16.msra.mxu0 0
        %1587 = vmatprep.subr.bf16.mxu0 0
        %1588 = vmatpush1.bf16.msra.mxu0 0
        %1589 = vmatprep.mubr.bf16.mxu0 0
        %1590 = vmatmul.mubr.bf16.gmra.mrb[0].mxu0 %v1552
        %v1591 = vpop.f32.mrb[0].mxu0
        %v1592 = vadd.f32 0.0, %v1591
        %v1593 = vpop.f32.mrb[0].mxu0
        %v1594 = vpop.f32.mrb[0].mxu0
        %v1595 = vpop.f32.mrb[0].mxu0
        %1596 = vdwg.mxu0
        %v1598 = vsel %vm1041, %v1548, 0
        %v1601 = vsel %vm1163, %v1550, 0
        %1603 = vmatprep.subr.bf16.mxu0 0
        %1604 = vmatpush1.bf16.msra.mxu0 %v1601
        %1605 = vmatprep.subr.bf16.mxu0 0
        %1606 = vmatpush1.bf16.msra.mxu0 0
        %1607 = vmatprep.subr.bf16.mxu0 0
        %1608 = vmatpush1.bf16.msra.mxu0 0
        %1609 = vmatprep.subr.bf16.mxu0 0
        %1610 = vmatpush1.bf16.msra.mxu0 0
        %1611 = vmatprep.subr.bf16.mxu0 0
        %1612 = vmatpush1.bf16.msra.mxu0 0
        %1613 = vmatprep.subr.bf16.mxu0 0
        %1614 = vmatpush1.bf16.msra.mxu0 0
        %1615 = vmatprep.subr.bf16.mxu0 0
        %1616 = vmatpush1.bf16.msra.mxu0 0
        %1617 = vmatprep.subr.bf16.mxu0 0
        %1618 = vmatpush1.bf16.msra.mxu0 0
        %1619 = vmatprep.subr.bf16.mxu0 0
        %1620 = vmatpush1.bf16.msra.mxu0 0
        %1621 = vmatprep.subr.bf16.mxu0 0
        %1622 = vmatpush1.bf16.msra.mxu0 0
        %1623 = vmatprep.subr.bf16.mxu0 0
        %1624 = vmatpush1.bf16.msra.mxu0 0
        %1625 = vmatprep.subr.bf16.mxu0 0
        %1626 = vmatpush1.bf16.msra.mxu0 0
        %1627 = vmatprep.subr.bf16.mxu0 0
        %1628 = vmatpush1.bf16.msra.mxu0 0
        %1629 = vmatprep.subr.bf16.mxu0 0
        %1630 = vmatpush1.bf16.msra.mxu0 0
        %1631 = vmatprep.subr.bf16.mxu0 0
        %1632 = vmatpush1.bf16.msra.mxu0 0
        %1633 = vmatprep.subr.bf16.mxu0 0
        %1634 = vmatpush1.bf16.msra.mxu0 0
        %1635 = vmatprep.mubr.bf16.mxu0 0
        %1636 = vmatmul.mubr.bf16.gmra.mrb[0].mxu0 %v1598
        %v1637 = vpop.f32.mrb[0].mxu0
        %v1638 = vadd.f32 0.0, %v1637
        %v1639 = vpop.f32.mrb[0].mxu0
        %v1640 = vpop.f32.mrb[0].mxu0
        %v1641 = vpop.f32.mrb[0].mxu0
        %1642 = vdwg.mxu0
        %v1643 = vpack.c.bf16 %v1638, %v1592
        %s1644 = scalar_lea.vmem %s709, 4
        %v1645 = vld [vmem:[%s1644] sm:$0xf]
        %v1647 = vsel %vm1041, %v1643, 0
        %v1650 = vsel %vm1163, %v1645, 0
        %1652 = vmatprep.subr.bf16.mxu0 0
        %1653 = vmatpush1.bf16.msra.mxu0 %v1650
        %1654 = vmatprep.subr.bf16.mxu0 0
        %1655 = vmatpush1.bf16.msra.mxu0 0
        %1656 = vmatprep.subr.bf16.mxu0 0
        %1657 = vmatpush1.bf16.msra.mxu0 0
        %1658 = vmatprep.subr.bf16.mxu0 0
        %1659 = vmatpush1.bf16.msra.mxu0 0
        %1660 = vmatprep.subr.bf16.mxu0 0
        %1661 = vmatpush1.bf16.msra.mxu0 0
        %1662 = vmatprep.subr.bf16.mxu0 0
        %1663 = vmatpush1.bf16.msra.mxu0 0
        %1664 = vmatprep.subr.bf16.mxu0 0
        %1665 = vmatpush1.bf16.msra.mxu0 0
        %1666 = vmatprep.subr.bf16.mxu0 0
        %1667 = vmatpush1.bf16.msra.mxu0 0
        %1668 = vmatprep.subr.bf16.mxu0 0
        %1669 = vmatpush1.bf16.msra.mxu0 0
        %1670 = vmatprep.subr.bf16.mxu0 0
        %1671 = vmatpush1.bf16.msra.mxu0 0
        %1672 = vmatprep.subr.bf16.mxu0 0
        %1673 = vmatpush1.bf16.msra.mxu0 0
        %1674 = vmatprep.subr.bf16.mxu0 0
        %1675 = vmatpush1.bf16.msra.mxu0 0
        %1676 = vmatprep.subr.bf16.mxu0 0
        %1677 = vmatpush1.bf16.msra.mxu0 0
        %1678 = vmatprep.subr.bf16.mxu0 0
        %1679 = vmatpush1.bf16.msra.mxu0 0
        %1680 = vmatprep.subr.bf16.mxu0 0
        %1681 = vmatpush1.bf16.msra.mxu0 0
        %1682 = vmatprep.subr.bf16.mxu0 0
        %1683 = vmatpush1.bf16.msra.mxu0 0
        %1684 = vmatprep.mubr.bf16.mxu0 0
        %1685 = vmatmul.mubr.bf16.gmra.mrb[0].mxu0 %v1647
        %v1686 = vpop.f32.mrb[0].mxu0
        %v1687 = vadd.f32 0.0, %v1686
        %v1688 = vpop.f32.mrb[0].mxu0
        %v1689 = vpop.f32.mrb[0].mxu0
        %v1690 = vadd.f32 0.0, %v1689
        %v1691 = vpop.f32.mrb[0].mxu0
        %1692 = vdwg.mxu0
        %v1694 = vsel %vm1041, %v1253, 0
        %v1697 = vsel %vm1163, %v1254, 0
        %1699 = vmatprep.subr.bf16.mxu0 0
        %1700 = vmatpush1.bf16.msra.mxu0 %v1697
        %1701 = vmatprep.subr.bf16.mxu0 0
        %1702 = vmatpush1.bf16.msra.mxu0 0
        %1703 = vmatprep.subr.bf16.mxu0 0
        %1704 = vmatpush1.bf16.msra.mxu0 0
        %1705 = vmatprep.subr.bf16.mxu0 0
        %1706 = vmatpush1.bf16.msra.mxu0 0
        %1707 = vmatprep.subr.bf16.mxu0 0
        %1708 = vmatpush1.bf16.msra.mxu0 0
        %1709 = vmatprep.subr.bf16.mxu0 0
        %1710 = vmatpush1.bf16.msra.mxu0 0
        %1711 = vmatprep.subr.bf16.mxu0 0
        %1712 = vmatpush1.bf16.msra.mxu0 0
        %1713 = vmatprep.subr.bf16.mxu0 0
        %1714 = vmatpush1.bf16.msra.mxu0 0
        %1715 = vmatprep.subr.bf16.mxu0 0
        %1716 = vmatpush1.bf16.msra.mxu0 0
        %1717 = vmatprep.subr.bf16.mxu0 0
        %1718 = vmatpush1.bf16.msra.mxu0 0
        %1719 = vmatprep.subr.bf16.mxu0 0
        %1720 = vmatpush1.bf16.msra.mxu0 0
        %1721 = vmatprep.subr.bf16.mxu0 0
        %1722 = vmatpush1.bf16.msra.mxu0 0
        %1723 = vmatprep.subr.bf16.mxu0 0
        %1724 = vmatpush1.bf16.msra.mxu0 0
        %1725 = vmatprep.subr.bf16.mxu0 0
        %1726 = vmatpush1.bf16.msra.mxu0 0
        %1727 = vmatprep.subr.bf16.mxu0 0
        %1728 = vmatpush1.bf16.msra.mxu0 0
        %1729 = vmatprep.subr.bf16.mxu0 0
        %1730 = vmatpush1.bf16.msra.mxu0 0
        %1731 = vmatprep.mubr.bf16.mxu0 0
        %1732 = vmatmul.mubr.bf16.gmra.mrb[0].mxu0 %v1694
        %v1733 = vpop.f32.mrb[0].mxu0
        %v1734 = vadd.f32 %v1687, %v1733
        %v1735 = vpop.f32.mrb[0].mxu0
        %v1736 = vpop.f32.mrb[0].mxu0
        %v1737 = vadd.f32 %v1690, %v1736
        %v1738 = vpop.f32.mrb[0].mxu0
        %1739 = vdwg.mxu0
        %s1740 = scalar_lea.vmem %s694, 32
        %v1741 = vld [vmem:[%s1740] sm:$0xf]
        %v1742 = vld [vmem:[%s1740 + $0x4] sm:$0xf]
        %v1743 = vld [vmem:[%s1740 + $0x8] sm:$0xf]
        %v1744 = vld [vmem:[%s1740 + $0xc] sm:$0xf]
        %v1749 = vunpack.c.l.b16 %v1741
        %v1750 = vunpack.c.l.b16 %v1742
        %v1751 = vunpack.c.l.b16 %v1743
        %v1752 = vunpack.c.l.b16 %v1744
        %v1753 = vpack.c.b16 %v1750, %v1749
        %v1754 = vpack.c.b16 %v1752, %v1751
        %1757 = vmatprep.subr.bf16.mxu0 0
        %1758 = vmatpush1.bf16.msra.mxu0 %v1753
        %1759 = vmatprep.subr.bf16.mxu0 0
        %1760 = vmatpush1.bf16.msra.mxu0 %v1754
        %1761 = vmatprep.subr.bf16.mxu0 0
        %1762 = vmatpush1.bf16.msra.mxu0 0
        %1763 = vmatprep.subr.bf16.mxu0 0
        %1764 = vmatpush1.bf16.msra.mxu0 0
        %1765 = vmatprep.subr.bf16.mxu0 0
        %1766 = vmatpush1.bf16.msra.mxu0 0
        %1767 = vmatprep.subr.bf16.mxu0 0
        %1768 = vmatpush1.bf16.msra.mxu0 0
        %1769 = vmatprep.subr.bf16.mxu0 0
        %1770 = vmatpush1.bf16.msra.mxu0 0
        %1771 = vmatprep.subr.bf16.mxu0 0
        %1772 = vmatpush1.bf16.msra.mxu0 0
        %1773 = vmatprep.subr.bf16.mxu0 0
        %1774 = vmatpush1.bf16.msra.mxu0 0
        %1775 = vmatprep.subr.bf16.mxu0 0
        %1776 = vmatpush1.bf16.msra.mxu0 0
        %1777 = vmatprep.subr.bf16.mxu0 0
        %1778 = vmatpush1.bf16.msra.mxu0 0
        %1779 = vmatprep.subr.bf16.mxu0 0
        %1780 = vmatpush1.bf16.msra.mxu0 0
        %1781 = vmatprep.subr.bf16.mxu0 0
        %1782 = vmatpush1.bf16.msra.mxu0 0
        %1783 = vmatprep.subr.bf16.mxu0 0
        %1784 = vmatpush1.bf16.msra.mxu0 0
        %1785 = vmatprep.subr.bf16.mxu0 0
        %1786 = vmatpush1.bf16.msra.mxu0 0
        %1787 = vmatprep.subr.bf16.mxu0 0
        %1788 = vmatpush1.bf16.msra.mxu0 0
        %1789 = vmatprep.mubr.bf16.mxu0 0
        %1790 = vmatmul.mubr.bf16.gmra.mrb[0].mxu0 %v880
        %v1791 = vpop.f32.mrb[0].mxu0
        %v1792 = vadd.f32 0.0, %v1791
        %v1793 = vpop.f32.mrb[0].mxu0
        %v1794 = vpop.f32.mrb[0].mxu0
        %v1795 = vadd.f32 0.0, %v1794
        %v1796 = vpop.f32.mrb[0].mxu0
        %1797 = vdwg.mxu0
        %s1798 = scalar_lea.vmem %s699, 32
        %v1799 = vld [vmem:[%s1798] sm:$0xf]
        %v1800 = vld [vmem:[%s1798 + $0x4] sm:$0xf]
        %v1801 = vld [vmem:[%s1798 + $0x8] sm:$0xf]
        %v1802 = vld [vmem:[%s1798 + $0xc] sm:$0xf]
        %v1807 = vunpack.c.l.b16 %v1799
        %v1808 = vunpack.c.l.b16 %v1800
        %v1809 = vunpack.c.l.b16 %v1801
        %v1810 = vunpack.c.l.b16 %v1802
        %v1811 = vpack.c.b16 %v1808, %v1807
        %v1812 = vpack.c.b16 %v1810, %v1809
        %1815 = vmatprep.subr.bf16.mxu0 0
        %1816 = vmatpush1.bf16.msra.mxu0 %v1811
        %1817 = vmatprep.subr.bf16.mxu0 0
        %1818 = vmatpush1.bf16.msra.mxu0 %v1812
        %1819 = vmatprep.subr.bf16.mxu0 0
        %1820 = vmatpush1.bf16.msra.mxu0 0
        %1821 = vmatprep.subr.bf16.mxu0 0
        %1822 = vmatpush1.bf16.msra.mxu0 0
        %1823 = vmatprep.subr.bf16.mxu0 0
        %1824 = vmatpush1.bf16.msra.mxu0 0
        %1825 = vmatprep.subr.bf16.mxu0 0
        %1826 = vmatpush1.bf16.msra.mxu0 0
        %1827 = vmatprep.subr.bf16.mxu0 0
        %1828 = vmatpush1.bf16.msra.mxu0 0
        %1829 = vmatprep.subr.bf16.mxu0 0
        %1830 = vmatpush1.bf16.msra.mxu0 0
        %1831 = vmatprep.subr.bf16.mxu0 0
        %1832 = vmatpush1.bf16.msra.mxu0 0
        %1833 = vmatprep.subr.bf16.mxu0 0
        %1834 = vmatpush1.bf16.msra.mxu0 0
        %1835 = vmatprep.subr.bf16.mxu0 0
        %1836 = vmatpush1.bf16.msra.mxu0 0
        %1837 = vmatprep.subr.bf16.mxu0 0
        %1838 = vmatpush1.bf16.msra.mxu0 0
        %1839 = vmatprep.subr.bf16.mxu0 0
        %1840 = vmatpush1.bf16.msra.mxu0 0
        %1841 = vmatprep.subr.bf16.mxu0 0
        %1842 = vmatpush1.bf16.msra.mxu0 0
        %1843 = vmatprep.subr.bf16.mxu0 0
        %1844 = vmatpush1.bf16.msra.mxu0 0
        %1845 = vmatprep.subr.bf16.mxu0 0
        %1846 = vmatpush1.bf16.msra.mxu0 0
        %1847 = vmatprep.mubr.bf16.mxu0 0
        %1848 = vmatmul.mubr.bf16.gmra.mrb[0].mxu0 %v880
        %v1849 = vpop.f32.mrb[0].mxu0
        %v1850 = vadd.f32 0.0, %v1849
        %v1851 = vpop.f32.mrb[0].mxu0
        %v1852 = vpop.f32.mrb[0].mxu0
        %v1853 = vadd.f32 0.0, %v1852
        %v1854 = vpop.f32.mrb[0].mxu0
        %1855 = vdwg.mxu0
        %s1856 = scalar_lea.vmem %s704, 32
        %v1857 = vld [vmem:[%s1856] sm:$0xf]
        %v1858 = vld [vmem:[%s1856 + $0x4] sm:$0xf]
        %v1859 = vld [vmem:[%s1856 + $0x8] sm:$0xf]
        %v1860 = vld [vmem:[%s1856 + $0xc] sm:$0xf]
        %v1865 = vunpack.c.l.b16 %v1857
        %v1866 = vunpack.c.l.b16 %v1858
        %v1867 = vunpack.c.l.b16 %v1859
        %v1868 = vunpack.c.l.b16 %v1860
        %v1869 = vpack.c.b16 %v1866, %v1865
        %v1870 = vpack.c.b16 %v1868, %v1867
        %1873 = vmatprep.subr.bf16.mxu0 0
        %1874 = vmatpush1.bf16.msra.mxu0 %v1869
        %1875 = vmatprep.subr.bf16.mxu0 0
        %1876 = vmatpush1.bf16.msra.mxu0 %v1870
        %1877 = vmatprep.subr.bf16.mxu0 0
        %1878 = vmatpush1.bf16.msra.mxu0 0
        %1879 = vmatprep.subr.bf16.mxu0 0
        %1880 = vmatpush1.bf16.msra.mxu0 0
        %1881 = vmatprep.subr.bf16.mxu0 0
        %1882 = vmatpush1.bf16.msra.mxu0 0
        %1883 = vmatprep.subr.bf16.mxu0 0
        %1884 = vmatpush1.bf16.msra.mxu0 0
        %1885 = vmatprep.subr.bf16.mxu0 0
        %1886 = vmatpush1.bf16.msra.mxu0 0
        %1887 = vmatprep.subr.bf16.mxu0 0
        %1888 = vmatpush1.bf16.msra.mxu0 0
        %1889 = vmatprep.subr.bf16.mxu0 0
        %1890 = vmatpush1.bf16.msra.mxu0 0
        %1891 = vmatprep.subr.bf16.mxu0 0
        %1892 = vmatpush1.bf16.msra.mxu0 0
        %1893 = vmatprep.subr.bf16.mxu0 0
        %1894 = vmatpush1.bf16.msra.mxu0 0
        %1895 = vmatprep.subr.bf16.mxu0 0
        %1896 = vmatpush1.bf16.msra.mxu0 0
        %1897 = vmatprep.subr.bf16.mxu0 0
        %1898 = vmatpush1.bf16.msra.mxu0 0
        %1899 = vmatprep.subr.bf16.mxu0 0
        %1900 = vmatpush1.bf16.msra.mxu0 0
        %1901 = vmatprep.subr.bf16.mxu0 0
        %1902 = vmatpush1.bf16.msra.mxu0 0
        %1903 = vmatprep.subr.bf16.mxu0 0
        %1904 = vmatpush1.bf16.msra.mxu0 0
        %1905 = vmatprep.mubr.bf16.mxu0 0
        %1906 = vmatmul.mubr.bf16.gmra.mrb[0].mxu0 %v880
        %v1907 = vpop.f32.mrb[0].mxu0
        %v1908 = vadd.f32 0.0, %v1907
        %v1909 = vpop.f32.mrb[0].mxu0
        %v1910 = vpop.f32.mrb[0].mxu0
        %v1911 = vadd.f32 0.0, %v1910
        %v1912 = vpop.f32.mrb[0].mxu0
        %1913 = vdwg.mxu0
        %v1914 = vpack.c.bf16 %v1792, %v1792
        %v1915 = vpack.c.bf16 %v1795, %v1795
        %v1916 = vpack.c.bf16 %v1850, %v1850
        %v1917 = vpack.c.bf16 %v1853, %v1853
        %v1919 = vsel %vm1041, %v1914, 0
        %v1922 = vsel %vm1041, %v1916, 0
        %1924 = vmatprep.subr.bf16.mxu0 0
        %1925 = vmatpush1.bf16.xpose.msra.mxu0 %v1922
        %1926 = vmatprep.subr.bf16.mxu0 0
        %1927 = vmatpush1.bf16.xpose.msra.mxu0 0
        %1928 = vmatprep.subr.bf16.mxu0 0
        %1929 = vmatpush1.bf16.xpose.msra.mxu0 0
        %1930 = vmatprep.subr.bf16.mxu0 0
        %1931 = vmatpush1.bf16.xpose.msra.mxu0 0
        %1932 = vmatprep.subr.bf16.mxu0 0
        %1933 = vmatpush1.bf16.xpose.msra.mxu0 0
        %1934 = vmatprep.subr.bf16.mxu0 0
        %1935 = vmatpush1.bf16.xpose.msra.mxu0 0
        %1936 = vmatprep.subr.bf16.mxu0 0
        %1937 = vmatpush1.bf16.xpose.msra.mxu0 0
        %1938 = vmatprep.subr.bf16.mxu0 0
        %1939 = vmatpush1.bf16.xpose.msra.mxu0 0
        %1940 = vmatprep.subr.bf16.mxu0 0
        %1941 = vmatpush1.bf16.xpose.msra.mxu0 0
        %1942 = vmatprep.subr.bf16.mxu0 0
        %1943 = vmatpush1.bf16.xpose.msra.mxu0 0
        %1944 = vmatprep.subr.bf16.mxu0 0
        %1945 = vmatpush1.bf16.xpose.msra.mxu0 0
        %1946 = vmatprep.subr.bf16.mxu0 0
        %1947 = vmatpush1.bf16.xpose.msra.mxu0 0
        %1948 = vmatprep.subr.bf16.mxu0 0
        %1949 = vmatpush1.bf16.xpose.msra.mxu0 0
        %1950 = vmatprep.subr.bf16.mxu0 0
        %1951 = vmatpush1.bf16.xpose.msra.mxu0 0
        %1952 = vmatprep.subr.bf16.mxu0 0
        %1953 = vmatpush1.bf16.xpose.msra.mxu0 0
        %1954 = vmatprep.subr.bf16.mxu0 0
        %1955 = vmatpush1.bf16.xpose.msra.mxu0 0
        %1956 = vmatprep.mubr.bf16.mxu0 0
        %1957 = vmatmul.mubr.bf16.gmra.mrb[0].mxu0 %v1919
        %v1958 = vpop.f32.mrb[0].mxu0
        %v1959 = vadd.f32 %v856, %v1958
        %v1960 = vpop.f32.mrb[0].mxu0
        %v1961 = vpop.f32.mrb[0].mxu0
        %v1962 = vpop.f32.mrb[0].mxu0
        %1963 = vdwg.mxu0
        %v1965 = vsel %vm1041, %v1915, 0
        %v1968 = vsel %vm1041, %v1917, 0
        %1970 = vmatprep.subr.bf16.mxu0 0
        %1971 = vmatpush1.bf16.xpose.msra.mxu0 %v1968
        %1972 = vmatprep.subr.bf16.mxu0 0
        %1973 = vmatpush1.bf16.xpose.msra.mxu0 0
        %1974 = vmatprep.subr.bf16.mxu0 0
        %1975 = vmatpush1.bf16.xpose.msra.mxu0 0
        %1976 = vmatprep.subr.bf16.mxu0 0
        %1977 = vmatpush1.bf16.xpose.msra.mxu0 0
        %1978 = vmatprep.subr.bf16.mxu0 0
        %1979 = vmatpush1.bf16.xpose.msra.mxu0 0
        %1980 = vmatprep.subr.bf16.mxu0 0
        %1981 = vmatpush1.bf16.xpose.msra.mxu0 0
        %1982 = vmatprep.subr.bf16.mxu0 0
        %1983 = vmatpush1.bf16.xpose.msra.mxu0 0
        %1984 = vmatprep.subr.bf16.mxu0 0
        %1985 = vmatpush1.bf16.xpose.msra.mxu0 0
        %1986 = vmatprep.subr.bf16.mxu0 0
        %1987 = vmatpush1.bf16.xpose.msra.mxu0 0
        %1988 = vmatprep.subr.bf16.mxu0 0
        %1989 = vmatpush1.bf16.xpose.msra.mxu0 0
        %1990 = vmatprep.subr.bf16.mxu0 0
        %1991 = vmatpush1.bf16.xpose.msra.mxu0 0
        %1992 = vmatprep.subr.bf16.mxu0 0
        %1993 = vmatpush1.bf16.xpose.msra.mxu0 0
        %1994 = vmatprep.subr.bf16.mxu0 0
        %1995 = vmatpush1.bf16.xpose.msra.mxu0 0
        %1996 = vmatprep.subr.bf16.mxu0 0
        %1997 = vmatpush1.bf16.xpose.msra.mxu0 0
        %1998 = vmatprep.subr.bf16.mxu0 0
        %1999 = vmatpush1.bf16.xpose.msra.mxu0 0
        %2000 = vmatprep.subr.bf16.mxu0 0
        %2001 = vmatpush1.bf16.xpose.msra.mxu0 0
        %2002 = vmatprep.mubr.bf16.mxu0 0
        %2003 = vmatmul.mubr.bf16.gmra.mrb[0].mxu0 %v1965
        %v2004 = vpop.f32.mrb[0].mxu0
        %v2005 = vadd.f32 %v860, %v2004
        %v2006 = vpop.f32.mrb[0].mxu0
        %v2007 = vpop.f32.mrb[0].mxu0
        %v2008 = vpop.f32.mrb[0].mxu0
        %2009 = vdwg.mxu0
        %v2010 = vsel %vm1041, %v1959, -inf
        %2011 = vmax.xlane.f32.xlu0 %v2010
        %v2012 = vpop.xlane.xlu0 %2011
        %v2013 = vsel %vm1041, %v2005, -inf
        %2014 = vmax.xlane.f32.xlu0 %v2013
        %v2015 = vpop.xlane.xlu0 %2014
        %v2016 = vsub.f32 %v1959, %v2012
        %v2017 = vsub.f32 %v2005, %v2015
        %v2018 = vmul.f32 %v2016, 1.442695
        %v2019 = vpow.pop %v2018
        %v2020 = vmul.f32 %v2017, 1.442695
        %v2021 = vpow.pop %v2020
        %v2022 = vsel %vm1041, %v2019, 0.0
        %2023 = vadd.xlane.f32.xlu0 %v2022
        %v2024 = vpop.xlane.xlu0 %2023
        %v2025 = vsel %vm1041, %v2021, 0.0
        %2026 = vadd.xlane.f32.xlu0 %v2025
        %v2027 = vpop.xlane.xlu0 %2026
        %v2028 = vrcp.pop %v2024
        %v2029 = vrcp.pop %v2027
        %v2030 = vmul.f32 %v2019, %v2028
        %v2031 = vmul.f32 %v2021, %v2029
        %v2032 = vpack.c.bf16 %v2030, %v2030
        %v2033 = vpack.c.bf16 %v2031, %v2031
        %v2034 = vpack.c.bf16 %v1908, %v1908
        %v2035 = vpack.c.bf16 %v1911, %v1911
        %v2037 = vsel %vm1041, %v2032, 0
        %v2040 = vsel %vm1163, %v2034, 0
        %2042 = vmatprep.subr.bf16.mxu0 0
        %2043 = vmatpush1.bf16.msra.mxu0 %v2040
        %2044 = vmatprep.subr.bf16.mxu0 0
        %2045 = vmatpush1.bf16.msra.mxu0 0
        %2046 = vmatprep.subr.bf16.mxu0 0
        %2047 = vmatpush1.bf16.msra.mxu0 0
        %2048 = vmatprep.subr.bf16.mxu0 0
        %2049 = vmatpush1.bf16.msra.mxu0 0
        %2050 = vmatprep.subr.bf16.mxu0 0
        %2051 = vmatpush1.bf16.msra.mxu0 0
        %2052 = vmatprep.subr.bf16.mxu0 0
        %2053 = vmatpush1.bf16.msra.mxu0 0
        %2054 = vmatprep.subr.bf16.mxu0 0
        %2055 = vmatpush1.bf16.msra.mxu0 0
        %2056 = vmatprep.subr.bf16.mxu0 0
        %2057 = vmatpush1.bf16.msra.mxu0 0
        %2058 = vmatprep.subr.bf16.mxu0 0
        %2059 = vmatpush1.bf16.msra.mxu0 0
        %2060 = vmatprep.subr.bf16.mxu0 0
        %2061 = vmatpush1.bf16.msra.mxu0 0
        %2062 = vmatprep.subr.bf16.mxu0 0
        %2063 = vmatpush1.bf16.msra.mxu0 0
        %2064 = vmatprep.subr.bf16.mxu0 0
        %2065 = vmatpush1.bf16.msra.mxu0 0
        %2066 = vmatprep.subr.bf16.mxu0 0
        %2067 = vmatpush1.bf16.msra.mxu0 0
        %2068 = vmatprep.subr.bf16.mxu0 0
        %2069 = vmatpush1.bf16.msra.mxu0 0
        %2070 = vmatprep.subr.bf16.mxu0 0
        %2071 = vmatpush1.bf16.msra.mxu0 0
        %2072 = vmatprep.subr.bf16.mxu0 0
        %2073 = vmatpush1.bf16.msra.mxu0 0
        %2074 = vmatprep.mubr.bf16.mxu0 0
        %2075 = vmatmul.mubr.bf16.gmra.mrb[0].mxu0 %v2037
        %v2076 = vpop.f32.mrb[0].mxu0
        %v2077 = vadd.f32 0.0, %v2076
        %v2078 = vpop.f32.mrb[0].mxu0
        %v2079 = vpop.f32.mrb[0].mxu0
        %v2080 = vpop.f32.mrb[0].mxu0
        %2081 = vdwg.mxu0
        %v2083 = vsel %vm1041, %v2033, 0
        %v2086 = vsel %vm1163, %v2035, 0
        %2088 = vmatprep.subr.bf16.mxu0 0
        %2089 = vmatpush1.bf16.msra.mxu0 %v2086
        %2090 = vmatprep.subr.bf16.mxu0 0
        %2091 = vmatpush1.bf16.msra.mxu0 0
        %2092 = vmatprep.subr.bf16.mxu0 0
        %2093 = vmatpush1.bf16.msra.mxu0 0
        %2094 = vmatprep.subr.bf16.mxu0 0
        %2095 = vmatpush1.bf16.msra.mxu0 0
        %2096 = vmatprep.subr.bf16.mxu0 0
        %2097 = vmatpush1.bf16.msra.mxu0 0
        %2098 = vmatprep.subr.bf16.mxu0 0
        %2099 = vmatpush1.bf16.msra.mxu0 0
        %2100 = vmatprep.subr.bf16.mxu0 0
        %2101 = vmatpush1.bf16.msra.mxu0 0
        %2102 = vmatprep.subr.bf16.mxu0 0
        %2103 = vmatpush1.bf16.msra.mxu0 0
        %2104 = vmatprep.subr.bf16.mxu0 0
        %2105 = vmatpush1.bf16.msra.mxu0 0
        %2106 = vmatprep.subr.bf16.mxu0 0
        %2107 = vmatpush1.bf16.msra.mxu0 0
        %2108 = vmatprep.subr.bf16.mxu0 0
        %2109 = vmatpush1.bf16.msra.mxu0 0
        %2110 = vmatprep.subr.bf16.mxu0 0
        %2111 = vmatpush1.bf16.msra.mxu0 0
        %2112 = vmatprep.subr.bf16.mxu0 0
        %2113 = vmatpush1.bf16.msra.mxu0 0
        %2114 = vmatprep.subr.bf16.mxu0 0
        %2115 = vmatpush1.bf16.msra.mxu0 0
        %2116 = vmatprep.subr.bf16.mxu0 0
        %2117 = vmatpush1.bf16.msra.mxu0 0
        %2118 = vmatprep.subr.bf16.mxu0 0
        %2119 = vmatpush1.bf16.msra.mxu0 0
        %2120 = vmatprep.mubr.bf16.mxu0 0
        %2121 = vmatmul.mubr.bf16.gmra.mrb[0].mxu0 %v2083
        %v2122 = vpop.f32.mrb[0].mxu0
        %v2123 = vadd.f32 0.0, %v2122
        %v2124 = vpop.f32.mrb[0].mxu0
        %v2125 = vpop.f32.mrb[0].mxu0
        %v2126 = vpop.f32.mrb[0].mxu0
        %2127 = vdwg.mxu0
        %v2128 = vpack.c.bf16 %v2123, %v2077
        %s2129 = scalar_lea.vmem %s709, 8
        %v2130 = vld [vmem:[%s2129] sm:$0xf]
        %v2132 = vsel %vm1041, %v2128, 0
        %v2135 = vsel %vm1163, %v2130, 0
        %2137 = vmatprep.subr.bf16.mxu0 0
        %2138 = vmatpush1.bf16.msra.mxu0 %v2135
        %2139 = vmatprep.subr.bf16.mxu0 0
        %2140 = vmatpush1.bf16.msra.mxu0 0
        %2141 = vmatprep.subr.bf16.mxu0 0
        %2142 = vmatpush1.bf16.msra.mxu0 0
        %2143 = vmatprep.subr.bf16.mxu0 0
        %2144 = vmatpush1.bf16.msra.mxu0 0
        %2145 = vmatprep.subr.bf16.mxu0 0
        %2146 = vmatpush1.bf16.msra.mxu0 0
        %2147 = vmatprep.subr.bf16.mxu0 0
        %2148 = vmatpush1.bf16.msra.mxu0 0
        %2149 = vmatprep.subr.bf16.mxu0 0
        %2150 = vmatpush1.bf16.msra.mxu0 0
        %2151 = vmatprep.subr.bf16.mxu0 0
        %2152 = vmatpush1.bf16.msra.mxu0 0
        %2153 = vmatprep.subr.bf16.mxu0 0
        %2154 = vmatpush1.bf16.msra.mxu0 0
        %2155 = vmatprep.subr.bf16.mxu0 0
        %2156 = vmatpush1.bf16.msra.mxu0 0
        %2157 = vmatprep.subr.bf16.mxu0 0
        %2158 = vmatpush1.bf16.msra.mxu0 0
        %2159 = vmatprep.subr.bf16.mxu0 0
        %2160 = vmatpush1.bf16.msra.mxu0 0
        %2161 = vmatprep.subr.bf16.mxu0 0
        %2162 = vmatpush1.bf16.msra.mxu0 0
        %2163 = vmatprep.subr.bf16.mxu0 0
        %2164 = vmatpush1.bf16.msra.mxu0 0
        %2165 = vmatprep.subr.bf16.mxu0 0
        %2166 = vmatpush1.bf16.msra.mxu0 0
        %2167 = vmatprep.subr.bf16.mxu0 0
        %2168 = vmatpush1.bf16.msra.mxu0 0
        %2169 = vmatprep.mubr.bf16.mxu0 0
        %2170 = vmatmul.mubr.bf16.gmra.mrb[0].mxu0 %v2132
        %v2171 = vpop.f32.mrb[0].mxu0
        %v2172 = vadd.f32 0.0, %v2171
        %v2173 = vpop.f32.mrb[0].mxu0
        %v2174 = vpop.f32.mrb[0].mxu0
        %v2175 = vadd.f32 0.0, %v2174
        %v2176 = vpop.f32.mrb[0].mxu0
        %2177 = vdwg.mxu0
        %v2178 = vadd.f32 %v1734, %v2172
        %v2179 = vadd.f32 %v1737, %v2175
        %s2180 = scalar_lea.vmem %s694, 48
        %v2181 = vld [vmem:[%s2180] sm:$0xf]
        %v2182 = vld [vmem:[%s2180 + $0x4] sm:$0xf]
        %v2183 = vld [vmem:[%s2180 + $0x8] sm:$0xf]
        %v2184 = vld [vmem:[%s2180 + $0xc] sm:$0xf]
        %v2189 = vunpack.c.l.b16 %v2181
        %v2190 = vunpack.c.l.b16 %v2182
        %v2191 = vunpack.c.l.b16 %v2183
        %v2192 = vunpack.c.l.b16 %v2184
        %v2193 = vpack.c.b16 %v2190, %v2189
        %v2194 = vpack.c.b16 %v2192, %v2191
        %2197 = vmatprep.subr.bf16.mxu0 0
        %2198 = vmatpush1.bf16.msra.mxu0 %v2193
        %2199 = vmatprep.subr.bf16.mxu0 0
        %2200 = vmatpush1.bf16.msra.mxu0 %v2194
        %2201 = vmatprep.subr.bf16.mxu0 0
        %2202 = vmatpush1.bf16.msra.mxu0 0
        %2203 = vmatprep.subr.bf16.mxu0 0
        %2204 = vmatpush1.bf16.msra.mxu0 0
        %2205 = vmatprep.subr.bf16.mxu0 0
        %2206 = vmatpush1.bf16.msra.mxu0 0
        %2207 = vmatprep.subr.bf16.mxu0 0
        %2208 = vmatpush1.bf16.msra.mxu0 0
        %2209 = vmatprep.subr.bf16.mxu0 0
        %2210 = vmatpush1.bf16.msra.mxu0 0
        %2211 = vmatprep.subr.bf16.mxu0 0
        %2212 = vmatpush1.bf16.msra.mxu0 0
        %2213 = vmatprep.subr.bf16.mxu0 0
        %2214 = vmatpush1.bf16.msra.mxu0 0
        %2215 = vmatprep.subr.bf16.mxu0 0
        %2216 = vmatpush1.bf16.msra.mxu0 0
        %2217 = vmatprep.subr.bf16.mxu0 0
        %2218 = vmatpush1.bf16.msra.mxu0 0
        %2219 = vmatprep.subr.bf16.mxu0 0
        %2220 = vmatpush1.bf16.msra.mxu0 0
        %2221 = vmatprep.subr.bf16.mxu0 0
        %2222 = vmatpush1.bf16.msra.mxu0 0
        %2223 = vmatprep.subr.bf16.mxu0 0
        %2224 = vmatpush1.bf16.msra.mxu0 0
        %2225 = vmatprep.subr.bf16.mxu0 0
        %2226 = vmatpush1.bf16.msra.mxu0 0
        %2227 = vmatprep.subr.bf16.mxu0 0
        %2228 = vmatpush1.bf16.msra.mxu0 0
        %2229 = vmatprep.mubr.bf16.mxu0 0
        %2230 = vmatmul.mubr.bf16.gmra.mrb[0].mxu0 %v880
        %v2231 = vpop.f32.mrb[0].mxu0
        %v2232 = vadd.f32 0.0, %v2231
        %v2233 = vpop.f32.mrb[0].mxu0
        %v2234 = vpop.f32.mrb[0].mxu0
        %v2235 = vadd.f32 0.0, %v2234
        %v2236 = vpop.f32.mrb[0].mxu0
        %2237 = vdwg.mxu0
        %s2238 = scalar_lea.vmem %s699, 48
        %v2239 = vld [vmem:[%s2238] sm:$0xf]
        %v2240 = vld [vmem:[%s2238 + $0x4] sm:$0xf]
        %v2241 = vld [vmem:[%s2238 + $0x8] sm:$0xf]
        %v2242 = vld [vmem:[%s2238 + $0xc] sm:$0xf]
        %v2247 = vunpack.c.l.b16 %v2239
        %v2248 = vunpack.c.l.b16 %v2240
        %v2249 = vunpack.c.l.b16 %v2241
        %v2250 = vunpack.c.l.b16 %v2242
        %v2251 = vpack.c.b16 %v2248, %v2247
        %v2252 = vpack.c.b16 %v2250, %v2249
        %2255 = vmatprep.subr.bf16.mxu0 0
        %2256 = vmatpush1.bf16.msra.mxu0 %v2251
        %2257 = vmatprep.subr.bf16.mxu0 0
        %2258 = vmatpush1.bf16.msra.mxu0 %v2252
        %2259 = vmatprep.subr.bf16.mxu0 0
        %2260 = vmatpush1.bf16.msra.mxu0 0
        %2261 = vmatprep.subr.bf16.mxu0 0
        %2262 = vmatpush1.bf16.msra.mxu0 0
        %2263 = vmatprep.subr.bf16.mxu0 0
        %2264 = vmatpush1.bf16.msra.mxu0 0
        %2265 = vmatprep.subr.bf16.mxu0 0
        %2266 = vmatpush1.bf16.msra.mxu0 0
        %2267 = vmatprep.subr.bf16.mxu0 0
        %2268 = vmatpush1.bf16.msra.mxu0 0
        %2269 = vmatprep.subr.bf16.mxu0 0
        %2270 = vmatpush1.bf16.msra.mxu0 0
        %2271 = vmatprep.subr.bf16.mxu0 0
        %2272 = vmatpush1.bf16.msra.mxu0 0
        %2273 = vmatprep.subr.bf16.mxu0 0
        %2274 = vmatpush1.bf16.msra.mxu0 0
        %2275 = vmatprep.subr.bf16.mxu0 0
        %2276 = vmatpush1.bf16.msra.mxu0 0
        %2277 = vmatprep.subr.bf16.mxu0 0
        %2278 = vmatpush1.bf16.msra.mxu0 0
        %2279 = vmatprep.subr.bf16.mxu0 0
        %2280 = vmatpush1.bf16.msra.mxu0 0
        %2281 = vmatprep.subr.bf16.mxu0 0
        %2282 = vmatpush1.bf16.msra.mxu0 0
        %2283 = vmatprep.subr.bf16.mxu0 0
        %2284 = vmatpush1.bf16.msra.mxu0 0
        %2285 = vmatprep.subr.bf16.mxu0 0
        %2286 = vmatpush1.bf16.msra.mxu0 0
        %2287 = vmatprep.mubr.bf16.mxu0 0
        %2288 = vmatmul.mubr.bf16.gmra.mrb[0].mxu0 %v880
        %v2289 = vpop.f32.mrb[0].mxu0
        %v2290 = vadd.f32 0.0, %v2289
        %v2291 = vpop.f32.mrb[0].mxu0
        %v2292 = vpop.f32.mrb[0].mxu0
        %v2293 = vadd.f32 0.0, %v2292
        %v2294 = vpop.f32.mrb[0].mxu0
        %2295 = vdwg.mxu0
        %s2296 = scalar_lea.vmem %s704, 48
        %v2297 = vld [vmem:[%s2296] sm:$0xf]
        %v2298 = vld [vmem:[%s2296 + $0x4] sm:$0xf]
        %v2299 = vld [vmem:[%s2296 + $0x8] sm:$0xf]
        %v2300 = vld [vmem:[%s2296 + $0xc] sm:$0xf]
        %v2305 = vunpack.c.l.b16 %v2297
        %v2306 = vunpack.c.l.b16 %v2298
        %v2307 = vunpack.c.l.b16 %v2299
        %v2308 = vunpack.c.l.b16 %v2300
        %v2309 = vpack.c.b16 %v2306, %v2305
        %v2310 = vpack.c.b16 %v2308, %v2307
        %2313 = vmatprep.subr.bf16.mxu0 0
        %2314 = vmatpush1.bf16.msra.mxu0 %v2309
        %2315 = vmatprep.subr.bf16.mxu0 0
        %2316 = vmatpush1.bf16.msra.mxu0 %v2310
        %2317 = vmatprep.subr.bf16.mxu0 0
        %2318 = vmatpush1.bf16.msra.mxu0 0
        %2319 = vmatprep.subr.bf16.mxu0 0
        %2320 = vmatpush1.bf16.msra.mxu0 0
        %2321 = vmatprep.subr.bf16.mxu0 0
        %2322 = vmatpush1.bf16.msra.mxu0 0
        %2323 = vmatprep.subr.bf16.mxu0 0
        %2324 = vmatpush1.bf16.msra.mxu0 0
        %2325 = vmatprep.subr.bf16.mxu0 0
        %2326 = vmatpush1.bf16.msra.mxu0 0
        %2327 = vmatprep.subr.bf16.mxu0 0
        %2328 = vmatpush1.bf16.msra.mxu0 0
        %2329 = vmatprep.subr.bf16.mxu0 0
        %2330 = vmatpush1.bf16.msra.mxu0 0
        %2331 = vmatprep.subr.bf16.mxu0 0
        %2332 = vmatpush1.bf16.msra.mxu0 0
        %2333 = vmatprep.subr.bf16.mxu0 0
        %2334 = vmatpush1.bf16.msra.mxu0 0
        %2335 = vmatprep.subr.bf16.mxu0 0
        %2336 = vmatpush1.bf16.msra.mxu0 0
        %2337 = vmatprep.subr.bf16.mxu0 0
        %2338 = vmatpush1.bf16.msra.mxu0 0
        %2339 = vmatprep.subr.bf16.mxu0 0
        %2340 = vmatpush1.bf16.msra.mxu0 0
        %2341 = vmatprep.subr.bf16.mxu0 0
        %2342 = vmatpush1.bf16.msra.mxu0 0
        %2343 = vmatprep.subr.bf16.mxu0 0
        %2344 = vmatpush1.bf16.msra.mxu0 0
        %2345 = vmatprep.mubr.bf16.mxu0 0
        %2346 = vmatmul.mubr.bf16.gmra.mrb[0].mxu0 %v880
        %v2347 = vpop.f32.mrb[0].mxu0
        %v2348 = vadd.f32 0.0, %v2347
        %v2349 = vpop.f32.mrb[0].mxu0
        %v2350 = vpop.f32.mrb[0].mxu0
        %v2351 = vadd.f32 0.0, %v2350
        %v2352 = vpop.f32.mrb[0].mxu0
        %2353 = vdwg.mxu0
        %v2354 = vpack.c.bf16 %v2232, %v2232
        %v2355 = vpack.c.bf16 %v2235, %v2235
        %v2356 = vpack.c.bf16 %v2290, %v2290
        %v2357 = vpack.c.bf16 %v2293, %v2293
        %v2359 = vsel %vm1041, %v2354, 0
        %v2362 = vsel %vm1041, %v2356, 0
        %2364 = vmatprep.subr.bf16.mxu0 0
        %2365 = vmatpush1.bf16.xpose.msra.mxu0 %v2362
        %2366 = vmatprep.subr.bf16.mxu0 0
        %2367 = vmatpush1.bf16.xpose.msra.mxu0 0
        %2368 = vmatprep.subr.bf16.mxu0 0
        %2369 = vmatpush1.bf16.xpose.msra.mxu0 0
        %2370 = vmatprep.subr.bf16.mxu0 0
        %2371 = vmatpush1.bf16.xpose.msra.mxu0 0
        %2372 = vmatprep.subr.bf16.mxu0 0
        %2373 = vmatpush1.bf16.xpose.msra.mxu0 0
        %2374 = vmatprep.subr.bf16.mxu0 0
        %2375 = vmatpush1.bf16.xpose.msra.mxu0 0
        %2376 = vmatprep.subr.bf16.mxu0 0
        %2377 = vmatpush1.bf16.xpose.msra.mxu0 0
        %2378 = vmatprep.subr.bf16.mxu0 0
        %2379 = vmatpush1.bf16.xpose.msra.mxu0 0
        %2380 = vmatprep.subr.bf16.mxu0 0
        %2381 = vmatpush1.bf16.xpose.msra.mxu0 0
        %2382 = vmatprep.subr.bf16.mxu0 0
        %2383 = vmatpush1.bf16.xpose.msra.mxu0 0
        %2384 = vmatprep.subr.bf16.mxu0 0
        %2385 = vmatpush1.bf16.xpose.msra.mxu0 0
        %2386 = vmatprep.subr.bf16.mxu0 0
        %2387 = vmatpush1.bf16.xpose.msra.mxu0 0
        %2388 = vmatprep.subr.bf16.mxu0 0
        %2389 = vmatpush1.bf16.xpose.msra.mxu0 0
        %2390 = vmatprep.subr.bf16.mxu0 0
        %2391 = vmatpush1.bf16.xpose.msra.mxu0 0
        %2392 = vmatprep.subr.bf16.mxu0 0
        %2393 = vmatpush1.bf16.xpose.msra.mxu0 0
        %2394 = vmatprep.subr.bf16.mxu0 0
        %2395 = vmatpush1.bf16.xpose.msra.mxu0 0
        %2396 = vmatprep.mubr.bf16.mxu0 0
        %2397 = vmatmul.mubr.bf16.gmra.mrb[0].mxu0 %v2359
        %v2398 = vpop.f32.mrb[0].mxu0
        %v2399 = vadd.f32 %v856, %v2398
        %v2400 = vpop.f32.mrb[0].mxu0
        %v2401 = vpop.f32.mrb[0].mxu0
        %v2402 = vpop.f32.mrb[0].mxu0
        %2403 = vdwg.mxu0
        %v2405 = vsel %vm1041, %v2355, 0
        %v2408 = vsel %vm1041, %v2357, 0
        %2410 = vmatprep.subr.bf16.mxu0 0
        %2411 = vmatpush1.bf16.xpose.msra.mxu0 %v2408
        %2412 = vmatprep.subr.bf16.mxu0 0
        %2413 = vmatpush1.bf16.xpose.msra.mxu0 0
        %2414 = vmatprep.subr.bf16.mxu0 0
        %2415 = vmatpush1.bf16.xpose.msra.mxu0 0
        %2416 = vmatprep.subr.bf16.mxu0 0
        %2417 = vmatpush1.bf16.xpose.msra.mxu0 0
        %2418 = vmatprep.subr.bf16.mxu0 0
        %2419 = vmatpush1.bf16.xpose.msra.mxu0 0
        %2420 = vmatprep.subr.bf16.mxu0 0
        %2421 = vmatpush1.bf16.xpose.msra.mxu0 0
        %2422 = vmatprep.subr.bf16.mxu0 0
        %2423 = vmatpush1.bf16.xpose.msra.mxu0 0
        %2424 = vmatprep.subr.bf16.mxu0 0
        %2425 = vmatpush1.bf16.xpose.msra.mxu0 0
        %2426 = vmatprep.subr.bf16.mxu0 0
        %2427 = vmatpush1.bf16.xpose.msra.mxu0 0
        %2428 = vmatprep.subr.bf16.mxu0 0
        %2429 = vmatpush1.bf16.xpose.msra.mxu0 0
        %2430 = vmatprep.subr.bf16.mxu0 0
        %2431 = vmatpush1.bf16.xpose.msra.mxu0 0
        %2432 = vmatprep.subr.bf16.mxu0 0
        %2433 = vmatpush1.bf16.xpose.msra.mxu0 0
        %2434 = vmatprep.subr.bf16.mxu0 0
        %2435 = vmatpush1.bf16.xpose.msra.mxu0 0
        %2436 = vmatprep.subr.bf16.mxu0 0
        %2437 = vmatpush1.bf16.xpose.msra.mxu0 0
        %2438 = vmatprep.subr.bf16.mxu0 0
        %2439 = vmatpush1.bf16.xpose.msra.mxu0 0
        %2440 = vmatprep.subr.bf16.mxu0 0
        %2441 = vmatpush1.bf16.xpose.msra.mxu0 0
        %2442 = vmatprep.mubr.bf16.mxu0 0
        %2443 = vmatmul.mubr.bf16.gmra.mrb[0].mxu0 %v2405
        %v2444 = vpop.f32.mrb[0].mxu0
        %v2445 = vadd.f32 %v860, %v2444
        %v2446 = vpop.f32.mrb[0].mxu0
        %v2447 = vpop.f32.mrb[0].mxu0
        %v2448 = vpop.f32.mrb[0].mxu0
        %2449 = vdwg.mxu0
        %v2450 = vsel %vm1041, %v2399, -inf
        %2451 = vmax.xlane.f32.xlu0 %v2450
        %v2452 = vpop.xlane.xlu0 %2451
        %v2453 = vsel %vm1041, %v2445, -inf
        %2454 = vmax.xlane.f32.xlu0 %v2453
        %v2455 = vpop.xlane.xlu0 %2454
        %v2456 = vsub.f32 %v2399, %v2452
        %v2457 = vsub.f32 %v2445, %v2455
        %v2458 = vmul.f32 %v2456, 1.442695
        %v2459 = vpow.pop %v2458
        %v2460 = vmul.f32 %v2457, 1.442695
        %v2461 = vpow.pop %v2460
        %v2462 = vsel %vm1041, %v2459, 0.0
        %2463 = vadd.xlane.f32.xlu0 %v2462
        %v2464 = vpop.xlane.xlu0 %2463
        %v2465 = vsel %vm1041, %v2461, 0.0
        %2466 = vadd.xlane.f32.xlu0 %v2465
        %v2467 = vpop.xlane.xlu0 %2466
        %v2468 = vrcp.pop %v2464
        %v2469 = vrcp.pop %v2467
        %v2470 = vmul.f32 %v2459, %v2468
        %v2471 = vmul.f32 %v2461, %v2469
        %v2472 = vpack.c.bf16 %v2470, %v2470
        %v2473 = vpack.c.bf16 %v2471, %v2471
        %v2474 = vpack.c.bf16 %v2348, %v2348
        %v2475 = vpack.c.bf16 %v2351, %v2351
        %v2477 = vsel %vm1041, %v2472, 0
        %v2480 = vsel %vm1163, %v2474, 0
        %2482 = vmatprep.subr.bf16.mxu0 0
        %2483 = vmatpush1.bf16.msra.mxu0 %v2480
        %2484 = vmatprep.subr.bf16.mxu0 0
        %2485 = vmatpush1.bf16.msra.mxu0 0
        %2486 = vmatprep.subr.bf16.mxu0 0
        %2487 = vmatpush1.bf16.msra.mxu0 0
        %2488 = vmatprep.subr.bf16.mxu0 0
        %2489 = vmatpush1.bf16.msra.mxu0 0
        %2490 = vmatprep.subr.bf16.mxu0 0
        %2491 = vmatpush1.bf16.msra.mxu0 0
        %2492 = vmatprep.subr.bf16.mxu0 0
        %2493 = vmatpush1.bf16.msra.mxu0 0
        %2494 = vmatprep.subr.bf16.mxu0 0
        %2495 = vmatpush1.bf16.msra.mxu0 0
        %2496 = vmatprep.subr.bf16.mxu0 0
        %2497 = vmatpush1.bf16.msra.mxu0 0
        %2498 = vmatprep.subr.bf16.mxu0 0
        %2499 = vmatpush1.bf16.msra.mxu0 0
        %2500 = vmatprep.subr.bf16.mxu0 0
        %2501 = vmatpush1.bf16.msra.mxu0 0
        %2502 = vmatprep.subr.bf16.mxu0 0
        %2503 = vmatpush1.bf16.msra.mxu0 0
        %2504 = vmatprep.subr.bf16.mxu0 0
        %2505 = vmatpush1.bf16.msra.mxu0 0
        %2506 = vmatprep.subr.bf16.mxu0 0
        %2507 = vmatpush1.bf16.msra.mxu0 0
        %2508 = vmatprep.subr.bf16.mxu0 0
        %2509 = vmatpush1.bf16.msra.mxu0 0
        %2510 = vmatprep.subr.bf16.mxu0 0
        %2511 = vmatpush1.bf16.msra.mxu0 0
        %2512 = vmatprep.subr.bf16.mxu0 0
        %2513 = vmatpush1.bf16.msra.mxu0 0
        %2514 = vmatprep.mubr.bf16.mxu0 0
        %2515 = vmatmul.mubr.bf16.gmra.mrb[0].mxu0 %v2477
        %v2516 = vpop.f32.mrb[0].mxu0
        %v2517 = vadd.f32 0.0, %v2516
        %v2518 = vpop.f32.mrb[0].mxu0
        %v2519 = vpop.f32.mrb[0].mxu0
        %v2520 = vpop.f32.mrb[0].mxu0
        %2521 = vdwg.mxu0
        %v2523 = vsel %vm1041, %v2473, 0
        %v2526 = vsel %vm1163, %v2475, 0
        %2528 = vmatprep.subr.bf16.mxu0 0
        %2529 = vmatpush1.bf16.msra.mxu0 %v2526
        %2530 = vmatprep.subr.bf16.mxu0 0
        %2531 = vmatpush1.bf16.msra.mxu0 0
        %2532 = vmatprep.subr.bf16.mxu0 0
        %2533 = vmatpush1.bf16.msra.mxu0 0
        %2534 = vmatprep.subr.bf16.mxu0 0
        %2535 = vmatpush1.bf16.msra.mxu0 0
        %2536 = vmatprep.subr.bf16.mxu0 0
        %2537 = vmatpush1.bf16.msra.mxu0 0
        %2538 = vmatprep.subr.bf16.mxu0 0
        %2539 = vmatpush1.bf16.msra.mxu0 0
        %2540 = vmatprep.subr.bf16.mxu0 0
        %2541 = vmatpush1.bf16.msra.mxu0 0
        %2542 = vmatprep.subr.bf16.mxu0 0
        %2543 = vmatpush1.bf16.msra.mxu0 0
        %2544 = vmatprep.subr.bf16.mxu0 0
        %2545 = vmatpush1.bf16.msra.mxu0 0
        %2546 = vmatprep.subr.bf16.mxu0 0
        %2547 = vmatpush1.bf16.msra.mxu0 0
        %2548 = vmatprep.subr.bf16.mxu0 0
        %2549 = vmatpush1.bf16.msra.mxu0 0
        %2550 = vmatprep.subr.bf16.mxu0 0
        %2551 = vmatpush1.bf16.msra.mxu0 0
        %2552 = vmatprep.subr.bf16.mxu0 0
        %2553 = vmatpush1.bf16.msra.mxu0 0
        %2554 = vmatprep.subr.bf16.mxu0 0
        %2555 = vmatpush1.bf16.msra.mxu0 0
        %2556 = vmatprep.subr.bf16.mxu0 0
        %2557 = vmatpush1.bf16.msra.mxu0 0
        %2558 = vmatprep.subr.bf16.mxu0 0
        %2559 = vmatpush1.bf16.msra.mxu0 0
        %2560 = vmatprep.mubr.bf16.mxu0 0
        %2561 = vmatmul.mubr.bf16.gmra.mrb[0].mxu0 %v2523
        %v2562 = vpop.f32.mrb[0].mxu0
        %v2563 = vadd.f32 0.0, %v2562
        %v2564 = vpop.f32.mrb[0].mxu0
        %v2565 = vpop.f32.mrb[0].mxu0
        %v2566 = vpop.f32.mrb[0].mxu0
        %2567 = vdwg.mxu0
        %v2568 = vpack.c.bf16 %v2563, %v2517
        %s2569 = scalar_lea.vmem %s709, 12
        %v2570 = vld [vmem:[%s2569] sm:$0xf]
        %v2572 = vsel %vm1041, %v2568, 0
        %v2575 = vsel %vm1163, %v2570, 0
        %2577 = vmatprep.subr.bf16.mxu0 0
        %2578 = vmatpush1.bf16.msra.mxu0 %v2575
        %2579 = vmatprep.subr.bf16.mxu0 0
        %2580 = vmatpush1.bf16.msra.mxu0 0
        %2581 = vmatprep.subr.bf16.mxu0 0
        %2582 = vmatpush1.bf16.msra.mxu0 0
        %2583 = vmatprep.subr.bf16.mxu0 0
        %2584 = vmatpush1.bf16.msra.mxu0 0
        %2585 = vmatprep.subr.bf16.mxu0 0
        %2586 = vmatpush1.bf16.msra.mxu0 0
        %2587 = vmatprep.subr.bf16.mxu0 0
        %2588 = vmatpush1.bf16.msra.mxu0 0
        %2589 = vmatprep.subr.bf16.mxu0 0
        %2590 = vmatpush1.bf16.msra.mxu0 0
        %2591 = vmatprep.subr.bf16.mxu0 0
        %2592 = vmatpush1.bf16.msra.mxu0 0
        %2593 = vmatprep.subr.bf16.mxu0 0
        %2594 = vmatpush1.bf16.msra.mxu0 0
        %2595 = vmatprep.subr.bf16.mxu0 0
        %2596 = vmatpush1.bf16.msra.mxu0 0
        %2597 = vmatprep.subr.bf16.mxu0 0
        %2598 = vmatpush1.bf16.msra.mxu0 0
        %2599 = vmatprep.subr.bf16.mxu0 0
        %2600 = vmatpush1.bf16.msra.mxu0 0
        %2601 = vmatprep.subr.bf16.mxu0 0
        %2602 = vmatpush1.bf16.msra.mxu0 0
        %2603 = vmatprep.subr.bf16.mxu0 0
        %2604 = vmatpush1.bf16.msra.mxu0 0
        %2605 = vmatprep.subr.bf16.mxu0 0
        %2606 = vmatpush1.bf16.msra.mxu0 0
        %2607 = vmatprep.subr.bf16.mxu0 0
        %2608 = vmatpush1.bf16.msra.mxu0 0
        %2609 = vmatprep.mubr.bf16.mxu0 0
        %2610 = vmatmul.mubr.bf16.gmra.mrb[0].mxu0 %v2572
        %v2611 = vpop.f32.mrb[0].mxu0
        %v2612 = vadd.f32 0.0, %v2611
        %v2613 = vpop.f32.mrb[0].mxu0
        %v2614 = vpop.f32.mrb[0].mxu0
        %v2615 = vadd.f32 0.0, %v2614
        %v2616 = vpop.f32.mrb[0].mxu0
        %2617 = vdwg.mxu0
        %v2618 = vadd.f32 %v2178, %v2612
        %v2619 = vadd.f32 %v2179, %v2615
        %v2620 = vadd.f32 %v788, %v2618
        %v2621 = vadd.f32 %v789, %v2619
        %s2622 = scalar_lea.vmem %s10, %s35
        %v2623 = vld [vmem:[%s2622] sm:$0x1]
        %s2624 = scalar_lea.vmem %s11, %s35
        %v2625 = vld [vmem:[%s2624] sm:$0x1]
        %v2626 = vsel %vm794, %v2620, 0.0
        %2627 = vadd.xlane.f32.xlu0 %v2626
        %v2628 = vpop.xlane.xlu0 %2627
        %v2629 = vsel %vm794, %v2621, 0.0
        %2630 = vadd.xlane.f32.xlu0 %v2629
        %v2631 = vpop.xlane.xlu0 %2630
        %v2632 = vmul.f32 %v2628, %v801
        %v2633 = vmul.f32 %v2631, %v801
        %v2634 = vsub.f32 %v2620, %v2632
        %v2635 = vsub.f32 %v2621, %v2633
        %v2636 = vmul.f32 %v2634, %v2634
        %v2637 = vmul.f32 %v2635, %v2635
        %v2638 = vsel %vm794, %v2636, 0.0
        %2639 = vadd.xlane.f32.xlu0 %v2638
        %v2640 = vpop.xlane.xlu0 %2639
        %v2641 = vsel %vm794, %v2637, 0.0
        %2642 = vadd.xlane.f32.xlu0 %v2641
        %v2643 = vpop.xlane.xlu0 %2642
        %v2644 = vmul.f32 %v2640, 0.032258064
        %v2645 = vmul.f32 %v2643, 0.032258064
        %v2646 = vlaneseq
        %v2647 = vshrl.u32 %v2646, 7
        %v2648 = vsub.s32 0, %v2647
        %v2649 = vrot.slane %v2623, %v2648
        %v2650 = vmul.f32 %v2649, %v2634
        %v2651 = vmul.f32 %v2649, %v2635
        %v2652 = vrsqrt.pop %v2644
        %v2653 = vmul.f32 %v2644, %v2652
        %vm2654 = vcmp.eq.f32.partialorder %v2644, inf
        %v2655 = vsel %vm2654, %v2644, %v2653
        %vm2656 = vcmp.eq.f32.partialorder %v2644, 0.0
        %v2657 = vand.u32 %v2644, 2147483648
        %v2658 = vsel %vm2656, %v2657, %v2655
        %v2659 = vrsqrt.pop %v2645
        %v2660 = vmul.f32 %v2645, %v2659
        %vm2661 = vcmp.eq.f32.partialorder %v2645, inf
        %v2662 = vsel %vm2661, %v2645, %v2660
        %vm2663 = vcmp.eq.f32.partialorder %v2645, 0.0
        %v2664 = vand.u32 %v2645, 2147483648
        %v2665 = vsel %vm2663, %v2664, %v2662
        %v2666 = vadd.f32 %v2658, 1e-06
        %v2667 = vadd.f32 %v2665, 1e-06
        %v2668 = vrcp.pop %v2666
        %v2669 = vmul.f32 %v2650, %v2668
        %v2670 = vrcp.pop %v2667
        %v2671 = vmul.f32 %v2651, %v2670
        %v2672 = vlaneseq
        %v2673 = vshrl.u32 %v2672, 7
        %v2674 = vsub.s32 0, %v2673
        %v2675 = vrot.slane %v2625, %v2674
        %v2676 = vadd.f32 %v2669, %v2675
        %v2677 = vadd.f32 %v2671, %v2675
        %v2678 = vlaneseq
        %v2679 = vshrl.u32 %v2678, 7
        %v2680 = vadd.s32 %v2679, 8
        %vm2681 = vcmp.lt.s32.totalorder %v2679, 0
        %v2682 = vsub.s32 0, %v2679
        %v2683 = vsel %vm2681, %v2682, %v2679
        %v2684 = vshrl.u32 %v2683, 3
        %v2685 = vand.u32 %v2683, 7
        %v2686 = vsub.s32 0, %v2685
        %v2687 = vsel %vm2681, %v2686, %v2685
        %vm2688 = vcmp.lt.s32.totalorder %v2680, 0
        %v2689 = vsub.s32 0, %v2680
        %v2690 = vsel %vm2688, %v2689, %v2680
        %v2691 = vshrl.u32 %v2690, 3
        %v2692 = vand.u32 %v2690, 7
        %v2693 = vsub.s32 0, %v2692
        %v2694 = vsel %vm2688, %v2693, %v2692
        %vm2695 = vcmp.ne.s32.totalorder %v2687, 0
        %vm2696 = vcmp.ne.s32.totalorder %v2694, 0
        %vm2697 = vcmp.lt.s32.totalorder %v2687, 0
        %vm2698 = vcmp.lt.s32.totalorder %v2694, 0
        %vm2699 = vmand %vm2697, %vm2695
        %vm2700 = vmand %vm2698, %vm2696
        %v2701 = vadd.s32 %v2687, 8
        %v2702 = vadd.s32 %v2694, 8
        %v2703 = vsel %vm2699, %v2701, %v2687
        %v2704 = vsel %vm2700, %v2702, %v2694
        %vm2705 = vcmp.ne.s32.totalorder %v2703, 0
        %vm2706 = vcmp.ne.s32.totalorder %v2704, 0
        %vm2707 = vcmp.ne.s32.totalorder %v2703, 7
        %vm2708 = vcmp.ne.s32.totalorder %v2704, 7
        %s2709 = scalar_lea.vmem %s13, %s35
        %v2710 = vld [vmem:[%s2709] sm:$0x1]
        %v2711 = vrot.slane %v2676, 7
        %v2712 = vrot.slane %v2677, 7
        %vm2713 = vcmp.lt.s32.totalorder %v2679, 1
        %v2714 = vsel %vm2713, %v2711, %v2712
        %v2715 = vsel %vm2713, %v2712, %v2711
        %v2716 = vsel %vm2705, 1, 0
        %v2717 = vsel %vm2706, 1, 0
        %vm2718 = vcmp.eq.s32.totalorder %v2716, 1
        %vm2719 = vcmp.eq.s32.totalorder %v2717, 1
        %v2720 = vsel %vm2718, %v2715, 0.0
        %v2721 = vsel %vm2719, %v2714, 0.0
        %v2722 = vpack.c.bf16 %v2721, %v2720
        %v2723 = vrot.slane %v2676, 1
        %v2724 = vrot.slane %v2677, 1
        %vm2725 = vcmp.lt.s32.totalorder %v2679, 7
        %v2726 = vsel %vm2725, %v2723, %v2724
        %v2727 = vsel %vm2725, %v2724, %v2723
        %v2728 = vsel %vm2707, 1, 0
        %v2729 = vsel %vm2708, 1, 0
        %vm2730 = vcmp.eq.s32.totalorder %v2728, 1
        %vm2731 = vcmp.eq.s32.totalorder %v2729, 1
        %v2732 = vsel %vm2730, %v2726, 0.0
        %v2733 = vsel %vm2731, %v2727, 0.0
        %v2734 = vpack.c.bf16 %v2733, %v2732
        %v2735 = vld [vmem:[%s714] sm:$0xf]
        %v2736 = vld [vmem:[%s714 + $0x4] sm:$0xf]
        %v2737 = vld [vmem:[%s714 + $0x8] sm:$0xf]
        %v2738 = vld [vmem:[%s714 + $0xc] sm:$0xf]
        %v2739 = vpack.c.bf16 %v2677, %v2676
        %s2740 = scalar_lea.vmem %s714, 16
        %v2741 = vld [vmem:[%s2740] sm:$0xf]
        %v2742 = vld [vmem:[%s2740 + $0x4] sm:$0xf]
        %v2743 = vld [vmem:[%s2740 + $0x8] sm:$0xf]
        %v2744 = vld [vmem:[%s2740 + $0xc] sm:$0xf]
        %v2749 = vunpack.c.l.b16 %v2741
        %v2750 = vunpack.c.l.b16 %v2742
        %v2751 = vunpack.c.l.b16 %v2743
        %v2752 = vunpack.c.l.b16 %v2744
        %v2753 = vpack.c.b16 %v2750, %v2749
        %v2754 = vpack.c.b16 %v2752, %v2751
        %v2758 = vsel %vm794, %v2739, 0
        %2760 = vmatprep.subr.bf16.mxu0 0
        %2761 = vmatpush1.bf16.msra.mxu0 %v2753
        %2762 = vmatprep.subr.bf16.mxu0 0
        %2763 = vmatpush1.bf16.msra.mxu0 %v2754
        %2764 = vmatprep.subr.bf16.mxu0 0
        %2765 = vmatpush1.bf16.msra.mxu0 0
        %2766 = vmatprep.subr.bf16.mxu0 0
        %2767 = vmatpush1.bf16.msra.mxu0 0
        %2768 = vmatprep.subr.bf16.mxu0 0
        %2769 = vmatpush1.bf16.msra.mxu0 0
        %2770 = vmatprep.subr.bf16.mxu0 0
        %2771 = vmatpush1.bf16.msra.mxu0 0
        %2772 = vmatprep.subr.bf16.mxu0 0
        %2773 = vmatpush1.bf16.msra.mxu0 0
        %2774 = vmatprep.subr.bf16.mxu0 0
        %2775 = vmatpush1.bf16.msra.mxu0 0
        %2776 = vmatprep.subr.bf16.mxu0 0
        %2777 = vmatpush1.bf16.msra.mxu0 0
        %2778 = vmatprep.subr.bf16.mxu0 0
        %2779 = vmatpush1.bf16.msra.mxu0 0
        %2780 = vmatprep.subr.bf16.mxu0 0
        %2781 = vmatpush1.bf16.msra.mxu0 0
        %2782 = vmatprep.subr.bf16.mxu0 0
        %2783 = vmatpush1.bf16.msra.mxu0 0
        %2784 = vmatprep.subr.bf16.mxu0 0
        %2785 = vmatpush1.bf16.msra.mxu0 0
        %2786 = vmatprep.subr.bf16.mxu0 0
        %2787 = vmatpush1.bf16.msra.mxu0 0
        %2788 = vmatprep.subr.bf16.mxu0 0
        %2789 = vmatpush1.bf16.msra.mxu0 0
        %2790 = vmatprep.subr.bf16.mxu0 0
        %2791 = vmatpush1.bf16.msra.mxu0 0
        %2792 = vmatprep.mubr.bf16.mxu0 0
        %2793 = vmatmul.mubr.bf16.gmra.mrb[0].mxu0 %v2758
        %v2794 = vpop.f32.mrb[0].mxu0
        %v2795 = vadd.f32 0.0, %v2794
        %v2796 = vpop.f32.mrb[0].mxu0
        %v2797 = vpop.f32.mrb[0].mxu0
        %v2798 = vadd.f32 0.0, %v2797
        %v2799 = vpop.f32.mrb[0].mxu0
        %2800 = vdwg.mxu0
        %v2805 = vunpack.c.l.b16 %v2735
        %v2806 = vunpack.c.l.b16 %v2736
        %v2807 = vunpack.c.l.b16 %v2737
        %v2808 = vunpack.c.l.b16 %v2738
        %v2809 = vpack.c.b16 %v2806, %v2805
        %v2810 = vpack.c.b16 %v2808, %v2807
        %v2814 = vsel %vm794, %v2722, 0
        %2816 = vmatprep.subr.bf16.mxu0 0
        %2817 = vmatpush1.bf16.msra.mxu0 %v2809
        %2818 = vmatprep.subr.bf16.mxu0 0
        %2819 = vmatpush1.bf16.msra.mxu0 %v2810
        %2820 = vmatprep.subr.bf16.mxu0 0
        %2821 = vmatpush1.bf16.msra.mxu0 0
        %2822 = vmatprep.subr.bf16.mxu0 0
        %2823 = vmatpush1.bf16.msra.mxu0 0
        %2824 = vmatprep.subr.bf16.mxu0 0
        %2825 = vmatpush1.bf16.msra.mxu0 0
        %2826 = vmatprep.subr.bf16.mxu0 0
        %2827 = vmatpush1.bf16.msra.mxu0 0
        %2828 = vmatprep.subr.bf16.mxu0 0
        %2829 = vmatpush1.bf16.msra.mxu0 0
        %2830 = vmatprep.subr.bf16.mxu0 0
        %2831 = vmatpush1.bf16.msra.mxu0 0
        %2832 = vmatprep.subr.bf16.mxu0 0
        %2833 = vmatpush1.bf16.msra.mxu0 0
        %2834 = vmatprep.subr.bf16.mxu0 0
        %2835 = vmatpush1.bf16.msra.mxu0 0
        %2836 = vmatprep.subr.bf16.mxu0 0
        %2837 = vmatpush1.bf16.msra.mxu0 0
        %2838 = vmatprep.subr.bf16.mxu0 0
        %2839 = vmatpush1.bf16.msra.mxu0 0
        %2840 = vmatprep.subr.bf16.mxu0 0
        %2841 = vmatpush1.bf16.msra.mxu0 0
        %2842 = vmatprep.subr.bf16.mxu0 0
        %2843 = vmatpush1.bf16.msra.mxu0 0
        %2844 = vmatprep.subr.bf16.mxu0 0
        %2845 = vmatpush1.bf16.msra.mxu0 0
        %2846 = vmatprep.subr.bf16.mxu0 0
        %2847 = vmatpush1.bf16.msra.mxu0 0
        %2848 = vmatprep.mubr.bf16.mxu0 0
        %2849 = vmatmul.mubr.bf16.gmra.mrb[0].mxu0 %v2814
        %v2850 = vpop.f32.mrb[0].mxu0
        %v2851 = vadd.f32 %v2795, %v2850
        %v2852 = vpop.f32.mrb[0].mxu0
        %v2853 = vpop.f32.mrb[0].mxu0
        %v2854 = vadd.f32 %v2798, %v2853
        %v2855 = vpop.f32.mrb[0].mxu0
        %2856 = vdwg.mxu0
        %s2857 = scalar_lea.vmem %s714, 32
        %v2858 = vld [vmem:[%s2857] sm:$0xf]
        %v2859 = vld [vmem:[%s2857 + $0x4] sm:$0xf]
        %v2860 = vld [vmem:[%s2857 + $0x8] sm:$0xf]
        %v2861 = vld [vmem:[%s2857 + $0xc] sm:$0xf]
        %v2866 = vunpack.c.l.b16 %v2858
        %v2867 = vunpack.c.l.b16 %v2859
        %v2868 = vunpack.c.l.b16 %v2860
        %v2869 = vunpack.c.l.b16 %v2861
        %v2870 = vpack.c.b16 %v2867, %v2866
        %v2871 = vpack.c.b16 %v2869, %v2868
        %v2875 = vsel %vm794, %v2734, 0
        %2877 = vmatprep.subr.bf16.mxu0 0
        %2878 = vmatpush1.bf16.msra.mxu0 %v2870
        %2879 = vmatprep.subr.bf16.mxu0 0
        %2880 = vmatpush1.bf16.msra.mxu0 %v2871
        %2881 = vmatprep.subr.bf16.mxu0 0
        %2882 = vmatpush1.bf16.msra.mxu0 0
        %2883 = vmatprep.subr.bf16.mxu0 0
        %2884 = vmatpush1.bf16.msra.mxu0 0
        %2885 = vmatprep.subr.bf16.mxu0 0
        %2886 = vmatpush1.bf16.msra.mxu0 0
        %2887 = vmatprep.subr.bf16.mxu0 0
        %2888 = vmatpush1.bf16.msra.mxu0 0
        %2889 = vmatprep.subr.bf16.mxu0 0
        %2890 = vmatpush1.bf16.msra.mxu0 0
        %2891 = vmatprep.subr.bf16.mxu0 0
        %2892 = vmatpush1.bf16.msra.mxu0 0
        %2893 = vmatprep.subr.bf16.mxu0 0
        %2894 = vmatpush1.bf16.msra.mxu0 0
        %2895 = vmatprep.subr.bf16.mxu0 0
        %2896 = vmatpush1.bf16.msra.mxu0 0
        %2897 = vmatprep.subr.bf16.mxu0 0
        %2898 = vmatpush1.bf16.msra.mxu0 0
        %2899 = vmatprep.subr.bf16.mxu0 0
        %2900 = vmatpush1.bf16.msra.mxu0 0
        %2901 = vmatprep.subr.bf16.mxu0 0
        %2902 = vmatpush1.bf16.msra.mxu0 0
        %2903 = vmatprep.subr.bf16.mxu0 0
        %2904 = vmatpush1.bf16.msra.mxu0 0
        %2905 = vmatprep.subr.bf16.mxu0 0
        %2906 = vmatpush1.bf16.msra.mxu0 0
        %2907 = vmatprep.subr.bf16.mxu0 0
        %2908 = vmatpush1.bf16.msra.mxu0 0
        %2909 = vmatprep.mubr.bf16.mxu0 0
        %2910 = vmatmul.mubr.bf16.gmra.mrb[0].mxu0 %v2875
        %v2911 = vpop.f32.mrb[0].mxu0
        %v2912 = vadd.f32 0.0, %v2911
        %v2913 = vpop.f32.mrb[0].mxu0
        %v2914 = vpop.f32.mrb[0].mxu0
        %v2915 = vadd.f32 0.0, %v2914
        %v2916 = vpop.f32.mrb[0].mxu0
        %2917 = vdwg.mxu0
        %v2918 = vadd.f32 %v2851, %v2912
        %v2919 = vadd.f32 %v2854, %v2915
        %v2920 = vlaneseq
        %v2921 = vshrl.u32 %v2920, 7
        %v2922 = vsub.s32 0, %v2921
        %v2923 = vrot.slane %v2710, %v2922
        %v2924 = vadd.f32 %v2918, %v2923
        %v2925 = vadd.f32 %v2919, %v2923
        %v2926 = vmax.f32 %v2924, 0.0
        %v2927 = vmax.f32 %v2925, 0.0
        %s2928 = scalar_lea.vmem %s15, %s35
        %v2929 = vld [vmem:[%s2928] sm:$0x1]
        %v2930 = vrot.slane %v2926, 7
        %v2931 = vrot.slane %v2927, 7
        %v2932 = vsel %vm2713, %v2930, %v2931
        %v2933 = vsel %vm2713, %v2931, %v2930
        %v2934 = vsel %vm2718, %v2933, 0.0
        %v2935 = vsel %vm2719, %v2932, 0.0
        %v2936 = vpack.c.bf16 %v2935, %v2934
        %v2937 = vrot.slane %v2926, 1
        %v2938 = vrot.slane %v2927, 1
        %v2939 = vsel %vm2725, %v2937, %v2938
        %v2940 = vsel %vm2725, %v2938, %v2937
        %v2941 = vsel %vm2730, %v2939, 0.0
        %v2942 = vsel %vm2731, %v2940, 0.0
        %v2943 = vpack.c.bf16 %v2942, %v2941
        %v2944 = vld [vmem:[%s719] sm:$0xf]
        %v2945 = vld [vmem:[%s719 + $0x4] sm:$0xf]
        %v2946 = vld [vmem:[%s719 + $0x8] sm:$0xf]
        %v2947 = vld [vmem:[%s719 + $0xc] sm:$0xf]
        %v2948 = vld [vmem:[%s719 + $0x10] sm:$0xf]
        %v2949 = vld [vmem:[%s719 + $0x14] sm:$0xf]
        %v2950 = vld [vmem:[%s719 + $0x18] sm:$0xf]
        %v2951 = vld [vmem:[%s719 + $0x1c] sm:$0xf]
        %v2952 = vpack.c.bf16 %v2927, %v2926
        %s2953 = scalar_lea.vmem %s719, 32
        %v2954 = vld [vmem:[%s2953] sm:$0xf]
        %v2955 = vld [vmem:[%s2953 + $0x4] sm:$0xf]
        %v2956 = vld [vmem:[%s2953 + $0x8] sm:$0xf]
        %v2957 = vld [vmem:[%s2953 + $0xc] sm:$0xf]
        %v2958 = vld [vmem:[%s2953 + $0x10] sm:$0xf]
        %v2959 = vld [vmem:[%s2953 + $0x14] sm:$0xf]
        %v2960 = vld [vmem:[%s2953 + $0x18] sm:$0xf]
        %v2961 = vld [vmem:[%s2953 + $0x1c] sm:$0xf]
        %v2970 = vunpack.c.l.b16 %v2954
        %v2971 = vunpack.c.l.b16 %v2955
        %v2972 = vunpack.c.l.b16 %v2956
        %v2973 = vunpack.c.l.b16 %v2957
        %v2974 = vunpack.c.l.b16 %v2958
        %v2975 = vunpack.c.l.b16 %v2959
        %v2976 = vunpack.c.l.b16 %v2960
        %v2977 = vunpack.c.l.b16 %v2961
        %v2978 = vpack.c.b16 %v2971, %v2970
        %v2979 = vpack.c.b16 %v2973, %v2972
        %v2980 = vpack.c.b16 %v2975, %v2974
        %v2981 = vpack.c.b16 %v2977, %v2976
        %vm2986 = vcmask 523264
        %v2988 = vsel %vm2986, %v2952, 0
        %2990 = vmatprep.subr.bf16.mxu0 0
        %2991 = vmatpush1.bf16.msra.mxu0 %v2978
        %2992 = vmatprep.subr.bf16.mxu0 0
        %2993 = vmatpush1.bf16.msra.mxu0 %v2979
        %2994 = vmatprep.subr.bf16.mxu0 0
        %2995 = vmatpush1.bf16.msra.mxu0 %v2980
        %2996 = vmatprep.subr.bf16.mxu0 0
        %2997 = vmatpush1.bf16.msra.mxu0 %v2981
        %2998 = vmatprep.subr.bf16.mxu0 0
        %2999 = vmatpush1.bf16.msra.mxu0 0
        %3000 = vmatprep.subr.bf16.mxu0 0
        %3001 = vmatpush1.bf16.msra.mxu0 0
        %3002 = vmatprep.subr.bf16.mxu0 0
        %3003 = vmatpush1.bf16.msra.mxu0 0
        %3004 = vmatprep.subr.bf16.mxu0 0
        %3005 = vmatpush1.bf16.msra.mxu0 0
        %3006 = vmatprep.subr.bf16.mxu0 0
        %3007 = vmatpush1.bf16.msra.mxu0 0
        %3008 = vmatprep.subr.bf16.mxu0 0
        %3009 = vmatpush1.bf16.msra.mxu0 0
        %3010 = vmatprep.subr.bf16.mxu0 0
        %3011 = vmatpush1.bf16.msra.mxu0 0
        %3012 = vmatprep.subr.bf16.mxu0 0
        %3013 = vmatpush1.bf16.msra.mxu0 0
        %3014 = vmatprep.subr.bf16.mxu0 0
        %3015 = vmatpush1.bf16.msra.mxu0 0
        %3016 = vmatprep.subr.bf16.mxu0 0
        %3017 = vmatpush1.bf16.msra.mxu0 0
        %3018 = vmatprep.subr.bf16.mxu0 0
        %3019 = vmatpush1.bf16.msra.mxu0 0
        %3020 = vmatprep.subr.bf16.mxu0 0
        %3021 = vmatpush1.bf16.msra.mxu0 0
        %3022 = vmatprep.mubr.bf16.mxu0 0
        %3023 = vmatmul.mubr.bf16.gmra.mrb[0].mxu0 %v2988
        %v3024 = vpop.f32.mrb[0].mxu0
        %v3025 = vadd.f32 0.0, %v3024
        %v3026 = vpop.f32.mrb[0].mxu0
        %v3027 = vpop.f32.mrb[0].mxu0
        %v3028 = vadd.f32 0.0, %v3027
        %v3029 = vpop.f32.mrb[0].mxu0
        %3030 = vdwg.mxu0
        %v3039 = vunpack.c.l.b16 %v2944
        %v3040 = vunpack.c.l.b16 %v2945
        %v3041 = vunpack.c.l.b16 %v2946
        %v3042 = vunpack.c.l.b16 %v2947
        %v3043 = vunpack.c.l.b16 %v2948
        %v3044 = vunpack.c.l.b16 %v2949
        %v3045 = vunpack.c.l.b16 %v2950
        %v3046 = vunpack.c.l.b16 %v2951
        %v3047 = vpack.c.b16 %v3040, %v3039
        %v3048 = vpack.c.b16 %v3042, %v3041
        %v3049 = vpack.c.b16 %v3044, %v3043
        %v3050 = vpack.c.b16 %v3046, %v3045
        %v3056 = vsel %vm2986, %v2936, 0
        %3058 = vmatprep.subr.bf16.mxu0 0
        %3059 = vmatpush1.bf16.msra.mxu0 %v3047
        %3060 = vmatprep.subr.bf16.mxu0 0
        %3061 = vmatpush1.bf16.msra.mxu0 %v3048
        %3062 = vmatprep.subr.bf16.mxu0 0
        %3063 = vmatpush1.bf16.msra.mxu0 %v3049
        %3064 = vmatprep.subr.bf16.mxu0 0
        %3065 = vmatpush1.bf16.msra.mxu0 %v3050
        %3066 = vmatprep.subr.bf16.mxu0 0
        %3067 = vmatpush1.bf16.msra.mxu0 0
        %3068 = vmatprep.subr.bf16.mxu0 0
        %3069 = vmatpush1.bf16.msra.mxu0 0
        %3070 = vmatprep.subr.bf16.mxu0 0
        %3071 = vmatpush1.bf16.msra.mxu0 0
        %3072 = vmatprep.subr.bf16.mxu0 0
        %3073 = vmatpush1.bf16.msra.mxu0 0
        %3074 = vmatprep.subr.bf16.mxu0 0
        %3075 = vmatpush1.bf16.msra.mxu0 0
        %3076 = vmatprep.subr.bf16.mxu0 0
        %3077 = vmatpush1.bf16.msra.mxu0 0
        %3078 = vmatprep.subr.bf16.mxu0 0
        %3079 = vmatpush1.bf16.msra.mxu0 0
        %3080 = vmatprep.subr.bf16.mxu0 0
        %3081 = vmatpush1.bf16.msra.mxu0 0
        %3082 = vmatprep.subr.bf16.mxu0 0
        %3083 = vmatpush1.bf16.msra.mxu0 0
        %3084 = vmatprep.subr.bf16.mxu0 0
        %3085 = vmatpush1.bf16.msra.mxu0 0
        %3086 = vmatprep.subr.bf16.mxu0 0
        %3087 = vmatpush1.bf16.msra.mxu0 0
        %3088 = vmatprep.subr.bf16.mxu0 0
        %3089 = vmatpush1.bf16.msra.mxu0 0
        %3090 = vmatprep.mubr.bf16.mxu0 0
        %3091 = vmatmul.mubr.bf16.gmra.mrb[0].mxu0 %v3056
        %v3092 = vpop.f32.mrb[0].mxu0
        %v3093 = vadd.f32 %v3025, %v3092
        %v3094 = vpop.f32.mrb[0].mxu0
        %v3095 = vpop.f32.mrb[0].mxu0
        %v3096 = vadd.f32 %v3028, %v3095
        %v3097 = vpop.f32.mrb[0].mxu0
        %3098 = vdwg.mxu0
        %s3099 = scalar_lea.vmem %s719, 64
        %v3100 = vld [vmem:[%s3099] sm:$0xf]
        %v3101 = vld [vmem:[%s3099 + $0x4] sm:$0xf]
        %v3102 = vld [vmem:[%s3099 + $0x8] sm:$0xf]
        %v3103 = vld [vmem:[%s3099 + $0xc] sm:$0xf]
        %v3104 = vld [vmem:[%s3099 + $0x10] sm:$0xf]
        %v3105 = vld [vmem:[%s3099 + $0x14] sm:$0xf]
        %v3106 = vld [vmem:[%s3099 + $0x18] sm:$0xf]
        %v3107 = vld [vmem:[%s3099 + $0x1c] sm:$0xf]
        %v3116 = vunpack.c.l.b16 %v3100
        %v3117 = vunpack.c.l.b16 %v3101
        %v3118 = vunpack.c.l.b16 %v3102
        %v3119 = vunpack.c.l.b16 %v3103
        %v3120 = vunpack.c.l.b16 %v3104
        %v3121 = vunpack.c.l.b16 %v3105
        %v3122 = vunpack.c.l.b16 %v3106
        %v3123 = vunpack.c.l.b16 %v3107
        %v3124 = vpack.c.b16 %v3117, %v3116
        %v3125 = vpack.c.b16 %v3119, %v3118
        %v3126 = vpack.c.b16 %v3121, %v3120
        %v3127 = vpack.c.b16 %v3123, %v3122
        %v3133 = vsel %vm2986, %v2943, 0
        %3135 = vmatprep.subr.bf16.mxu0 0
        %3136 = vmatpush1.bf16.msra.mxu0 %v3124
        %3137 = vmatprep.subr.bf16.mxu0 0
        %3138 = vmatpush1.bf16.msra.mxu0 %v3125
        %3139 = vmatprep.subr.bf16.mxu0 0
        %3140 = vmatpush1.bf16.msra.mxu0 %v3126
        %3141 = vmatprep.subr.bf16.mxu0 0
        %3142 = vmatpush1.bf16.msra.mxu0 %v3127
        %3143 = vmatprep.subr.bf16.mxu0 0
        %3144 = vmatpush1.bf16.msra.mxu0 0
        %3145 = vmatprep.subr.bf16.mxu0 0
        %3146 = vmatpush1.bf16.msra.mxu0 0
        %3147 = vmatprep.subr.bf16.mxu0 0
        %3148 = vmatpush1.bf16.msra.mxu0 0
        %3149 = vmatprep.subr.bf16.mxu0 0
        %3150 = vmatpush1.bf16.msra.mxu0 0
        %3151 = vmatprep.subr.bf16.mxu0 0
        %3152 = vmatpush1.bf16.msra.mxu0 0
        %3153 = vmatprep.subr.bf16.mxu0 0
        %3154 = vmatpush1.bf16.msra.mxu0 0
        %3155 = vmatprep.subr.bf16.mxu0 0
        %3156 = vmatpush1.bf16.msra.mxu0 0
        %3157 = vmatprep.subr.bf16.mxu0 0
        %3158 = vmatpush1.bf16.msra.mxu0 0
        %3159 = vmatprep.subr.bf16.mxu0 0
        %3160 = vmatpush1.bf16.msra.mxu0 0
        %3161 = vmatprep.subr.bf16.mxu0 0
        %3162 = vmatpush1.bf16.msra.mxu0 0
        %3163 = vmatprep.subr.bf16.mxu0 0
        %3164 = vmatpush1.bf16.msra.mxu0 0
        %3165 = vmatprep.subr.bf16.mxu0 0
        %3166 = vmatpush1.bf16.msra.mxu0 0
        %3167 = vmatprep.mubr.bf16.mxu0 0
        %3168 = vmatmul.mubr.bf16.gmra.mrb[0].mxu0 %v3133
        %v3169 = vpop.f32.mrb[0].mxu0
        %v3170 = vadd.f32 0.0, %v3169
        %v3171 = vpop.f32.mrb[0].mxu0
        %v3172 = vpop.f32.mrb[0].mxu0
        %v3173 = vadd.f32 0.0, %v3172
        %v3174 = vpop.f32.mrb[0].mxu0
        %3175 = vdwg.mxu0
        %v3176 = vadd.f32 %v3093, %v3170
        %v3177 = vadd.f32 %v3096, %v3173
        %v3178 = vlaneseq
        %v3179 = vshrl.u32 %v3178, 7
        %v3180 = vsub.s32 0, %v3179
        %v3181 = vrot.slane %v2929, %v3180
        %v3182 = vadd.f32 %v3176, %v3181
        %v3183 = vadd.f32 %v3177, %v3181
        %v3184 = vadd.f32 %v2620, %v3182
        %v3185 = vadd.f32 %v2621, %v3183
        %3186 = vst.msk [vmem:[#allocation2] sm:$0xff] %vm794, %v3184
        %3187 = vst.msk [vmem:[#allocation2 + $0x8] sm:$0xff] %vm794, %v3185
        %p3188 = scmp.eq.s32.totalorder %s35, 1
        // Predicated region
        $region97: #{tpu_custom_call.1} parent=91 // pred_check
          %p3189 = pneg %p3188
        $region98: #{tpu_custom_call.1} parent=91 // pred_check_branch
          %3191 = sbr.rel (%p3189) target = $region100
        $region99: #{tpu_custom_call.1} parent=91 // pred_region
          %v3192 = vld [vmem:[%s16] sm:$0x1]
          %v3193 = vld [vmem:[%s17] sm:$0x1]
          %v3194 = vsel %vm794, %v3184, 0.0
          %3195 = vadd.xlane.f32.xlu0 %v3194
          %v3196 = vpop.xlane.xlu0 %3195
          %v3197 = vsel %vm794, %v3185, 0.0
          %3198 = vadd.xlane.f32.xlu0 %v3197
          %v3199 = vpop.xlane.xlu0 %3198
          %v3200 = vmul.f32 %v3196, %v801
          %v3201 = vmul.f32 %v3199, %v801
          %v3202 = vsub.f32 %v3184, %v3200
          %v3203 = vsub.f32 %v3185, %v3201
          %v3204 = vmul.f32 %v3202, %v3202
          %v3205 = vmul.f32 %v3203, %v3203
          %v3206 = vsel %vm794, %v3204, 0.0
          %3207 = vadd.xlane.f32.xlu0 %v3206
          %v3208 = vpop.xlane.xlu0 %3207
          %v3209 = vsel %vm794, %v3205, 0.0
          %3210 = vadd.xlane.f32.xlu0 %v3209
          %v3211 = vpop.xlane.xlu0 %3210
          %v3212 = vmul.f32 %v3208, 0.032258064
          %v3213 = vmul.f32 %v3211, 0.032258064
          %v3215 = vlaneseq
          %v3216 = vshrl.u32 %v3215, 7
          %v3217 = vsub.s32 0, %v3216
          %v3218 = vrot.slane %v3192, %v3217
          %v3220 = vmul.f32 %v3218, %v3202
          %v3221 = vmul.f32 %v3218, %v3203
          %v3222 = vrsqrt.pop %v3212
          %v3223 = vmul.f32 %v3212, %v3222
          %vm3224 = vcmp.eq.f32.partialorder %v3212, inf
          %v3225 = vsel %vm3224, %v3212, %v3223
          %vm3226 = vcmp.eq.f32.partialorder %v3212, 0.0
          %v3227 = vand.u32 %v3212, 2147483648
          %v3228 = vsel %vm3226, %v3227, %v3225
          %v3229 = vrsqrt.pop %v3213
          %v3230 = vmul.f32 %v3213, %v3229
          %vm3231 = vcmp.eq.f32.partialorder %v3213, inf
          %v3232 = vsel %vm3231, %v3213, %v3230
          %vm3233 = vcmp.eq.f32.partialorder %v3213, 0.0
          %v3234 = vand.u32 %v3213, 2147483648
          %v3235 = vsel %vm3233, %v3234, %v3232
          %v3236 = vadd.f32 %v3228, 1e-06
          %v3237 = vadd.f32 %v3235, 1e-06
          %v3238 = vrcp.pop %v3236
          %v3239 = vmul.f32 %v3220, %v3238
          %v3240 = vrcp.pop %v3237
          %v3241 = vmul.f32 %v3221, %v3240
          %v3243 = vlaneseq
          %v3244 = vshrl.u32 %v3243, 7
          %v3245 = vsub.s32 0, %v3244
          %v3246 = vrot.slane %v3193, %v3245
          %v3248 = vadd.f32 %v3239, %v3246
          %v3249 = vadd.f32 %v3241, %v3246
          %3250 = vst.msk [vmem:[#allocation3] sm:$0xff] %vm794, %v3248
          %3251 = vst.msk [vmem:[#allocation3 + $0x8] sm:$0xff] %vm794, %v3249
        $region100: #{tpu_custom_call.1} parent=91 // pred_fallthru
          _
        // Predicated region
        $region101: #{tpu_custom_call.1} parent=91 // pred_check
          %p3252 = pneg %p478
        $region102: #{tpu_custom_call.1} parent=91 // pred_check_branch
          %3254 = sbr.rel (%p3252) target = $region104
        $region103: #{tpu_custom_call.1} parent=91 // pred_region
          %s3255 = smul.u32 2, %s34
          %s3257 = ssub.s32 256, 256
          %3258 = vsyncadd [#allocation4], %s3257
          %s3259 = smul.addr %s3255, 128
          %s3260 = scalar_lea.hbm %s18, %s3259
          %s3261 = sshll.u32 [#allocation3], 4
          %s3262 = int_to_ptr.vmem [resolvable:$true] %s3261
          %3267 = dma.vmem_to_hbm [thread:$0]  %s3262, 256, %s3260, [#allocation4], 128, 128, 8
        $region104: #{tpu_custom_call.1} parent=91 // pred_fallthru
          _
        // Predicated region
        $region105: #{tpu_custom_call.1} parent=91 // pred_check
          %p3268 = pneg %p478
        $region106: #{tpu_custom_call.1} parent=91 // pred_check_branch
          %3270 = sbr.rel (%p3268) target = $region108
        $region107: #{tpu_custom_call.1} parent=91 // pred_region
          %3271 = dma.done [#allocation4], 256
        $region108: #{tpu_custom_call.1} parent=91 // pred_fallthru
          _
      $region92: #{tpu_custom_call.1} parent=5 // pred_fallthru
        _
      %p3272 = scmp.le.s32.totalorder 2, %s25
      // Predicated region
      $region109: #{tpu_custom_call.1} parent=5 // pred_check
        %p3273 = pneg %p3272
      $region110: #{tpu_custom_call.1} parent=5 // pred_check_branch
        %3275 = sbr.rel (%p3273) target = $region112
      $region111: #{tpu_custom_call.1} parent=5 // pred_region
        %s3276 = ssub.s32 %s25, 2
      $region112: #{tpu_custom_call.1} parent=5 // pred_fallthru
        _
    $region6: #{tpu_custom_call.1} parent=1 // loop_footer
      %s29 = sadd.s32 1, %s25
    $region7: #{tpu_custom_call.1} parent=1 // loop_footer_branch
      %24 = sbr.rel target = $region3
    $region8: #{tpu_custom_call.1} parent=1 // loop_exit
      _
    %3277 = vsyncpa [#allocation4], 1
    %s3278 = scalar_lea.sflag [#allocation4], 1
    %3279 = vsyncpa %s3278, 1

</llo_original>
